<compile_context>
chip_gen: v5e
topology: v5e:2x2
jax: 0.10.0
libtpu: 0.0.40
codegen_flags: <defaults>
</compile_context>

<pallas_src>
import functools

import jax
import jax.numpy as jnp
from jax.experimental import pallas as pl
from jax.experimental.pallas import tpu as pltpu


# ----------------------------- in-kernel helpers -----------------------------

def _layer_norm(x, w, b, eps=1e-5):
    # PyTorch nn.LayerNorm: biased variance, eps inside rsqrt. f32 math.
    mu = jnp.mean(x, axis=-1, keepdims=True)
    var = jnp.mean((x - mu) ** 2, axis=-1, keepdims=True)
    return (x - mu) * jax.lax.rsqrt(var + eps) * w + b


# --------------------------------- kernel ------------------------------------

def transformer_kernel(num_layers, num_heads,
                       x_ref, wemb_ref, bemb_ref,
                       wqkv_ref, bqkv_ref, wo_ref, slab_ref, b1_ref,
                       w1_ref, w2_ref, wfc_ref, bfc_ref,
                       o_ref):
    L = x_ref.shape[0]
    E = wemb_ref.shape[1]
    H = num_heads
    Dh = E // H

    # ---- embedding: (L, S) @ (S, E) + b ----
    h = (jnp.dot(x_ref[...], wemb_ref[...],
                 preferred_element_type=jnp.float32) + bemb_ref[...])   # (L, E) f32

    # ---- encoder layers (static unroll; all weights resident in VMEM) ----
    for l in range(num_layers):
        # Packed small-param slab rows: 0=bo, 1=ln1w, 2=ln1b, 3=ln2w, 4=ln2b, 5=b2.
        sl = slab_ref[l]                                   # (8, E) f32
        bo, ln1w, ln1b = sl[0:1], sl[1:2], sl[2:3]
        ln2w, ln2b, b2 = sl[3:4], sl[4:5], sl[5:6]

        # Fused QKV projection: one wide MXU push. 1/sqrt(Dh) is folded into
        # the Q columns of wqkv / bqkv on the host.
        qkv = (jnp.dot(h.astype(jnp.bfloat16), wqkv_ref[l],
                       preferred_element_type=jnp.float32)
               + bqkv_ref[l])                               # (L, 3E) f32

        # Head-batched Q/K/V via static lane slices (columns are head-major,
        # matching PyTorch's (L, H, Dh) head split of the in-projection).
        q = jnp.stack([qkv[:, j * Dh:(j + 1) * Dh] for j in range(H)], axis=0)
        k = jnp.stack([qkv[:, E + j * Dh:E + (j + 1) * Dh] for j in range(H)], axis=0)
        v = jnp.stack([qkv[:, 2 * E + j * Dh:2 * E + (j + 1) * Dh] for j in range(H)], axis=0)

        # Scores / softmax / context stay head-batched: (H, L, L), (H, L, Dh).
        s = jnp.einsum("hqd,hkd->hqk", q, k, preferred_element_type=jnp.float32)
        s = s - jnp.max(s, axis=-1, keepdims=True)
        p = jnp.exp(s)
        p = p * pl.reciprocal(jnp.sum(p, axis=-1, keepdims=True), approx=True)
        ctx = jnp.einsum("hqk,hkd->hqd", p, v, preferred_element_type=jnp.float32)

        # Concatenate heads along lanes -> single fused (L,E)@(E,E) out-proj.
        ctx_cat = jnp.concatenate([ctx[j] for j in range(H)], axis=-1)   # (L, E)
        attn = (jnp.dot(ctx_cat.astype(jnp.bfloat16), wo_ref[l],
                        preferred_element_type=jnp.float32) + bo)        # (L, E)

        # dropout1 -> identity (eval mode); post-norm encoder layer.
        h = _layer_norm(h + attn, ln1w, ln1b)

        # Feed-forward: linear -> relu -> linear (dropouts = identity).
        f = (jnp.dot(h.astype(jnp.bfloat16), w1_ref[l],
                     preferred_element_type=jnp.float32) + b1_ref[l])    # (L, FF)
        f = jnp.maximum(f, 0.0)
        f = (jnp.dot(f.astype(jnp.bfloat16), w2_ref[l],
                     preferred_element_type=jnp.float32) + b2)           # (L, E)
        h = _layer_norm(h + f, ln2w, ln2b)

    # ---- final fc (128-lane padded, single dense unmasked store) ----
    o_ref[...] = (jnp.dot(h, wfc_ref[...],
                          preferred_element_type=jnp.float32) + bfc_ref[...])


# -------------------------------- wrapper -------------------------------------

def transformer_forward(params, x):
    num_layers = params["wqkv"].shape[0]
    num_heads = params["num_heads"]
    L, S = x.shape
    E = params["wemb"].shape[1]
    FF = params["w1"].shape[-1]
    OUT_PAD = params["wfc"].shape[-1]
    out_dim = params["output_dim"]

    args = (x, params["wemb"], params["bemb"],
            params["wqkv"], params["bqkv"], params["wo"],
            params["slab"], params["b1"],
            params["w1"], params["w2"],
            params["wfc"], params["bfc"])

    # No grid: whole arrays resident in VMEM for the single kernel invocation.
    vmem_spec = pl.BlockSpec(memory_space=pltpu.MemorySpace.VMEM)

    H, Dh = num_heads, E // num_heads
    flops = 2 * L * S * E
    flops += num_layers * (2 * L * E * (3 * E)          # fused QKV projection
                           + 2 * 2 * H * L * L * Dh     # scores + context
                           + 2 * L * E * E              # out-projection
                           + 2 * 2 * L * E * FF)        # feed-forward
    flops += 2 * L * E * OUT_PAD
    transcendentals = num_layers * H * L * L
    bytes_accessed = sum(int(a.size) * a.dtype.itemsize for a in args) \
        + L * OUT_PAD * 4

    out = pl.pallas_call(
        functools.partial(transformer_kernel, num_layers, num_heads),
        out_shape=jax.ShapeDtypeStruct((L, OUT_PAD), jnp.float32),
        in_specs=[vmem_spec] * len(args),
        out_specs=vmem_spec,
        compiler_params=pltpu.CompilerParams(
            vmem_limit_bytes=32 * 1024 * 1024),
        cost_estimate=pl.CostEstimate(flops=int(flops),
                                      transcendentals=int(transcendentals),
                                      bytes_accessed=int(bytes_accessed)),
    )(*args)
    return out[:, :out_dim]


# --------------------------- deterministic init -------------------------------

def init_params(key, state_dim, embedding_dim, num_heads, num_layers,
                output_dim, dim_feedforward=2048, out_pad=128):
    E, FF, H = embedding_dim, dim_feedforward, num_heads
    Dh = E // H
    ks = jax.random.split(key, 16)

    def rnd(k, shape, scale=0.05):
        return (scale * jax.random.normal(k, shape)).astype(jnp.float32)

    inv_sqrt_dh = 1.0 / (Dh ** 0.5)

    # Fused QKV weights: columns [Q | K | V], head-major within each E block;
    # the 1/sqrt(Dh) attention scale is folded into the Q columns / Q bias.
    wq = rnd(ks[2], (num_layers, E, E)) * inv_sqrt_dh
    wk = rnd(ks[3], (num_layers, E, E))
    wv = rnd(ks[4], (num_layers, E, E))
    wqkv = jnp.concatenate([wq, wk, wv], axis=-1).astype(jnp.bfloat16)
    bq = rnd(ks[5], (num_layers, 1, E)) * inv_sqrt_dh
    bk = rnd(ks[6], (num_layers, 1, E))
    bv = rnd(ks[7], (num_layers, 1, E))
    bqkv = jnp.concatenate([bq, bk, bv], axis=-1)            # f32 (nl, 1, 3E)

    # Packed small-param slab (one lane-dense f32 array per layer):
    # rows [bo, ln1w, ln1b, ln2w, ln2b, b2, 0, 0] -> (num_layers, 8, E).
    bo = rnd(ks[9], (num_layers, 1, E))
    ln1w = jnp.ones((num_layers, 1, E), jnp.float32)
    ln1b = jnp.zeros((num_layers, 1, E), jnp.float32)
    ln2w = jnp.ones((num_layers, 1, E), jnp.float32)
    ln2b = jnp.zeros((num_layers, 1, E), jnp.float32)
    b2 = rnd(ks[13], (num_layers, 1, E))
    zero = jnp.zeros((num_layers, 1, E), jnp.float32)
    slab = jnp.concatenate([bo, ln1w, ln1b, ln2w, ln2b, b2, zero, zero], axis=1)

    wfc = rnd(ks[14], (E, output_dim))
    bfc = rnd(ks[15], (1, output_dim))

    params = {
        "output_dim": output_dim,
        "num_heads": num_heads,
        # embedding Linear(state_dim, E), stored transposed (x @ W + b)
        "wemb": rnd(ks[0], (state_dim, E)),
        "bemb": rnd(ks[1], (1, E)),
        # fused/pre-transposed attention weights (bf16 MXU path)
        "wqkv": wqkv,
        "bqkv": bqkv,
        "wo": rnd(ks[8], (num_layers, E, E)).astype(jnp.bfloat16),
        "slab": slab,
        # feed-forward (PyTorch default dim_feedforward=2048), bf16 weights
        "w1": rnd(ks[10], (num_layers, E, FF)).astype(jnp.bfloat16),
        "b1": rnd(ks[11], (num_layers, 1, FF)),
        "w2": rnd(ks[12], (num_layers, FF, E)).astype(jnp.bfloat16),
        # final fc Linear(E, output_dim), zero-padded to 128 lanes for a
        # lane-dense store; wrapper slices back to output_dim.
        "wfc": jnp.pad(wfc, ((0, 0), (0, out_pad - output_dim))),
        "bfc": jnp.pad(bfc, ((0, 0), (0, out_pad - output_dim))),
    }
    return params


# ---------------------------------- main --------------------------------------

if __name__ == "__main__":
    state_dim = 16
    embedding_dim = 32
    num_heads = 4
    num_layers = 2
    output_dim = 4
    batch = 8                # acts as the sequence length inside the transformer
    dim_feedforward = 2048   # PyTorch TransformerEncoderLayer default

    key = jax.random.PRNGKey(0)
    kx, kp = jax.random.split(key)

    x = jax.random.normal(kx, (batch, state_dim), dtype=jnp.float32)
    params = init_params(kp, state_dim, embedding_dim, num_heads, num_layers,
                         output_dim, dim_feedforward)

    out = jax.block_until_ready(transformer_forward(params, x))

    assert out.shape == (batch, output_dim)
    assert bool(jnp.all(jnp.isfinite(out)))
    print("KERNEL_OK")
</pallas_src>

<mosaic_0001>
module attributes {stable_mosaic.version = 11 : i64} {
  func.func @transformer_kernel(%arg0: memref<8x16xf32, #tpu.memory_space<vmem>>, %arg1: memref<16x32xf32, #tpu.memory_space<vmem>>, %arg2: memref<1x32xf32, #tpu.memory_space<vmem>>, %arg3: memref<2x32x96xbf16, #tpu.memory_space<vmem>>, %arg4: memref<2x1x96xf32, #tpu.memory_space<vmem>>, %arg5: memref<2x32x32xbf16, #tpu.memory_space<vmem>>, %arg6: memref<2x8x32xf32, #tpu.memory_space<vmem>>, %arg7: memref<2x1x2048xf32, #tpu.memory_space<vmem>>, %arg8: memref<2x32x2048xbf16, #tpu.memory_space<vmem>>, %arg9: memref<2x2048x32xbf16, #tpu.memory_space<vmem>>, %arg10: memref<32x128xf32, #tpu.memory_space<vmem>>, %arg11: memref<1x128xf32, #tpu.memory_space<vmem>>, %arg12: memref<8x128xf32, #tpu.memory_space<vmem>>) attributes {dimension_semantics = [], scalar_prefetch = 0 : i64, scratch_operands = 0 : i64, tpu.core_type = #tpu.core_type<tc>} {
    %c0 = arith.constant 0 : index
    %c0_0 = arith.constant 0 : index
    %0 = vector.load %arg0[%c0, %c0_0] : memref<8x16xf32, #tpu.memory_space<vmem>>, vector<8x16xf32>
    %c0_1 = arith.constant 0 : index
    %c0_2 = arith.constant 0 : index
    %1 = vector.load %arg1[%c0_1, %c0_2] : memref<16x32xf32, #tpu.memory_space<vmem>>, vector<16x32xf32>
    %cst = arith.constant dense<0.000000e+00> : vector<8x32xf32>
    %2 = tpu.matmul %0, %1, %cst {dimension_numbers = #tpu.dot_dimension_numbers<[1], [0], [0], [1], [0, 0, 1, 1], [], []>} : vector<8x16xf32>, vector<16x32xf32>, vector<8x32xf32> -> vector<8x32xf32>
    %c0_3 = arith.constant 0 : index
    %c0_4 = arith.constant 0 : index
    %3 = vector.load %arg2[%c0_3, %c0_4] : memref<1x32xf32, #tpu.memory_space<vmem>>, vector<1x32xf32>
    %4 = vector.broadcast %3 : vector<1x32xf32> to vector<8x32xf32>
    %5 = arith.addf %2, %4 : vector<8x32xf32>
    %c0_5 = arith.constant 0 : index
    %c0_6 = arith.constant 0 : index
    %c0_7 = arith.constant 0 : index
    %6 = vector.load %arg6[%c0_5, %c0_6, %c0_7] : memref<2x8x32xf32, #tpu.memory_space<vmem>>, vector<1x8x32xf32>
    %7 = vector.shape_cast %6 : vector<1x8x32xf32> to vector<8x32xf32>
    %8 = vector.extract_strided_slice %7 {offsets = [0, 0], sizes = [1, 32], strides = [1, 1]} : vector<8x32xf32> to vector<1x32xf32>
    %9 = vector.extract_strided_slice %7 {offsets = [1, 0], sizes = [1, 32], strides = [1, 1]} : vector<8x32xf32> to vector<1x32xf32>
    %10 = vector.extract_strided_slice %7 {offsets = [2, 0], sizes = [1, 32], strides = [1, 1]} : vector<8x32xf32> to vector<1x32xf32>
    %11 = vector.extract_strided_slice %7 {offsets = [3, 0], sizes = [1, 32], strides = [1, 1]} : vector<8x32xf32> to vector<1x32xf32>
    %12 = vector.extract_strided_slice %7 {offsets = [4, 0], sizes = [1, 32], strides = [1, 1]} : vector<8x32xf32> to vector<1x32xf32>
    %13 = vector.extract_strided_slice %7 {offsets = [5, 0], sizes = [1, 32], strides = [1, 1]} : vector<8x32xf32> to vector<1x32xf32>
    %14 = arith.truncf %5 : vector<8x32xf32> to vector<8x32xbf16>
    %c0_8 = arith.constant 0 : index
    %c0_9 = arith.constant 0 : index
    %c0_10 = arith.constant 0 : index
    %15 = vector.load %arg3[%c0_8, %c0_9, %c0_10] : memref<2x32x96xbf16, #tpu.memory_space<vmem>>, vector<1x32x96xbf16>
    %16 = vector.shape_cast %15 : vector<1x32x96xbf16> to vector<32x96xbf16>
    %cst_11 = arith.constant dense<0.000000e+00> : vector<8x96xf32>
    %17 = tpu.matmul %14, %16, %cst_11 {dimension_numbers = #tpu.dot_dimension_numbers<[1], [0], [0], [1], [0, 0, 1, 1], [], []>} : vector<8x32xbf16>, vector<32x96xbf16>, vector<8x96xf32> -> vector<8x96xf32>
    %c0_12 = arith.constant 0 : index
    %c0_13 = arith.constant 0 : index
    %c0_14 = arith.constant 0 : index
    %18 = vector.load %arg4[%c0_12, %c0_13, %c0_14] : memref<2x1x96xf32, #tpu.memory_space<vmem>>, vector<1x1x96xf32>
    %19 = vector.shape_cast %18 : vector<1x1x96xf32> to vector<1x96xf32>
    %20 = vector.broadcast %19 : vector<1x96xf32> to vector<8x96xf32>
    %21 = arith.addf %17, %20 : vector<8x96xf32>
    %22 = vector.extract_strided_slice %21 {offsets = [0, 0], sizes = [8, 8], strides = [1, 1]} : vector<8x96xf32> to vector<8x8xf32>
    %23 = vector.extract_strided_slice %21 {offsets = [0, 8], sizes = [8, 8], strides = [1, 1]} : vector<8x96xf32> to vector<8x8xf32>
    %24 = vector.extract_strided_slice %21 {offsets = [0, 16], sizes = [8, 8], strides = [1, 1]} : vector<8x96xf32> to vector<8x8xf32>
    %25 = vector.extract_strided_slice %21 {offsets = [0, 24], sizes = [8, 8], strides = [1, 1]} : vector<8x96xf32> to vector<8x8xf32>
    %26 = vector.shape_cast %22 : vector<8x8xf32> to vector<1x8x8xf32>
    %27 = vector.shape_cast %23 : vector<8x8xf32> to vector<1x8x8xf32>
    %28 = vector.shape_cast %24 : vector<8x8xf32> to vector<1x8x8xf32>
    %29 = vector.shape_cast %25 : vector<8x8xf32> to vector<1x8x8xf32>
    %30 = tpu.concatenate %26, %27, %28, %29 in 0 : vector<1x8x8xf32>, vector<1x8x8xf32>, vector<1x8x8xf32>, vector<1x8x8xf32> -> vector<4x8x8xf32>
    %31 = vector.extract_strided_slice %21 {offsets = [0, 32], sizes = [8, 8], strides = [1, 1]} : vector<8x96xf32> to vector<8x8xf32>
    %32 = vector.extract_strided_slice %21 {offsets = [0, 40], sizes = [8, 8], strides = [1, 1]} : vector<8x96xf32> to vector<8x8xf32>
    %33 = vector.extract_strided_slice %21 {offsets = [0, 48], sizes = [8, 8], strides = [1, 1]} : vector<8x96xf32> to vector<8x8xf32>
    %34 = vector.extract_strided_slice %21 {offsets = [0, 56], sizes = [8, 8], strides = [1, 1]} : vector<8x96xf32> to vector<8x8xf32>
    %35 = vector.shape_cast %31 : vector<8x8xf32> to vector<1x8x8xf32>
    %36 = vector.shape_cast %32 : vector<8x8xf32> to vector<1x8x8xf32>
    %37 = vector.shape_cast %33 : vector<8x8xf32> to vector<1x8x8xf32>
    %38 = vector.shape_cast %34 : vector<8x8xf32> to vector<1x8x8xf32>
    %39 = tpu.concatenate %35, %36, %37, %38 in 0 : vector<1x8x8xf32>, vector<1x8x8xf32>, vector<1x8x8xf32>, vector<1x8x8xf32> -> vector<4x8x8xf32>
    %40 = vector.extract_strided_slice %21 {offsets = [0, 64], sizes = [8, 8], strides = [1, 1]} : vector<8x96xf32> to vector<8x8xf32>
    %41 = vector.extract_strided_slice %21 {offsets = [0, 72], sizes = [8, 8], strides = [1, 1]} : vector<8x96xf32> to vector<8x8xf32>
    %42 = vector.extract_strided_slice %21 {offsets = [0, 80], sizes = [8, 8], strides = [1, 1]} : vector<8x96xf32> to vector<8x8xf32>
    %43 = vector.extract_strided_slice %21 {offsets = [0, 88], sizes = [8, 8], strides = [1, 1]} : vector<8x96xf32> to vector<8x8xf32>
    %44 = vector.shape_cast %40 : vector<8x8xf32> to vector<1x8x8xf32>
    %45 = vector.shape_cast %41 : vector<8x8xf32> to vector<1x8x8xf32>
    %46 = vector.shape_cast %42 : vector<8x8xf32> to vector<1x8x8xf32>
    %47 = vector.shape_cast %43 : vector<8x8xf32> to vector<1x8x8xf32>
    %48 = tpu.concatenate %44, %45, %46, %47 in 0 : vector<1x8x8xf32>, vector<1x8x8xf32>, vector<1x8x8xf32>, vector<1x8x8xf32> -> vector<4x8x8xf32>
    "tpu.trace_start"() <{level = 10 : i32, message = "hqd,hkd->hqk"}> : () -> ()
    %cst_15 = arith.constant dense<0.000000e+00> : vector<4x8x8xf32>
    %49 = tpu.matmul %30, %39, %cst_15 {dimension_numbers = #tpu.dot_dimension_numbers<[2], [2], [1], [1], [0, 0, 0, 1, 1, 1], [0], [0]>} : vector<4x8x8xf32>, vector<4x8x8xf32>, vector<4x8x8xf32> -> vector<4x8x8xf32>
    "tpu.trace_stop"() : () -> ()
    %cst_16 = arith.constant dense<0xFF800000> : vector<4x8xf32>
    %50 = vector.multi_reduction <maximumf>, %49, %cst_16 [2] : vector<4x8x8xf32> to vector<4x8xf32>
    %51 = vector.shape_cast %50 : vector<4x8xf32> to vector<4x8x1xf32>
    %52 = vector.broadcast %51 : vector<4x8x1xf32> to vector<4x8x8xf32>
    %53 = arith.subf %49, %52 : vector<4x8x8xf32>
    %54 = math.exp %53 : vector<4x8x8xf32>
    %cst_17 = arith.constant dense<0.000000e+00> : vector<4x8xf32>
    %55 = vector.multi_reduction <add>, %54, %cst_17 [2] : vector<4x8x8xf32> to vector<4x8xf32>
    %56 = vector.shape_cast %55 : vector<4x8xf32> to vector<4x8x1xf32>
    %57 = tpu.reciprocal %56 {approx = true} : vector<4x8x1xf32> -> vector<4x8x1xf32>
    %58 = vector.broadcast %57 : vector<4x8x1xf32> to vector<4x8x8xf32>
    %59 = arith.mulf %54, %58 : vector<4x8x8xf32>
    "tpu.trace_start"() <{level = 10 : i32, message = "hqk,hkd->hqd"}> : () -> ()
    %cst_18 = arith.constant dense<0.000000e+00> : vector<4x8x8xf32>
    %60 = tpu.matmul %59, %48, %cst_18 {dimension_numbers = #tpu.dot_dimension_numbers<[2], [1], [1], [2], [0, 0, 0, 1, 1, 2], [0], [0]>} : vector<4x8x8xf32>, vector<4x8x8xf32>, vector<4x8x8xf32> -> vector<4x8x8xf32>
    "tpu.trace_stop"() : () -> ()
    %61 = vector.extract_strided_slice %60 {offsets = [0, 0, 0], sizes = [1, 8, 8], strides = [1, 1, 1]} : vector<4x8x8xf32> to vector<1x8x8xf32>
    %62 = vector.shape_cast %61 : vector<1x8x8xf32> to vector<8x8xf32>
    %63 = vector.extract_strided_slice %60 {offsets = [1, 0, 0], sizes = [1, 8, 8], strides = [1, 1, 1]} : vector<4x8x8xf32> to vector<1x8x8xf32>
    %64 = vector.shape_cast %63 : vector<1x8x8xf32> to vector<8x8xf32>
    %65 = vector.extract_strided_slice %60 {offsets = [2, 0, 0], sizes = [1, 8, 8], strides = [1, 1, 1]} : vector<4x8x8xf32> to vector<1x8x8xf32>
    %66 = vector.shape_cast %65 : vector<1x8x8xf32> to vector<8x8xf32>
    %67 = vector.extract_strided_slice %60 {offsets = [3, 0, 0], sizes = [1, 8, 8], strides = [1, 1, 1]} : vector<4x8x8xf32> to vector<1x8x8xf32>
    %68 = vector.shape_cast %67 : vector<1x8x8xf32> to vector<8x8xf32>
    %69 = tpu.concatenate %62, %64, %66, %68 in 1 : vector<8x8xf32>, vector<8x8xf32>, vector<8x8xf32>, vector<8x8xf32> -> vector<8x32xf32>
    %70 = arith.truncf %69 : vector<8x32xf32> to vector<8x32xbf16>
    %c0_19 = arith.constant 0 : index
    %c0_20 = arith.constant 0 : index
    %c0_21 = arith.constant 0 : index
    %71 = vector.load %arg5[%c0_19, %c0_20, %c0_21] : memref<2x32x32xbf16, #tpu.memory_space<vmem>>, vector<1x32x32xbf16>
    %72 = vector.shape_cast %71 : vector<1x32x32xbf16> to vector<32x32xbf16>
    %cst_22 = arith.constant dense<0.000000e+00> : vector<8x32xf32>
    %73 = tpu.matmul %70, %72, %cst_22 {dimension_numbers = #tpu.dot_dimension_numbers<[1], [0], [0], [1], [0, 0, 1, 1], [], []>} : vector<8x32xbf16>, vector<32x32xbf16>, vector<8x32xf32> -> vector<8x32xf32>
    %74 = vector.broadcast %8 : vector<1x32xf32> to vector<8x32xf32>
    %75 = arith.addf %73, %74 : vector<8x32xf32>
    %76 = arith.addf %5, %75 : vector<8x32xf32>
    %cst_23 = arith.constant dense<0.000000e+00> : vector<8xf32>
    %77 = vector.multi_reduction <add>, %76, %cst_23 [1] : vector<8x32xf32> to vector<8xf32>
    %78 = vector.shape_cast %77 : vector<8xf32> to vector<8x1xf32>
    %cst_24 = arith.constant 3.200000e+01 : f32
    %79 = vector.broadcast %cst_24 : f32 to vector<8x1xf32>
    %80 = arith.divf %78, %79 : vector<8x1xf32>
    %81 = vector.broadcast %80 : vector<8x1xf32> to vector<8x32xf32>
    %82 = arith.subf %76, %81 : vector<8x32xf32>
    %83 = arith.mulf %82, %82 : vector<8x32xf32>
    %cst_25 = arith.constant dense<0.000000e+00> : vector<8xf32>
    %84 = vector.multi_reduction <add>, %83, %cst_25 [1] : vector<8x32xf32> to vector<8xf32>
    %85 = vector.shape_cast %84 : vector<8xf32> to vector<8x1xf32>
    %cst_26 = arith.constant 3.200000e+01 : f32
    %86 = vector.broadcast %cst_26 : f32 to vector<8x1xf32>
    %87 = arith.divf %85, %86 : vector<8x1xf32>
    %88 = vector.broadcast %80 : vector<8x1xf32> to vector<8x32xf32>
    %89 = arith.subf %76, %88 : vector<8x32xf32>
    %cst_27 = arith.constant 9.99999974E-6 : f32
    %90 = vector.broadcast %cst_27 : f32 to vector<8x1xf32>
    %91 = arith.addf %87, %90 : vector<8x1xf32>
    %92 = math.rsqrt %91 : vector<8x1xf32>
    %93 = vector.broadcast %92 : vector<8x1xf32> to vector<8x32xf32>
    %94 = arith.mulf %89, %93 : vector<8x32xf32>
    %95 = vector.broadcast %9 : vector<1x32xf32> to vector<8x32xf32>
    %96 = arith.mulf %94, %95 : vector<8x32xf32>
    %97 = vector.broadcast %10 : vector<1x32xf32> to vector<8x32xf32>
    %98 = arith.addf %96, %97 : vector<8x32xf32>
    %99 = arith.truncf %98 : vector<8x32xf32> to vector<8x32xbf16>
    %c0_28 = arith.constant 0 : index
    %c0_29 = arith.constant 0 : index
    %c0_30 = arith.constant 0 : index
    %100 = vector.load %arg8[%c0_28, %c0_29, %c0_30] : memref<2x32x2048xbf16, #tpu.memory_space<vmem>>, vector<1x32x2048xbf16>
    %101 = vector.shape_cast %100 : vector<1x32x2048xbf16> to vector<32x2048xbf16>
    %cst_31 = arith.constant dense<0.000000e+00> : vector<8x2048xf32>
    %102 = tpu.matmul %99, %101, %cst_31 {dimension_numbers = #tpu.dot_dimension_numbers<[1], [0], [0], [1], [0, 0, 1, 1], [], []>} : vector<8x32xbf16>, vector<32x2048xbf16>, vector<8x2048xf32> -> vector<8x2048xf32>
    %c0_32 = arith.constant 0 : index
    %c0_33 = arith.constant 0 : index
    %c0_34 = arith.constant 0 : index
    %103 = vector.load %arg7[%c0_32, %c0_33, %c0_34] : memref<2x1x2048xf32, #tpu.memory_space<vmem>>, vector<1x1x2048xf32>
    %104 = vector.shape_cast %103 : vector<1x1x2048xf32> to vector<1x2048xf32>
    %105 = vector.broadcast %104 : vector<1x2048xf32> to vector<8x2048xf32>
    %106 = arith.addf %102, %105 : vector<8x2048xf32>
    %cst_35 = arith.constant 0.000000e+00 : f32
    %107 = vector.broadcast %cst_35 : f32 to vector<8x2048xf32>
    %108 = arith.maximumf %106, %107 : vector<8x2048xf32>
    %109 = arith.truncf %108 : vector<8x2048xf32> to vector<8x2048xbf16>
    %c0_36 = arith.constant 0 : index
    %c0_37 = arith.constant 0 : index
    %c0_38 = arith.constant 0 : index
    %110 = vector.load %arg9[%c0_36, %c0_37, %c0_38] : memref<2x2048x32xbf16, #tpu.memory_space<vmem>>, vector<1x2048x32xbf16>
    %111 = vector.shape_cast %110 : vector<1x2048x32xbf16> to vector<2048x32xbf16>
    %cst_39 = arith.constant dense<0.000000e+00> : vector<8x32xf32>
    %112 = tpu.matmul %109, %111, %cst_39 {dimension_numbers = #tpu.dot_dimension_numbers<[1], [0], [0], [1], [0, 0, 1, 1], [], []>} : vector<8x2048xbf16>, vector<2048x32xbf16>, vector<8x32xf32> -> vector<8x32xf32>
    %113 = vector.broadcast %13 : vector<1x32xf32> to vector<8x32xf32>
    %114 = arith.addf %112, %113 : vector<8x32xf32>
    %115 = arith.addf %98, %114 : vector<8x32xf32>
    %cst_40 = arith.constant dense<0.000000e+00> : vector<8xf32>
    %116 = vector.multi_reduction <add>, %115, %cst_40 [1] : vector<8x32xf32> to vector<8xf32>
    %117 = vector.shape_cast %116 : vector<8xf32> to vector<8x1xf32>
    %cst_41 = arith.constant 3.200000e+01 : f32
    %118 = vector.broadcast %cst_41 : f32 to vector<8x1xf32>
    %119 = arith.divf %117, %118 : vector<8x1xf32>
    %120 = vector.broadcast %119 : vector<8x1xf32> to vector<8x32xf32>
    %121 = arith.subf %115, %120 : vector<8x32xf32>
    %122 = arith.mulf %121, %121 : vector<8x32xf32>
    %cst_42 = arith.constant dense<0.000000e+00> : vector<8xf32>
    %123 = vector.multi_reduction <add>, %122, %cst_42 [1] : vector<8x32xf32> to vector<8xf32>
    %124 = vector.shape_cast %123 : vector<8xf32> to vector<8x1xf32>
    %cst_43 = arith.constant 3.200000e+01 : f32
    %125 = vector.broadcast %cst_43 : f32 to vector<8x1xf32>
    %126 = arith.divf %124, %125 : vector<8x1xf32>
    %127 = vector.broadcast %119 : vector<8x1xf32> to vector<8x32xf32>
    %128 = arith.subf %115, %127 : vector<8x32xf32>
    %cst_44 = arith.constant 9.99999974E-6 : f32
    %129 = vector.broadcast %cst_44 : f32 to vector<8x1xf32>
    %130 = arith.addf %126, %129 : vector<8x1xf32>
    %131 = math.rsqrt %130 : vector<8x1xf32>
    %132 = vector.broadcast %131 : vector<8x1xf32> to vector<8x32xf32>
    %133 = arith.mulf %128, %132 : vector<8x32xf32>
    %134 = vector.broadcast %11 : vector<1x32xf32> to vector<8x32xf32>
    %135 = arith.mulf %133, %134 : vector<8x32xf32>
    %136 = vector.broadcast %12 : vector<1x32xf32> to vector<8x32xf32>
    %137 = arith.addf %135, %136 : vector<8x32xf32>
    %c1 = arith.constant 1 : index
    %c0_45 = arith.constant 0 : index
    %c0_46 = arith.constant 0 : index
    %138 = vector.load %arg6[%c1, %c0_45, %c0_46] : memref<2x8x32xf32, #tpu.memory_space<vmem>>, vector<1x8x32xf32>
    %139 = vector.shape_cast %138 : vector<1x8x32xf32> to vector<8x32xf32>
    %140 = vector.extract_strided_slice %139 {offsets = [0, 0], sizes = [1, 32], strides = [1, 1]} : vector<8x32xf32> to vector<1x32xf32>
    %141 = vector.extract_strided_slice %139 {offsets = [1, 0], sizes = [1, 32], strides = [1, 1]} : vector<8x32xf32> to vector<1x32xf32>
    %142 = vector.extract_strided_slice %139 {offsets = [2, 0], sizes = [1, 32], strides = [1, 1]} : vector<8x32xf32> to vector<1x32xf32>
    %143 = vector.extract_strided_slice %139 {offsets = [3, 0], sizes = [1, 32], strides = [1, 1]} : vector<8x32xf32> to vector<1x32xf32>
    %144 = vector.extract_strided_slice %139 {offsets = [4, 0], sizes = [1, 32], strides = [1, 1]} : vector<8x32xf32> to vector<1x32xf32>
    %145 = vector.extract_strided_slice %139 {offsets = [5, 0], sizes = [1, 32], strides = [1, 1]} : vector<8x32xf32> to vector<1x32xf32>
    %146 = arith.truncf %137 : vector<8x32xf32> to vector<8x32xbf16>
    %c1_47 = arith.constant 1 : index
    %c0_48 = arith.constant 0 : index
    %c0_49 = arith.constant 0 : index
    %147 = vector.load %arg3[%c1_47, %c0_48, %c0_49] : memref<2x32x96xbf16, #tpu.memory_space<vmem>>, vector<1x32x96xbf16>
    %148 = vector.shape_cast %147 : vector<1x32x96xbf16> to vector<32x96xbf16>
    %cst_50 = arith.constant dense<0.000000e+00> : vector<8x96xf32>
    %149 = tpu.matmul %146, %148, %cst_50 {dimension_numbers = #tpu.dot_dimension_numbers<[1], [0], [0], [1], [0, 0, 1, 1], [], []>} : vector<8x32xbf16>, vector<32x96xbf16>, vector<8x96xf32> -> vector<8x96xf32>
    %c1_51 = arith.constant 1 : index
    %c0_52 = arith.constant 0 : index
    %c0_53 = arith.constant 0 : index
    %150 = vector.load %arg4[%c1_51, %c0_52, %c0_53] : memref<2x1x96xf32, #tpu.memory_space<vmem>>, vector<1x1x96xf32>
    %151 = vector.shape_cast %150 : vector<1x1x96xf32> to vector<1x96xf32>
    %152 = vector.broadcast %151 : vector<1x96xf32> to vector<8x96xf32>
    %153 = arith.addf %149, %152 : vector<8x96xf32>
    %154 = vector.extract_strided_slice %153 {offsets = [0, 0], sizes = [8, 8], strides = [1, 1]} : vector<8x96xf32> to vector<8x8xf32>
    %155 = vector.extract_strided_slice %153 {offsets = [0, 8], sizes = [8, 8], strides = [1, 1]} : vector<8x96xf32> to vector<8x8xf32>
    %156 = vector.extract_strided_slice %153 {offsets = [0, 16], sizes = [8, 8], strides = [1, 1]} : vector<8x96xf32> to vector<8x8xf32>
    %157 = vector.extract_strided_slice %153 {offsets = [0, 24], sizes = [8, 8], strides = [1, 1]} : vector<8x96xf32> to vector<8x8xf32>
    %158 = vector.shape_cast %154 : vector<8x8xf32> to vector<1x8x8xf32>
    %159 = vector.shape_cast %155 : vector<8x8xf32> to vector<1x8x8xf32>
    %160 = vector.shape_cast %156 : vector<8x8xf32> to vector<1x8x8xf32>
    %161 = vector.shape_cast %157 : vector<8x8xf32> to vector<1x8x8xf32>
    %162 = tpu.concatenate %158, %159, %160, %161 in 0 : vector<1x8x8xf32>, vector<1x8x8xf32>, vector<1x8x8xf32>, vector<1x8x8xf32> -> vector<4x8x8xf32>
    %163 = vector.extract_strided_slice %153 {offsets = [0, 32], sizes = [8, 8], strides = [1, 1]} : vector<8x96xf32> to vector<8x8xf32>
    %164 = vector.extract_strided_slice %153 {offsets = [0, 40], sizes = [8, 8], strides = [1, 1]} : vector<8x96xf32> to vector<8x8xf32>
    %165 = vector.extract_strided_slice %153 {offsets = [0, 48], sizes = [8, 8], strides = [1, 1]} : vector<8x96xf32> to vector<8x8xf32>
    %166 = vector.extract_strided_slice %153 {offsets = [0, 56], sizes = [8, 8], strides = [1, 1]} : vector<8x96xf32> to vector<8x8xf32>
    %167 = vector.shape_cast %163 : vector<8x8xf32> to vector<1x8x8xf32>
    %168 = vector.shape_cast %164 : vector<8x8xf32> to vector<1x8x8xf32>
    %169 = vector.shape_cast %165 : vector<8x8xf32> to vector<1x8x8xf32>
    %170 = vector.shape_cast %166 : vector<8x8xf32> to vector<1x8x8xf32>
    %171 = tpu.concatenate %167, %168, %169, %170 in 0 : vector<1x8x8xf32>, vector<1x8x8xf32>, vector<1x8x8xf32>, vector<1x8x8xf32> -> vector<4x8x8xf32>
    %172 = vector.extract_strided_slice %153 {offsets = [0, 64], sizes = [8, 8], strides = [1, 1]} : vector<8x96xf32> to vector<8x8xf32>
    %173 = vector.extract_strided_slice %153 {offsets = [0, 72], sizes = [8, 8], strides = [1, 1]} : vector<8x96xf32> to vector<8x8xf32>
    %174 = vector.extract_strided_slice %153 {offsets = [0, 80], sizes = [8, 8], strides = [1, 1]} : vector<8x96xf32> to vector<8x8xf32>
    %175 = vector.extract_strided_slice %153 {offsets = [0, 88], sizes = [8, 8], strides = [1, 1]} : vector<8x96xf32> to vector<8x8xf32>
    %176 = vector.shape_cast %172 : vector<8x8xf32> to vector<1x8x8xf32>
    %177 = vector.shape_cast %173 : vector<8x8xf32> to vector<1x8x8xf32>
    %178 = vector.shape_cast %174 : vector<8x8xf32> to vector<1x8x8xf32>
    %179 = vector.shape_cast %175 : vector<8x8xf32> to vector<1x8x8xf32>
    %180 = tpu.concatenate %176, %177, %178, %179 in 0 : vector<1x8x8xf32>, vector<1x8x8xf32>, vector<1x8x8xf32>, vector<1x8x8xf32> -> vector<4x8x8xf32>
    "tpu.trace_start"() <{level = 10 : i32, message = "hqd,hkd->hqk"}> : () -> ()
    %cst_54 = arith.constant dense<0.000000e+00> : vector<4x8x8xf32>
    %181 = tpu.matmul %162, %171, %cst_54 {dimension_numbers = #tpu.dot_dimension_numbers<[2], [2], [1], [1], [0, 0, 0, 1, 1, 1], [0], [0]>} : vector<4x8x8xf32>, vector<4x8x8xf32>, vector<4x8x8xf32> -> vector<4x8x8xf32>
    "tpu.trace_stop"() : () -> ()
    %cst_55 = arith.constant dense<0xFF800000> : vector<4x8xf32>
    %182 = vector.multi_reduction <maximumf>, %181, %cst_55 [2] : vector<4x8x8xf32> to vector<4x8xf32>
    %183 = vector.shape_cast %182 : vector<4x8xf32> to vector<4x8x1xf32>
    %184 = vector.broadcast %183 : vector<4x8x1xf32> to vector<4x8x8xf32>
    %185 = arith.subf %181, %184 : vector<4x8x8xf32>
    %186 = math.exp %185 : vector<4x8x8xf32>
    %cst_56 = arith.constant dense<0.000000e+00> : vector<4x8xf32>
    %187 = vector.multi_reduction <add>, %186, %cst_56 [2] : vector<4x8x8xf32> to vector<4x8xf32>
    %188 = vector.shape_cast %187 : vector<4x8xf32> to vector<4x8x1xf32>
    %189 = tpu.reciprocal %188 {approx = true} : vector<4x8x1xf32> -> vector<4x8x1xf32>
    %190 = vector.broadcast %189 : vector<4x8x1xf32> to vector<4x8x8xf32>
    %191 = arith.mulf %186, %190 : vector<4x8x8xf32>
    "tpu.trace_start"() <{level = 10 : i32, message = "hqk,hkd->hqd"}> : () -> ()
    %cst_57 = arith.constant dense<0.000000e+00> : vector<4x8x8xf32>
    %192 = tpu.matmul %191, %180, %cst_57 {dimension_numbers = #tpu.dot_dimension_numbers<[2], [1], [1], [2], [0, 0, 0, 1, 1, 2], [0], [0]>} : vector<4x8x8xf32>, vector<4x8x8xf32>, vector<4x8x8xf32> -> vector<4x8x8xf32>
    "tpu.trace_stop"() : () -> ()
    %193 = vector.extract_strided_slice %192 {offsets = [0, 0, 0], sizes = [1, 8, 8], strides = [1, 1, 1]} : vector<4x8x8xf32> to vector<1x8x8xf32>
    %194 = vector.shape_cast %193 : vector<1x8x8xf32> to vector<8x8xf32>
    %195 = vector.extract_strided_slice %192 {offsets = [1, 0, 0], sizes = [1, 8, 8], strides = [1, 1, 1]} : vector<4x8x8xf32> to vector<1x8x8xf32>
    %196 = vector.shape_cast %195 : vector<1x8x8xf32> to vector<8x8xf32>
    %197 = vector.extract_strided_slice %192 {offsets = [2, 0, 0], sizes = [1, 8, 8], strides = [1, 1, 1]} : vector<4x8x8xf32> to vector<1x8x8xf32>
    %198 = vector.shape_cast %197 : vector<1x8x8xf32> to vector<8x8xf32>
    %199 = vector.extract_strided_slice %192 {offsets = [3, 0, 0], sizes = [1, 8, 8], strides = [1, 1, 1]} : vector<4x8x8xf32> to vector<1x8x8xf32>
    %200 = vector.shape_cast %199 : vector<1x8x8xf32> to vector<8x8xf32>
    %201 = tpu.concatenate %194, %196, %198, %200 in 1 : vector<8x8xf32>, vector<8x8xf32>, vector<8x8xf32>, vector<8x8xf32> -> vector<8x32xf32>
    %202 = arith.truncf %201 : vector<8x32xf32> to vector<8x32xbf16>
    %c1_58 = arith.constant 1 : index
    %c0_59 = arith.constant 0 : index
    %c0_60 = arith.constant 0 : index
    %203 = vector.load %arg5[%c1_58, %c0_59, %c0_60] : memref<2x32x32xbf16, #tpu.memory_space<vmem>>, vector<1x32x32xbf16>
    %204 = vector.shape_cast %203 : vector<1x32x32xbf16> to vector<32x32xbf16>
    %cst_61 = arith.constant dense<0.000000e+00> : vector<8x32xf32>
    %205 = tpu.matmul %202, %204, %cst_61 {dimension_numbers = #tpu.dot_dimension_numbers<[1], [0], [0], [1], [0, 0, 1, 1], [], []>} : vector<8x32xbf16>, vector<32x32xbf16>, vector<8x32xf32> -> vector<8x32xf32>
    %206 = vector.broadcast %140 : vector<1x32xf32> to vector<8x32xf32>
    %207 = arith.addf %205, %206 : vector<8x32xf32>
    %208 = arith.addf %137, %207 : vector<8x32xf32>
    %cst_62 = arith.constant dense<0.000000e+00> : vector<8xf32>
    %209 = vector.multi_reduction <add>, %208, %cst_62 [1] : vector<8x32xf32> to vector<8xf32>
    %210 = vector.shape_cast %209 : vector<8xf32> to vector<8x1xf32>
    %cst_63 = arith.constant 3.200000e+01 : f32
    %211 = vector.broadcast %cst_63 : f32 to vector<8x1xf32>
    %212 = arith.divf %210, %211 : vector<8x1xf32>
    %213 = vector.broadcast %212 : vector<8x1xf32> to vector<8x32xf32>
    %214 = arith.subf %208, %213 : vector<8x32xf32>
    %215 = arith.mulf %214, %214 : vector<8x32xf32>
    %cst_64 = arith.constant dense<0.000000e+00> : vector<8xf32>
    %216 = vector.multi_reduction <add>, %215, %cst_64 [1] : vector<8x32xf32> to vector<8xf32>
    %217 = vector.shape_cast %216 : vector<8xf32> to vector<8x1xf32>
    %cst_65 = arith.constant 3.200000e+01 : f32
    %218 = vector.broadcast %cst_65 : f32 to vector<8x1xf32>
    %219 = arith.divf %217, %218 : vector<8x1xf32>
    %220 = vector.broadcast %212 : vector<8x1xf32> to vector<8x32xf32>
    %221 = arith.subf %208, %220 : vector<8x32xf32>
    %cst_66 = arith.constant 9.99999974E-6 : f32
    %222 = vector.broadcast %cst_66 : f32 to vector<8x1xf32>
    %223 = arith.addf %219, %222 : vector<8x1xf32>
    %224 = math.rsqrt %223 : vector<8x1xf32>
    %225 = vector.broadcast %224 : vector<8x1xf32> to vector<8x32xf32>
    %226 = arith.mulf %221, %225 : vector<8x32xf32>
    %227 = vector.broadcast %141 : vector<1x32xf32> to vector<8x32xf32>
    %228 = arith.mulf %226, %227 : vector<8x32xf32>
    %229 = vector.broadcast %142 : vector<1x32xf32> to vector<8x32xf32>
    %230 = arith.addf %228, %229 : vector<8x32xf32>
    %231 = arith.truncf %230 : vector<8x32xf32> to vector<8x32xbf16>
    %c1_67 = arith.constant 1 : index
    %c0_68 = arith.constant 0 : index
    %c0_69 = arith.constant 0 : index
    %232 = vector.load %arg8[%c1_67, %c0_68, %c0_69] : memref<2x32x2048xbf16, #tpu.memory_space<vmem>>, vector<1x32x2048xbf16>
    %233 = vector.shape_cast %232 : vector<1x32x2048xbf16> to vector<32x2048xbf16>
    %cst_70 = arith.constant dense<0.000000e+00> : vector<8x2048xf32>
    %234 = tpu.matmul %231, %233, %cst_70 {dimension_numbers = #tpu.dot_dimension_numbers<[1], [0], [0], [1], [0, 0, 1, 1], [], []>} : vector<8x32xbf16>, vector<32x2048xbf16>, vector<8x2048xf32> -> vector<8x2048xf32>
    %c1_71 = arith.constant 1 : index
    %c0_72 = arith.constant 0 : index
    %c0_73 = arith.constant 0 : index
    %235 = vector.load %arg7[%c1_71, %c0_72, %c0_73] : memref<2x1x2048xf32, #tpu.memory_space<vmem>>, vector<1x1x2048xf32>
    %236 = vector.shape_cast %235 : vector<1x1x2048xf32> to vector<1x2048xf32>
    %237 = vector.broadcast %236 : vector<1x2048xf32> to vector<8x2048xf32>
    %238 = arith.addf %234, %237 : vector<8x2048xf32>
    %cst_74 = arith.constant 0.000000e+00 : f32
    %239 = vector.broadcast %cst_74 : f32 to vector<8x2048xf32>
    %240 = arith.maximumf %238, %239 : vector<8x2048xf32>
    %241 = arith.truncf %240 : vector<8x2048xf32> to vector<8x2048xbf16>
    %c1_75 = arith.constant 1 : index
    %c0_76 = arith.constant 0 : index
    %c0_77 = arith.constant 0 : index
    %242 = vector.load %arg9[%c1_75, %c0_76, %c0_77] : memref<2x2048x32xbf16, #tpu.memory_space<vmem>>, vector<1x2048x32xbf16>
    %243 = vector.shape_cast %242 : vector<1x2048x32xbf16> to vector<2048x32xbf16>
    %cst_78 = arith.constant dense<0.000000e+00> : vector<8x32xf32>
    %244 = tpu.matmul %241, %243, %cst_78 {dimension_numbers = #tpu.dot_dimension_numbers<[1], [0], [0], [1], [0, 0, 1, 1], [], []>} : vector<8x2048xbf16>, vector<2048x32xbf16>, vector<8x32xf32> -> vector<8x32xf32>
    %245 = vector.broadcast %145 : vector<1x32xf32> to vector<8x32xf32>
    %246 = arith.addf %244, %245 : vector<8x32xf32>
    %247 = arith.addf %230, %246 : vector<8x32xf32>
    %cst_79 = arith.constant dense<0.000000e+00> : vector<8xf32>
    %248 = vector.multi_reduction <add>, %247, %cst_79 [1] : vector<8x32xf32> to vector<8xf32>
    %249 = vector.shape_cast %248 : vector<8xf32> to vector<8x1xf32>
    %cst_80 = arith.constant 3.200000e+01 : f32
    %250 = vector.broadcast %cst_80 : f32 to vector<8x1xf32>
    %251 = arith.divf %249, %250 : vector<8x1xf32>
    %252 = vector.broadcast %251 : vector<8x1xf32> to vector<8x32xf32>
    %253 = arith.subf %247, %252 : vector<8x32xf32>
    %254 = arith.mulf %253, %253 : vector<8x32xf32>
    %cst_81 = arith.constant dense<0.000000e+00> : vector<8xf32>
    %255 = vector.multi_reduction <add>, %254, %cst_81 [1] : vector<8x32xf32> to vector<8xf32>
    %256 = vector.shape_cast %255 : vector<8xf32> to vector<8x1xf32>
    %cst_82 = arith.constant 3.200000e+01 : f32
    %257 = vector.broadcast %cst_82 : f32 to vector<8x1xf32>
    %258 = arith.divf %256, %257 : vector<8x1xf32>
    %259 = vector.broadcast %251 : vector<8x1xf32> to vector<8x32xf32>
    %260 = arith.subf %247, %259 : vector<8x32xf32>
    %cst_83 = arith.constant 9.99999974E-6 : f32
    %261 = vector.broadcast %cst_83 : f32 to vector<8x1xf32>
    %262 = arith.addf %258, %261 : vector<8x1xf32>
    %263 = math.rsqrt %262 : vector<8x1xf32>
    %264 = vector.broadcast %263 : vector<8x1xf32> to vector<8x32xf32>
    %265 = arith.mulf %260, %264 : vector<8x32xf32>
    %266 = vector.broadcast %143 : vector<1x32xf32> to vector<8x32xf32>
    %267 = arith.mulf %265, %266 : vector<8x32xf32>
    %268 = vector.broadcast %144 : vector<1x32xf32> to vector<8x32xf32>
    %269 = arith.addf %267, %268 : vector<8x32xf32>
    %c0_84 = arith.constant 0 : index
    %c0_85 = arith.constant 0 : index
    %270 = vector.load %arg10[%c0_84, %c0_85] : memref<32x128xf32, #tpu.memory_space<vmem>>, vector<32x128xf32>
    %cst_86 = arith.constant dense<0.000000e+00> : vector<8x128xf32>
    %271 = tpu.matmul %269, %270, %cst_86 {dimension_numbers = #tpu.dot_dimension_numbers<[1], [0], [0], [1], [0, 0, 1, 1], [], []>} : vector<8x32xf32>, vector<32x128xf32>, vector<8x128xf32> -> vector<8x128xf32>
    %c0_87 = arith.constant 0 : index
    %c0_88 = arith.constant 0 : index
    %272 = vector.load %arg11[%c0_87, %c0_88] : memref<1x128xf32, #tpu.memory_space<vmem>>, vector<1x128xf32>
    %273 = vector.broadcast %272 : vector<1x128xf32> to vector<8x128xf32>
    %274 = arith.addf %271, %273 : vector<8x128xf32>
    %c0_89 = arith.constant 0 : index
    %c0_90 = arith.constant 0 : index
    %275 = vector.load %arg12[%c0_89, %c0_90] : memref<8x128xf32, #tpu.memory_space<vmem>>, vector<8x128xf32>
    tpu.vector_store %arg12[%c0_89, %c0_90], %274 {strides = array<i32>} : memref<8x128xf32, #tpu.memory_space<vmem>>, vector<8x128xf32>,
    return
  }
}

</mosaic_0001>

<llo_original>
// kernel: tpu_custom_call.1
$region0: #{tpu_custom_call.1}
  #allocation0 [shape = 'u32[]', space=smem, size = 0x4, offset = 0x4, fixed_abs, tag = 'smem constant byte address 0x4 - core index']
  #allocation1 [shape = 'u32[72,128]{1,0:T(1,128)}', space=vmem, size = 0x9000, scoped, tag = 'internal scratch']
  %s0 = inlined_call_operand.vmem [shape: f32[8,16], index: 0, kind: input, shape index: {}]
  %s1 = inlined_call_operand.vmem [shape: f32[16,32], index: 1, kind: input, shape index: {}]
  %s2 = inlined_call_operand.vmem [shape: f32[1,32], index: 2, kind: input, shape index: {}]
  %s3 = inlined_call_operand.vmem [shape: bf16[2,32,96], index: 3, kind: input, shape index: {}]
  %s4 = inlined_call_operand.vmem [shape: f32[2,1,96], index: 4, kind: input, shape index: {}]
  %s5 = inlined_call_operand.vmem [shape: bf16[2,32,32], index: 5, kind: input, shape index: {}]
  %s6 = inlined_call_operand.vmem [shape: f32[2,8,32], index: 6, kind: input, shape index: {}]
  %s7 = inlined_call_operand.vmem [shape: f32[2,1,2048], index: 7, kind: input, shape index: {}]
  %s8 = inlined_call_operand.vmem [shape: bf16[2,32,2048], index: 8, kind: input, shape index: {}]
  %s9 = inlined_call_operand.vmem [shape: bf16[2,2048,32], index: 9, kind: input, shape index: {}]
  %s10 = inlined_call_operand.vmem [shape: f32[32,128], index: 10, kind: input, shape index: {}]
  %s11 = inlined_call_operand.vmem [shape: f32[1,128], index: 11, kind: input, shape index: {}]
  %s12 = inlined_call_operand.hbm [shape: f32[8,128], index: 12, kind: output, shape index: {}]
  %s13 = sld [smem:[#allocation0]]
  $region58: #{tpu_custom_call.1} parent=0
    _
  %s15 = ssub.s32 1, %s13
  %s16 = scalar_select 0, %s15, %s13
  $region1: #{tpu_custom_call.1} parent=0
    #allocation2 [shape = 'u8[4096]{0}', space=vmem, size = 0x1000, scoped, tag = 'output window, operand 0, single buffered']
    #allocation3 [shape = 's32[1]{0}', space=sflag, size = 0x4, scoped, tag = 'scoped memory for tpu_custom_call.1']
    %17 = vsyncpa [#allocation3], 0
    // Predicated region
    $region2: #{tpu_custom_call.1} parent=1 // pred_check
      _
    $region3: #{tpu_custom_call.1} parent=1 // pred_check_branch
      %19 = sbr.rel (0) target = $region5
    $region4: #{tpu_custom_call.1} parent=1 // pred_region
      _
    $region5: #{tpu_custom_call.1} parent=1 // pred_fallthru
      _
    // Predicated region
    $region6: #{tpu_custom_call.1} parent=1 // pred_check
      _
    $region7: #{tpu_custom_call.1} parent=1 // pred_check_branch
      %21 = sbr.rel (0) target = $region9
    $region8: #{tpu_custom_call.1} parent=1 // pred_region
      _
    $region9: #{tpu_custom_call.1} parent=1 // pred_fallthru
      _
    // Predicated region
    $region10: #{tpu_custom_call.1} parent=1 // pred_check
      _
    $region11: #{tpu_custom_call.1} parent=1 // pred_check_branch
      %23 = sbr.rel (0) target = $region13
    $region12: #{tpu_custom_call.1} parent=1 // pred_region
      _
    $region13: #{tpu_custom_call.1} parent=1 // pred_fallthru
      _
    // Predicated region
    $region14: #{tpu_custom_call.1} parent=1 // pred_check
      _
    $region15: #{tpu_custom_call.1} parent=1 // pred_check_branch
      %25 = sbr.rel (0) target = $region17
    $region16: #{tpu_custom_call.1} parent=1 // pred_region
      _
    $region17: #{tpu_custom_call.1} parent=1 // pred_fallthru
      _
    // Predicated region
    $region18: #{tpu_custom_call.1} parent=1 // pred_check
      _
    $region19: #{tpu_custom_call.1} parent=1 // pred_check_branch
      %27 = sbr.rel (0) target = $region21
    $region20: #{tpu_custom_call.1} parent=1 // pred_region
      _
    $region21: #{tpu_custom_call.1} parent=1 // pred_fallthru
      _
    // Predicated region
    $region22: #{tpu_custom_call.1} parent=1 // pred_check
      _
    $region23: #{tpu_custom_call.1} parent=1 // pred_check_branch
      %29 = sbr.rel (0) target = $region25
    $region24: #{tpu_custom_call.1} parent=1 // pred_region
      _
    $region25: #{tpu_custom_call.1} parent=1 // pred_fallthru
      _
    // Predicated region
    $region26: #{tpu_custom_call.1} parent=1 // pred_check
      _
    $region27: #{tpu_custom_call.1} parent=1 // pred_check_branch
      %31 = sbr.rel (0) target = $region29
    $region28: #{tpu_custom_call.1} parent=1 // pred_region
      _
    $region29: #{tpu_custom_call.1} parent=1 // pred_fallthru
      _
    // Predicated region
    $region30: #{tpu_custom_call.1} parent=1 // pred_check
      _
    $region31: #{tpu_custom_call.1} parent=1 // pred_check_branch
      %33 = sbr.rel (0) target = $region33
    $region32: #{tpu_custom_call.1} parent=1 // pred_region
      _
    $region33: #{tpu_custom_call.1} parent=1 // pred_fallthru
      _
    // Predicated region
    $region34: #{tpu_custom_call.1} parent=1 // pred_check
      _
    $region35: #{tpu_custom_call.1} parent=1 // pred_check_branch
      %35 = sbr.rel (0) target = $region37
    $region36: #{tpu_custom_call.1} parent=1 // pred_region
      _
    $region37: #{tpu_custom_call.1} parent=1 // pred_fallthru
      _
    // Predicated region
    $region38: #{tpu_custom_call.1} parent=1 // pred_check
      _
    $region39: #{tpu_custom_call.1} parent=1 // pred_check_branch
      %37 = sbr.rel (0) target = $region41
    $region40: #{tpu_custom_call.1} parent=1 // pred_region
      _
    $region41: #{tpu_custom_call.1} parent=1 // pred_fallthru
      _
    // Predicated region
    $region42: #{tpu_custom_call.1} parent=1 // pred_check
      _
    $region43: #{tpu_custom_call.1} parent=1 // pred_check_branch
      %39 = sbr.rel (0) target = $region45
    $region44: #{tpu_custom_call.1} parent=1 // pred_region
      _
    $region45: #{tpu_custom_call.1} parent=1 // pred_fallthru
      _
    // Predicated region
    $region46: #{tpu_custom_call.1} parent=1 // pred_check
      _
    $region47: #{tpu_custom_call.1} parent=1 // pred_check_branch
      %41 = sbr.rel (0) target = $region49
    $region48: #{tpu_custom_call.1} parent=1 // pred_region
      _
    $region49: #{tpu_custom_call.1} parent=1 // pred_fallthru
      _
    %v43 = vld [vmem:[%s0] sm:$0xff]
    %v44 = vld [vmem:[%s1] sm:$0xff]
    %v45 = vld [vmem:[%s1 + $0x8] sm:$0xff]
    %v46 = vld [vmem:[%s2] sm:$0x1]
    %v48 = vperm.slane %v46, 0
    %vm50 = vcmask 130048
    %v52 = vsel %vm50, %v43, 0
    %54 = vmatpush.msra.mxu0 0.0
    %55 = vmatpush.msra.mxu0 0.0
    %56 = vmatpush.msra.mxu0 0.0
    %57 = vmatpush.msra.mxu0 0.0
    %58 = vmatpush.msra.mxu0 0.0
    %59 = vmatpush.msra.mxu0 0.0
    %60 = vmatpush.msra.mxu0 0.0
    %61 = vmatpush.msra.mxu0 0.0
    %62 = vmatpush.msra.mxu0 0.0
    %63 = vmatpush.msra.mxu0 0.0
    %64 = vmatpush.msra.mxu0 0.0
    %65 = vmatpush.msra.mxu0 0.0
    %66 = vmatpush.msra.mxu0 0.0
    %67 = vmatpush.msra.mxu0 0.0
    %68 = vmatpush.msra.mxu0 %v45
    %69 = vmatpush.msra.mxu0 %v44
    %70 = vmatmul.f32.gmra.mxu0 %v52
    %v71 = vpop.f32.mrf.mxu0
    %v72 = vadd.f32 %v48, %v71
    %73 = vdwg.mxu0
    %v74 = vld [vmem:[%s6] sm:$0xff]
    %v75 = vpack.c.bf16 %v72, %v72
    %v76 = vld [vmem:[%s3] sm:$0xf]
    %v77 = vld [vmem:[%s3 + $0x4] sm:$0xf]
    %v78 = vld [vmem:[%s3 + $0x8] sm:$0xf]
    %v79 = vld [vmem:[%s3 + $0xc] sm:$0xf]
    %v80 = vld [vmem:[%s4] sm:$0x1]
    %v82 = vperm.slane %v80, 0
    %v88 = vunpack.c.l.b16 %v76
    %v89 = vunpack.c.l.b16 %v77
    %v90 = vunpack.c.l.b16 %v78
    %v91 = vunpack.c.l.b16 %v79
    %v92 = vpack.c.b16 %v89, %v88
    %v93 = vpack.c.b16 %v91, %v90
    %vm96 = vcmask 261120
    %v98 = vsel %vm96, %v75, 0
    %100 = vmatpush.bf16.msra.mxu0 0
    %101 = vmatpush.bf16.msra.mxu0 0
    %102 = vmatpush.bf16.msra.mxu0 0
    %103 = vmatpush.bf16.msra.mxu0 0
    %104 = vmatpush.bf16.msra.mxu0 0
    %105 = vmatpush.bf16.msra.mxu0 0
    %106 = vmatpush.bf16.msra.mxu0 %v93
    %107 = vmatpush.bf16.msra.mxu0 %v92
    %108 = vmatmul.bf16.gmra.mxu0 %v98
    %v109 = vpop.f32.mrf.mxu0
    %v110 = vadd.f32 %v82, %v109
    %v111 = vpop.f32.mrf.mxu0
    %112 = vdwg.mxu0
    %114 = vrot.lane.b32.xlu0 %v110, 120
    %v115 = vpop.permute.xlu0 %114
    %116 = vrot.lane.b32.xlu0 %v110, 112
    %v117 = vpop.permute.xlu0 %116
    %118 = vrot.lane.b32.xlu0 %v110, 104
    %v119 = vpop.permute.xlu0 %118
    %120 = vrot.lane.b32.xlu0 %v110, 96
    %v121 = vpop.permute.xlu0 %120
    %vm122 = vcmask 64512
    %v123 = vsel %vm122, %v110, 0
    %v125 = vsel %vm122, %v121, 0
    %127 = vmatpush.xpose.msra.mxu0 0.0
    %128 = vmatpush.xpose.msra.mxu0 0.0
    %129 = vmatpush.xpose.msra.mxu0 0.0
    %130 = vmatpush.xpose.msra.mxu0 0.0
    %131 = vmatpush.xpose.msra.mxu0 0.0
    %132 = vmatpush.xpose.msra.mxu0 0.0
    %133 = vmatpush.xpose.msra.mxu0 0.0
    %134 = vmatpush.xpose.msra.mxu0 0.0
    %135 = vmatpush.xpose.msra.mxu0 0.0
    %136 = vmatpush.xpose.msra.mxu0 0.0
    %137 = vmatpush.xpose.msra.mxu0 0.0
    %138 = vmatpush.xpose.msra.mxu0 0.0
    %139 = vmatpush.xpose.msra.mxu0 0.0
    %140 = vmatpush.xpose.msra.mxu0 0.0
    %141 = vmatpush.xpose.msra.mxu0 0.0
    %142 = vmatpush.xpose.msra.mxu0 %v125
    %143 = vmatmul.f32.gmra.mxu0 %v123
    %v144 = vpop.f32.mrf.mxu0
    %v145 = vadd.f32 0.0, %v144
    %146 = vdwg.mxu0
    %147 = vrot.lane.b32.xlu0 %v115, 96
    %v148 = vpop.permute.xlu0 %147
    %v149 = vsel %vm122, %v115, 0
    %v151 = vsel %vm122, %v148, 0
    %153 = vmatpush.xpose.msra.mxu0 0.0
    %154 = vmatpush.xpose.msra.mxu0 0.0
    %155 = vmatpush.xpose.msra.mxu0 0.0
    %156 = vmatpush.xpose.msra.mxu0 0.0
    %157 = vmatpush.xpose.msra.mxu0 0.0
    %158 = vmatpush.xpose.msra.mxu0 0.0
    %159 = vmatpush.xpose.msra.mxu0 0.0
    %160 = vmatpush.xpose.msra.mxu0 0.0
    %161 = vmatpush.xpose.msra.mxu0 0.0
    %162 = vmatpush.xpose.msra.mxu0 0.0
    %163 = vmatpush.xpose.msra.mxu0 0.0
    %164 = vmatpush.xpose.msra.mxu0 0.0
    %165 = vmatpush.xpose.msra.mxu0 0.0
    %166 = vmatpush.xpose.msra.mxu0 0.0
    %167 = vmatpush.xpose.msra.mxu0 0.0
    %168 = vmatpush.xpose.msra.mxu0 %v151
    %169 = vmatmul.f32.gmra.mxu0 %v149
    %v170 = vpop.f32.mrf.mxu0
    %v171 = vadd.f32 0.0, %v170
    %172 = vdwg.mxu0
    %173 = vrot.lane.b32.xlu0 %v117, 96
    %v174 = vpop.permute.xlu0 %173
    %v175 = vsel %vm122, %v117, 0
    %v177 = vsel %vm122, %v174, 0
    %179 = vmatpush.xpose.msra.mxu0 0.0
    %180 = vmatpush.xpose.msra.mxu0 0.0
    %181 = vmatpush.xpose.msra.mxu0 0.0
    %182 = vmatpush.xpose.msra.mxu0 0.0
    %183 = vmatpush.xpose.msra.mxu0 0.0
    %184 = vmatpush.xpose.msra.mxu0 0.0
    %185 = vmatpush.xpose.msra.mxu0 0.0
    %186 = vmatpush.xpose.msra.mxu0 0.0
    %187 = vmatpush.xpose.msra.mxu0 0.0
    %188 = vmatpush.xpose.msra.mxu0 0.0
    %189 = vmatpush.xpose.msra.mxu0 0.0
    %190 = vmatpush.xpose.msra.mxu0 0.0
    %191 = vmatpush.xpose.msra.mxu0 0.0
    %192 = vmatpush.xpose.msra.mxu0 0.0
    %193 = vmatpush.xpose.msra.mxu0 0.0
    %194 = vmatpush.xpose.msra.mxu0 %v177
    %195 = vmatmul.f32.gmra.mxu0 %v175
    %v196 = vpop.f32.mrf.mxu0
    %v197 = vadd.f32 0.0, %v196
    %198 = vdwg.mxu0
    %199 = vrot.lane.b32.xlu0 %v119, 96
    %v200 = vpop.permute.xlu0 %199
    %v201 = vsel %vm122, %v119, 0
    %v203 = vsel %vm122, %v200, 0
    %205 = vmatpush.xpose.msra.mxu0 0.0
    %206 = vmatpush.xpose.msra.mxu0 0.0
    %207 = vmatpush.xpose.msra.mxu0 0.0
    %208 = vmatpush.xpose.msra.mxu0 0.0
    %209 = vmatpush.xpose.msra.mxu0 0.0
    %210 = vmatpush.xpose.msra.mxu0 0.0
    %211 = vmatpush.xpose.msra.mxu0 0.0
    %212 = vmatpush.xpose.msra.mxu0 0.0
    %213 = vmatpush.xpose.msra.mxu0 0.0
    %214 = vmatpush.xpose.msra.mxu0 0.0
    %215 = vmatpush.xpose.msra.mxu0 0.0
    %216 = vmatpush.xpose.msra.mxu0 0.0
    %217 = vmatpush.xpose.msra.mxu0 0.0
    %218 = vmatpush.xpose.msra.mxu0 0.0
    %219 = vmatpush.xpose.msra.mxu0 0.0
    %220 = vmatpush.xpose.msra.mxu0 %v203
    %221 = vmatmul.f32.gmra.mxu0 %v201
    %v222 = vpop.f32.mrf.mxu0
    %v223 = vadd.f32 0.0, %v222
    %224 = vdwg.mxu0
    %v225 = vsel %vm122, %v145, -inf
    %226 = vmax.xlane.f32.xlu0 %v225
    %v227 = vpop.xlane.xlu0 %226
    %v228 = vsel %vm122, %v171, -inf
    %229 = vmax.xlane.f32.xlu0 %v228
    %v230 = vpop.xlane.xlu0 %229
    %v231 = vsel %vm122, %v197, -inf
    %232 = vmax.xlane.f32.xlu0 %v231
    %v233 = vpop.xlane.xlu0 %232
    %v234 = vsel %vm122, %v223, -inf
    %235 = vmax.xlane.f32.xlu0 %v234
    %v236 = vpop.xlane.xlu0 %235
    %v237 = vsub.f32 %v145, %v227
    %v238 = vsub.f32 %v171, %v230
    %v239 = vsub.f32 %v197, %v233
    %v240 = vsub.f32 %v223, %v236
    %v241 = vmul.f32 %v237, 1.442695
    %v242 = vpow.pop %v241
    %v243 = vmul.f32 %v238, 1.442695
    %v244 = vpow.pop %v243
    %v245 = vmul.f32 %v239, 1.442695
    %v246 = vpow.pop %v245
    %v247 = vmul.f32 %v240, 1.442695
    %v248 = vpow.pop %v247
    %v249 = vsel %vm122, %v242, 0.0
    %250 = vadd.xlane.f32.xlu0 %v249
    %v251 = vpop.xlane.xlu0 %250
    %v252 = vsel %vm122, %v244, 0.0
    %253 = vadd.xlane.f32.xlu0 %v252
    %v254 = vpop.xlane.xlu0 %253
    %v255 = vsel %vm122, %v246, 0.0
    %256 = vadd.xlane.f32.xlu0 %v255
    %v257 = vpop.xlane.xlu0 %256
    %v258 = vsel %vm122, %v248, 0.0
    %259 = vadd.xlane.f32.xlu0 %v258
    %v260 = vpop.xlane.xlu0 %259
    %v261 = vrcp.pop %v251
    %v262 = vrcp.pop %v254
    %v263 = vrcp.pop %v257
    %v264 = vrcp.pop %v260
    %v265 = vmul.f32 %v242, %v261
    %v266 = vmul.f32 %v244, %v262
    %v267 = vmul.f32 %v246, %v263
    %v268 = vmul.f32 %v248, %v264
    %269 = vrot.lane.b32.xlu0 %v110, 64
    %v270 = vpop.permute.xlu0 %269
    %v273 = vsel %vm122, %v265, 0
    %275 = vmatpush.msra.mxu0 0.0
    %276 = vmatpush.msra.mxu0 0.0
    %277 = vmatpush.msra.mxu0 0.0
    %278 = vmatpush.msra.mxu0 0.0
    %279 = vmatpush.msra.mxu0 0.0
    %280 = vmatpush.msra.mxu0 0.0
    %281 = vmatpush.msra.mxu0 0.0
    %282 = vmatpush.msra.mxu0 0.0
    %283 = vmatpush.msra.mxu0 0.0
    %284 = vmatpush.msra.mxu0 0.0
    %285 = vmatpush.msra.mxu0 0.0
    %286 = vmatpush.msra.mxu0 0.0
    %287 = vmatpush.msra.mxu0 0.0
    %288 = vmatpush.msra.mxu0 0.0
    %289 = vmatpush.msra.mxu0 0.0
    %290 = vmatpush.msra.mxu0 %v270
    %291 = vmatmul.f32.gmra.mxu0 %v273
    %v292 = vpop.f32.mrf.mxu0
    %v293 = vadd.f32 0.0, %v292
    %294 = vdwg.mxu0
    %295 = vrot.lane.b32.xlu0 %v115, 64
    %v296 = vpop.permute.xlu0 %295
    %v299 = vsel %vm122, %v266, 0
    %301 = vmatpush.msra.mxu0 0.0
    %302 = vmatpush.msra.mxu0 0.0
    %303 = vmatpush.msra.mxu0 0.0
    %304 = vmatpush.msra.mxu0 0.0
    %305 = vmatpush.msra.mxu0 0.0
    %306 = vmatpush.msra.mxu0 0.0
    %307 = vmatpush.msra.mxu0 0.0
    %308 = vmatpush.msra.mxu0 0.0
    %309 = vmatpush.msra.mxu0 0.0
    %310 = vmatpush.msra.mxu0 0.0
    %311 = vmatpush.msra.mxu0 0.0
    %312 = vmatpush.msra.mxu0 0.0
    %313 = vmatpush.msra.mxu0 0.0
    %314 = vmatpush.msra.mxu0 0.0
    %315 = vmatpush.msra.mxu0 0.0
    %316 = vmatpush.msra.mxu0 %v296
    %317 = vmatmul.f32.gmra.mxu0 %v299
    %v318 = vpop.f32.mrf.mxu0
    %v319 = vadd.f32 0.0, %v318
    %320 = vdwg.mxu0
    %321 = vrot.lane.b32.xlu0 %v117, 64
    %v322 = vpop.permute.xlu0 %321
    %v325 = vsel %vm122, %v267, 0
    %327 = vmatpush.msra.mxu0 0.0
    %328 = vmatpush.msra.mxu0 0.0
    %329 = vmatpush.msra.mxu0 0.0
    %330 = vmatpush.msra.mxu0 0.0
    %331 = vmatpush.msra.mxu0 0.0
    %332 = vmatpush.msra.mxu0 0.0
    %333 = vmatpush.msra.mxu0 0.0
    %334 = vmatpush.msra.mxu0 0.0
    %335 = vmatpush.msra.mxu0 0.0
    %336 = vmatpush.msra.mxu0 0.0
    %337 = vmatpush.msra.mxu0 0.0
    %338 = vmatpush.msra.mxu0 0.0
    %339 = vmatpush.msra.mxu0 0.0
    %340 = vmatpush.msra.mxu0 0.0
    %341 = vmatpush.msra.mxu0 0.0
    %342 = vmatpush.msra.mxu0 %v322
    %343 = vmatmul.f32.gmra.mxu0 %v325
    %v344 = vpop.f32.mrf.mxu0
    %v345 = vadd.f32 0.0, %v344
    %346 = vdwg.mxu0
    %347 = vrot.lane.b32.xlu0 %v119, 64
    %v348 = vpop.permute.xlu0 %347
    %v351 = vsel %vm122, %v268, 0
    %353 = vmatpush.msra.mxu0 0.0
    %354 = vmatpush.msra.mxu0 0.0
    %355 = vmatpush.msra.mxu0 0.0
    %356 = vmatpush.msra.mxu0 0.0
    %357 = vmatpush.msra.mxu0 0.0
    %358 = vmatpush.msra.mxu0 0.0
    %359 = vmatpush.msra.mxu0 0.0
    %360 = vmatpush.msra.mxu0 0.0
    %361 = vmatpush.msra.mxu0 0.0
    %362 = vmatpush.msra.mxu0 0.0
    %363 = vmatpush.msra.mxu0 0.0
    %364 = vmatpush.msra.mxu0 0.0
    %365 = vmatpush.msra.mxu0 0.0
    %366 = vmatpush.msra.mxu0 0.0
    %367 = vmatpush.msra.mxu0 0.0
    %368 = vmatpush.msra.mxu0 %v348
    %369 = vmatmul.f32.gmra.mxu0 %v351
    %v370 = vpop.f32.mrf.mxu0
    %v371 = vadd.f32 0.0, %v370
    %372 = vdwg.mxu0
    %374 = vrot.lane.b32.xlu0 %v319, 8
    %v375 = vpop.permute.xlu0 %374
    %378 = vrot.lane.b32.xlu0 %v345, 16
    %v379 = vpop.permute.xlu0 %378
    %382 = vrot.lane.b32.xlu0 %v371, 24
    %v383 = vpop.permute.xlu0 %382
    %v385 = vsel %vm122, %v293, %v375
    %v386 = vsel %vm50, %v385, %v379
    %vm387 = vcmask 195584
    %v388 = vsel %vm387, %v386, %v383
    %v389 = vpack.c.bf16 %v388, %v388
    %v390 = vld [vmem:[%s5] sm:$0xf]
    %v391 = vld [vmem:[%s5 + $0x4] sm:$0xf]
    %v392 = vld [vmem:[%s5 + $0x8] sm:$0xf]
    %v393 = vld [vmem:[%s5 + $0xc] sm:$0xf]
    %v394 = vperm.slane %v74, 0
    %v399 = vunpack.c.l.b16 %v390
    %v400 = vunpack.c.l.b16 %v391
    %v401 = vunpack.c.l.b16 %v392
    %v402 = vunpack.c.l.b16 %v393
    %v403 = vpack.c.b16 %v400, %v399
    %v404 = vpack.c.b16 %v402, %v401
    %v408 = vsel %vm96, %v389, 0
    %410 = vmatpush.bf16.msra.mxu0 0
    %411 = vmatpush.bf16.msra.mxu0 0
    %412 = vmatpush.bf16.msra.mxu0 0
    %413 = vmatpush.bf16.msra.mxu0 0
    %414 = vmatpush.bf16.msra.mxu0 0
    %415 = vmatpush.bf16.msra.mxu0 0
    %416 = vmatpush.bf16.msra.mxu0 %v404
    %417 = vmatpush.bf16.msra.mxu0 %v403
    %418 = vmatmul.bf16.gmra.mxu0 %v408
    %v419 = vpop.f32.mrf.mxu0
    %v420 = vadd.f32 %v394, %v419
    %v421 = vpop.f32.mrf.mxu0
    %422 = vdwg.mxu0
    %v423 = vadd.f32 %v72, %v420
    %v424 = vsel %vm96, %v423, 0.0
    %425 = vadd.xlane.f32.xlu0 %v424
    %v426 = vpop.xlane.xlu0 %425
    %v427 = vrcp.pop 32.0
    %v428 = vmul.f32 32.0, %v427
    %v429 = vsub.f32 1.0, %v428
    %v430 = vmul.f32 %v427, %v429
    %v431 = vadd.f32 %v427, %v430
    %vm432 = vweird.f32 %v427
    %v433 = vsel %vm432, %v427, %v431
    %v434 = vmul.f32 %v426, %v433
    %v435 = vsub.f32 %v423, %v434
    %v436 = vmul.f32 %v435, %v435
    %v437 = vsel %vm96, %v436, 0.0
    %438 = vadd.xlane.f32.xlu0 %v437
    %v439 = vpop.xlane.xlu0 %438
    %v440 = vmul.f32 %v439, %v433
    %v441 = vadd.f32 %v440, 1e-05
    %v442 = vrsqrt.pop %v441
    %v443 = vmul.f32 %v442, %v441
    %v444 = vmul.f32 %v443, %v442
    %v445 = vmul.f32 0.5, %v444
    %v446 = vsub.f32 1.5, %v445
    %v447 = vmul.f32 %v442, %v446
    %vm448 = vweird.f32 %v441
    %vm449 = vweird.f32 %v442
    %vm450 = vmor %vm448, %vm449
    %v451 = vsel %vm450, %v442, %v447
    %v452 = vmul.f32 %v435, %v451
    %v453 = vperm.slane %v74, 1
    %v454 = vmul.f32 %v452, %v453
    %v455 = vperm.slane %v74, 2
    %v456 = vadd.f32 %v454, %v455
    %v457 = vpack.c.bf16 %v456, %v456
    %v458 = vld [vmem:[%s8] sm:$0xff]
    %v459 = vld [vmem:[%s8 + $0x8] sm:$0xff]
    %v460 = vld [vmem:[%s8 + $0x10] sm:$0xff]
    %v461 = vld [vmem:[%s8 + $0x18] sm:$0xff]
    %v462 = vld [vmem:[%s8 + $0x20] sm:$0xff]
    %v463 = vld [vmem:[%s8 + $0x28] sm:$0xff]
    %v464 = vld [vmem:[%s8 + $0x30] sm:$0xff]
    %v465 = vld [vmem:[%s8 + $0x38] sm:$0xff]
    %v466 = vld [vmem:[%s8 + $0x40] sm:$0xff]
    %v467 = vld [vmem:[%s8 + $0x48] sm:$0xff]
    %v468 = vld [vmem:[%s8 + $0x50] sm:$0xff]
    %v469 = vld [vmem:[%s8 + $0x58] sm:$0xff]
    %v470 = vld [vmem:[%s8 + $0x60] sm:$0xff]
    %v471 = vld [vmem:[%s8 + $0x68] sm:$0xff]
    %v472 = vld [vmem:[%s8 + $0x70] sm:$0xff]
    %v473 = vld [vmem:[%s8 + $0x78] sm:$0xff]
    %v474 = vld [vmem:[%s8 + $0x80] sm:$0xff]
    %v475 = vld [vmem:[%s8 + $0x88] sm:$0xff]
    %v476 = vld [vmem:[%s8 + $0x90] sm:$0xff]
    %v477 = vld [vmem:[%s8 + $0x98] sm:$0xff]
    %v478 = vld [vmem:[%s8 + $0xa0] sm:$0xff]
    %v479 = vld [vmem:[%s8 + $0xa8] sm:$0xff]
    %v480 = vld [vmem:[%s8 + $0xb0] sm:$0xff]
    %v481 = vld [vmem:[%s8 + $0xb8] sm:$0xff]
    %v482 = vld [vmem:[%s8 + $0xc0] sm:$0xff]
    %v483 = vld [vmem:[%s8 + $0xc8] sm:$0xff]
    %v484 = vld [vmem:[%s8 + $0xd0] sm:$0xff]
    %v485 = vld [vmem:[%s8 + $0xd8] sm:$0xff]
    %v486 = vld [vmem:[%s8 + $0xe0] sm:$0xff]
    %v487 = vld [vmem:[%s8 + $0xe8] sm:$0xff]
    %v488 = vld [vmem:[%s8 + $0xf0] sm:$0xff]
    %v489 = vld [vmem:[%s8 + $0xf8] sm:$0xff]
    %v490 = vld [vmem:[%s7] sm:$0xff]
    %v491 = vld [vmem:[%s7 + $0x8] sm:$0xff]
    %v494 = vperm.slane %v490, 0
    %v495 = vperm.slane %v490, 1
    %v496 = vperm.slane %v490, 2
    %v497 = vperm.slane %v490, 3
    %v498 = vperm.slane %v490, 4
    %v499 = vperm.slane %v490, 5
    %v500 = vperm.slane %v490, 6
    %v501 = vperm.slane %v490, 7
    %v502 = vperm.slane %v491, 0
    %v503 = vperm.slane %v491, 1
    %v504 = vperm.slane %v491, 2
    %v505 = vperm.slane %v491, 3
    %v506 = vperm.slane %v491, 4
    %v507 = vperm.slane %v491, 5
    %v508 = vperm.slane %v491, 6
    %v509 = vperm.slane %v491, 7
    %v558 = vunpack.c.l.b16 %v458
    %v559 = vunpack.c.h.b16 %v458
    %v560 = vunpack.c.l.b16 %v459
    %v561 = vunpack.c.h.b16 %v459
    %v562 = vunpack.c.l.b16 %v460
    %v563 = vunpack.c.h.b16 %v460
    %v564 = vunpack.c.l.b16 %v461
    %v565 = vunpack.c.h.b16 %v461
    %v566 = vunpack.c.l.b16 %v462
    %v567 = vunpack.c.h.b16 %v462
    %v568 = vunpack.c.l.b16 %v463
    %v569 = vunpack.c.h.b16 %v463
    %v570 = vunpack.c.l.b16 %v464
    %v571 = vunpack.c.h.b16 %v464
    %v572 = vunpack.c.l.b16 %v465
    %v573 = vunpack.c.h.b16 %v465
    %v574 = vunpack.c.l.b16 %v466
    %v575 = vunpack.c.h.b16 %v466
    %v576 = vunpack.c.l.b16 %v467
    %v577 = vunpack.c.h.b16 %v467
    %v578 = vunpack.c.l.b16 %v468
    %v579 = vunpack.c.h.b16 %v468
    %v580 = vunpack.c.l.b16 %v469
    %v581 = vunpack.c.h.b16 %v469
    %v582 = vunpack.c.l.b16 %v470
    %v583 = vunpack.c.h.b16 %v470
    %v584 = vunpack.c.l.b16 %v471
    %v585 = vunpack.c.h.b16 %v471
    %v586 = vunpack.c.l.b16 %v472
    %v587 = vunpack.c.h.b16 %v472
    %v588 = vunpack.c.l.b16 %v473
    %v589 = vunpack.c.h.b16 %v473
    %v590 = vunpack.c.l.b16 %v474
    %v591 = vunpack.c.h.b16 %v474
    %v592 = vunpack.c.l.b16 %v475
    %v593 = vunpack.c.h.b16 %v475
    %v594 = vunpack.c.l.b16 %v476
    %v595 = vunpack.c.h.b16 %v476
    %v596 = vunpack.c.l.b16 %v477
    %v597 = vunpack.c.h.b16 %v477
    %v598 = vunpack.c.l.b16 %v478
    %v599 = vunpack.c.h.b16 %v478
    %v600 = vunpack.c.l.b16 %v479
    %v601 = vunpack.c.h.b16 %v479
    %v602 = vunpack.c.l.b16 %v480
    %v603 = vunpack.c.h.b16 %v480
    %v604 = vunpack.c.l.b16 %v481
    %v605 = vunpack.c.h.b16 %v481
    %v606 = vunpack.c.l.b16 %v482
    %v607 = vunpack.c.h.b16 %v482
    %v608 = vunpack.c.l.b16 %v483
    %v609 = vunpack.c.h.b16 %v483
    %v610 = vunpack.c.l.b16 %v484
    %v611 = vunpack.c.h.b16 %v484
    %v612 = vunpack.c.l.b16 %v485
    %v613 = vunpack.c.h.b16 %v485
    %v614 = vunpack.c.l.b16 %v486
    %v615 = vunpack.c.h.b16 %v486
    %v616 = vunpack.c.l.b16 %v487
    %v617 = vunpack.c.h.b16 %v487
    %v618 = vunpack.c.l.b16 %v488
    %v619 = vunpack.c.h.b16 %v488
    %v620 = vunpack.c.l.b16 %v489
    %v621 = vunpack.c.h.b16 %v489
    %v622 = vpack.c.b16 %v574, %v558
    %v623 = vpack.c.b16 %v575, %v559
    %v624 = vpack.c.b16 %v576, %v560
    %v625 = vpack.c.b16 %v577, %v561
    %v626 = vpack.c.b16 %v578, %v562
    %v627 = vpack.c.b16 %v579, %v563
    %v628 = vpack.c.b16 %v580, %v564
    %v629 = vpack.c.b16 %v581, %v565
    %v630 = vpack.c.b16 %v582, %v566
    %v631 = vpack.c.b16 %v583, %v567
    %v632 = vpack.c.b16 %v584, %v568
    %v633 = vpack.c.b16 %v585, %v569
    %v634 = vpack.c.b16 %v586, %v570
    %v635 = vpack.c.b16 %v587, %v571
    %v636 = vpack.c.b16 %v588, %v572
    %v637 = vpack.c.b16 %v589, %v573
    %v638 = vpack.c.b16 %v606, %v590
    %v639 = vpack.c.b16 %v607, %v591
    %v640 = vpack.c.b16 %v608, %v592
    %v641 = vpack.c.b16 %v609, %v593
    %v642 = vpack.c.b16 %v610, %v594
    %v643 = vpack.c.b16 %v611, %v595
    %v644 = vpack.c.b16 %v612, %v596
    %v645 = vpack.c.b16 %v613, %v597
    %v646 = vpack.c.b16 %v614, %v598
    %v647 = vpack.c.b16 %v615, %v599
    %v648 = vpack.c.b16 %v616, %v600
    %v649 = vpack.c.b16 %v617, %v601
    %v650 = vpack.c.b16 %v618, %v602
    %v651 = vpack.c.b16 %v619, %v603
    %v652 = vpack.c.b16 %v620, %v604
    %v653 = vpack.c.b16 %v621, %v605
    %v687 = vsel %vm96, %v457, 0
    %689 = vmatpush.bf16.msra.mxu0 0
    %690 = vmatpush.bf16.msra.mxu0 0
    %691 = vmatpush.bf16.msra.mxu0 0
    %692 = vmatpush.bf16.msra.mxu0 0
    %693 = vmatpush.bf16.msra.mxu0 0
    %694 = vmatpush.bf16.msra.mxu0 0
    %695 = vmatpush.bf16.msra.mxu0 %v638
    %696 = vmatpush.bf16.msra.mxu0 %v622
    %697 = vmatmul.bf16.gmra.mxu0 %v687
    %v698 = vpop.f32.mrf.mxu0
    %v699 = vadd.f32 %v494, %v698
    %v700 = vpop.f32.mrf.mxu0
    %701 = vdwg.mxu0
    %702 = vmatpush.bf16.msra.mxu0 0
    %703 = vmatpush.bf16.msra.mxu0 0
    %704 = vmatpush.bf16.msra.mxu0 0
    %705 = vmatpush.bf16.msra.mxu0 0
    %706 = vmatpush.bf16.msra.mxu0 0
    %707 = vmatpush.bf16.msra.mxu0 0
    %708 = vmatpush.bf16.msra.mxu0 %v639
    %709 = vmatpush.bf16.msra.mxu0 %v623
    %710 = vmatmul.bf16.gmra.mxu0 %v687
    %v711 = vpop.f32.mrf.mxu0
    %v712 = vadd.f32 %v495, %v711
    %v713 = vpop.f32.mrf.mxu0
    %714 = vdwg.mxu0
    %715 = vmatpush.bf16.msra.mxu0 0
    %716 = vmatpush.bf16.msra.mxu0 0
    %717 = vmatpush.bf16.msra.mxu0 0
    %718 = vmatpush.bf16.msra.mxu0 0
    %719 = vmatpush.bf16.msra.mxu0 0
    %720 = vmatpush.bf16.msra.mxu0 0
    %721 = vmatpush.bf16.msra.mxu0 %v640
    %722 = vmatpush.bf16.msra.mxu0 %v624
    %723 = vmatmul.bf16.gmra.mxu0 %v687
    %v724 = vpop.f32.mrf.mxu0
    %v725 = vadd.f32 %v496, %v724
    %v726 = vpop.f32.mrf.mxu0
    %727 = vdwg.mxu0
    %728 = vmatpush.bf16.msra.mxu0 0
    %729 = vmatpush.bf16.msra.mxu0 0
    %730 = vmatpush.bf16.msra.mxu0 0
    %731 = vmatpush.bf16.msra.mxu0 0
    %732 = vmatpush.bf16.msra.mxu0 0
    %733 = vmatpush.bf16.msra.mxu0 0
    %734 = vmatpush.bf16.msra.mxu0 %v641
    %735 = vmatpush.bf16.msra.mxu0 %v625
    %736 = vmatmul.bf16.gmra.mxu0 %v687
    %v737 = vpop.f32.mrf.mxu0
    %v738 = vadd.f32 %v497, %v737
    %v739 = vpop.f32.mrf.mxu0
    %740 = vdwg.mxu0
    %741 = vmatpush.bf16.msra.mxu0 0
    %742 = vmatpush.bf16.msra.mxu0 0
    %743 = vmatpush.bf16.msra.mxu0 0
    %744 = vmatpush.bf16.msra.mxu0 0
    %745 = vmatpush.bf16.msra.mxu0 0
    %746 = vmatpush.bf16.msra.mxu0 0
    %747 = vmatpush.bf16.msra.mxu0 %v642
    %748 = vmatpush.bf16.msra.mxu0 %v626
    %749 = vmatmul.bf16.gmra.mxu0 %v687
    %v750 = vpop.f32.mrf.mxu0
    %v751 = vadd.f32 %v498, %v750
    %v752 = vpop.f32.mrf.mxu0
    %753 = vdwg.mxu0
    %754 = vmatpush.bf16.msra.mxu0 0
    %755 = vmatpush.bf16.msra.mxu0 0
    %756 = vmatpush.bf16.msra.mxu0 0
    %757 = vmatpush.bf16.msra.mxu0 0
    %758 = vmatpush.bf16.msra.mxu0 0
    %759 = vmatpush.bf16.msra.mxu0 0
    %760 = vmatpush.bf16.msra.mxu0 %v643
    %761 = vmatpush.bf16.msra.mxu0 %v627
    %762 = vmatmul.bf16.gmra.mxu0 %v687
    %v763 = vpop.f32.mrf.mxu0
    %v764 = vadd.f32 %v499, %v763
    %v765 = vpop.f32.mrf.mxu0
    %766 = vdwg.mxu0
    %767 = vmatpush.bf16.msra.mxu0 0
    %768 = vmatpush.bf16.msra.mxu0 0
    %769 = vmatpush.bf16.msra.mxu0 0
    %770 = vmatpush.bf16.msra.mxu0 0
    %771 = vmatpush.bf16.msra.mxu0 0
    %772 = vmatpush.bf16.msra.mxu0 0
    %773 = vmatpush.bf16.msra.mxu0 %v644
    %774 = vmatpush.bf16.msra.mxu0 %v628
    %775 = vmatmul.bf16.gmra.mxu0 %v687
    %v776 = vpop.f32.mrf.mxu0
    %v777 = vadd.f32 %v500, %v776
    %v778 = vpop.f32.mrf.mxu0
    %779 = vdwg.mxu0
    %780 = vmatpush.bf16.msra.mxu0 0
    %781 = vmatpush.bf16.msra.mxu0 0
    %782 = vmatpush.bf16.msra.mxu0 0
    %783 = vmatpush.bf16.msra.mxu0 0
    %784 = vmatpush.bf16.msra.mxu0 0
    %785 = vmatpush.bf16.msra.mxu0 0
    %786 = vmatpush.bf16.msra.mxu0 %v645
    %787 = vmatpush.bf16.msra.mxu0 %v629
    %788 = vmatmul.bf16.gmra.mxu0 %v687
    %v789 = vpop.f32.mrf.mxu0
    %v790 = vadd.f32 %v501, %v789
    %v791 = vpop.f32.mrf.mxu0
    %792 = vdwg.mxu0
    %793 = vmatpush.bf16.msra.mxu0 0
    %794 = vmatpush.bf16.msra.mxu0 0
    %795 = vmatpush.bf16.msra.mxu0 0
    %796 = vmatpush.bf16.msra.mxu0 0
    %797 = vmatpush.bf16.msra.mxu0 0
    %798 = vmatpush.bf16.msra.mxu0 0
    %799 = vmatpush.bf16.msra.mxu0 %v646
    %800 = vmatpush.bf16.msra.mxu0 %v630
    %801 = vmatmul.bf16.gmra.mxu0 %v687
    %v802 = vpop.f32.mrf.mxu0
    %v803 = vadd.f32 %v502, %v802
    %v804 = vpop.f32.mrf.mxu0
    %805 = vdwg.mxu0
    %806 = vmatpush.bf16.msra.mxu0 0
    %807 = vmatpush.bf16.msra.mxu0 0
    %808 = vmatpush.bf16.msra.mxu0 0
    %809 = vmatpush.bf16.msra.mxu0 0
    %810 = vmatpush.bf16.msra.mxu0 0
    %811 = vmatpush.bf16.msra.mxu0 0
    %812 = vmatpush.bf16.msra.mxu0 %v647
    %813 = vmatpush.bf16.msra.mxu0 %v631
    %814 = vmatmul.bf16.gmra.mxu0 %v687
    %v815 = vpop.f32.mrf.mxu0
    %v816 = vadd.f32 %v503, %v815
    %v817 = vpop.f32.mrf.mxu0
    %818 = vdwg.mxu0
    %819 = vmatpush.bf16.msra.mxu0 0
    %820 = vmatpush.bf16.msra.mxu0 0
    %821 = vmatpush.bf16.msra.mxu0 0
    %822 = vmatpush.bf16.msra.mxu0 0
    %823 = vmatpush.bf16.msra.mxu0 0
    %824 = vmatpush.bf16.msra.mxu0 0
    %825 = vmatpush.bf16.msra.mxu0 %v648
    %826 = vmatpush.bf16.msra.mxu0 %v632
    %827 = vmatmul.bf16.gmra.mxu0 %v687
    %v828 = vpop.f32.mrf.mxu0
    %v829 = vadd.f32 %v504, %v828
    %v830 = vpop.f32.mrf.mxu0
    %831 = vdwg.mxu0
    %832 = vmatpush.bf16.msra.mxu0 0
    %833 = vmatpush.bf16.msra.mxu0 0
    %834 = vmatpush.bf16.msra.mxu0 0
    %835 = vmatpush.bf16.msra.mxu0 0
    %836 = vmatpush.bf16.msra.mxu0 0
    %837 = vmatpush.bf16.msra.mxu0 0
    %838 = vmatpush.bf16.msra.mxu0 %v649
    %839 = vmatpush.bf16.msra.mxu0 %v633
    %840 = vmatmul.bf16.gmra.mxu0 %v687
    %v841 = vpop.f32.mrf.mxu0
    %v842 = vadd.f32 %v505, %v841
    %v843 = vpop.f32.mrf.mxu0
    %844 = vdwg.mxu0
    %845 = vmatpush.bf16.msra.mxu0 0
    %846 = vmatpush.bf16.msra.mxu0 0
    %847 = vmatpush.bf16.msra.mxu0 0
    %848 = vmatpush.bf16.msra.mxu0 0
    %849 = vmatpush.bf16.msra.mxu0 0
    %850 = vmatpush.bf16.msra.mxu0 0
    %851 = vmatpush.bf16.msra.mxu0 %v650
    %852 = vmatpush.bf16.msra.mxu0 %v634
    %853 = vmatmul.bf16.gmra.mxu0 %v687
    %v854 = vpop.f32.mrf.mxu0
    %v855 = vadd.f32 %v506, %v854
    %v856 = vpop.f32.mrf.mxu0
    %857 = vdwg.mxu0
    %858 = vmatpush.bf16.msra.mxu0 0
    %859 = vmatpush.bf16.msra.mxu0 0
    %860 = vmatpush.bf16.msra.mxu0 0
    %861 = vmatpush.bf16.msra.mxu0 0
    %862 = vmatpush.bf16.msra.mxu0 0
    %863 = vmatpush.bf16.msra.mxu0 0
    %864 = vmatpush.bf16.msra.mxu0 %v651
    %865 = vmatpush.bf16.msra.mxu0 %v635
    %866 = vmatmul.bf16.gmra.mxu0 %v687
    %v867 = vpop.f32.mrf.mxu0
    %v868 = vadd.f32 %v507, %v867
    %v869 = vpop.f32.mrf.mxu0
    %870 = vdwg.mxu0
    %871 = vmatpush.bf16.msra.mxu0 0
    %872 = vmatpush.bf16.msra.mxu0 0
    %873 = vmatpush.bf16.msra.mxu0 0
    %874 = vmatpush.bf16.msra.mxu0 0
    %875 = vmatpush.bf16.msra.mxu0 0
    %876 = vmatpush.bf16.msra.mxu0 0
    %877 = vmatpush.bf16.msra.mxu0 %v652
    %878 = vmatpush.bf16.msra.mxu0 %v636
    %879 = vmatmul.bf16.gmra.mxu0 %v687
    %v880 = vpop.f32.mrf.mxu0
    %v881 = vadd.f32 %v508, %v880
    %v882 = vpop.f32.mrf.mxu0
    %883 = vdwg.mxu0
    %884 = vmatpush.bf16.msra.mxu0 0
    %885 = vmatpush.bf16.msra.mxu0 0
    %886 = vmatpush.bf16.msra.mxu0 0
    %887 = vmatpush.bf16.msra.mxu0 0
    %888 = vmatpush.bf16.msra.mxu0 0
    %889 = vmatpush.bf16.msra.mxu0 0
    %890 = vmatpush.bf16.msra.mxu0 %v653
    %891 = vmatpush.bf16.msra.mxu0 %v637
    %892 = vmatmul.bf16.gmra.mxu0 %v687
    %v893 = vpop.f32.mrf.mxu0
    %v894 = vadd.f32 %v509, %v893
    %v895 = vpop.f32.mrf.mxu0
    %896 = vdwg.mxu0
    %v897 = vmax.f32 %v699, 0.0
    %v898 = vmax.f32 %v712, 0.0
    %v899 = vmax.f32 %v725, 0.0
    %v900 = vmax.f32 %v738, 0.0
    %v901 = vmax.f32 %v751, 0.0
    %v902 = vmax.f32 %v764, 0.0
    %v903 = vmax.f32 %v777, 0.0
    %v904 = vmax.f32 %v790, 0.0
    %v905 = vmax.f32 %v803, 0.0
    %v906 = vmax.f32 %v816, 0.0
    %v907 = vmax.f32 %v829, 0.0
    %v908 = vmax.f32 %v842, 0.0
    %v909 = vmax.f32 %v855, 0.0
    %v910 = vmax.f32 %v868, 0.0
    %v911 = vmax.f32 %v881, 0.0
    %v912 = vmax.f32 %v894, 0.0
    %v913 = vpack.c.bf16 %v897, %v897
    %v914 = vpack.c.bf16 %v898, %v898
    %v915 = vpack.c.bf16 %v899, %v899
    %v916 = vpack.c.bf16 %v900, %v900
    %v917 = vpack.c.bf16 %v901, %v901
    %v918 = vpack.c.bf16 %v902, %v902
    %v919 = vpack.c.bf16 %v903, %v903
    %v920 = vpack.c.bf16 %v904, %v904
    %v921 = vpack.c.bf16 %v905, %v905
    %v922 = vpack.c.bf16 %v906, %v906
    %v923 = vpack.c.bf16 %v907, %v907
    %v924 = vpack.c.bf16 %v908, %v908
    %v925 = vpack.c.bf16 %v909, %v909
    %v926 = vpack.c.bf16 %v910, %v910
    %v927 = vpack.c.bf16 %v911, %v911
    %v928 = vpack.c.bf16 %v912, %v912
    %v929 = vld [vmem:[%s9] sm:$0xf]
    %v930 = vld [vmem:[%s9 + $0x4] sm:$0xf]
    %v931 = vld [vmem:[%s9 + $0x8] sm:$0xf]
    %v932 = vld [vmem:[%s9 + $0xc] sm:$0xf]
    %v933 = vld [vmem:[%s9 + $0x10] sm:$0xf]
    %v934 = vld [vmem:[%s9 + $0x14] sm:$0xf]
    %v935 = vld [vmem:[%s9 + $0x18] sm:$0xf]
    %v936 = vld [vmem:[%s9 + $0x1c] sm:$0xf]
    %v937 = vld [vmem:[%s9 + $0x20] sm:$0xf]
    %v938 = vld [vmem:[%s9 + $0x24] sm:$0xf]
    %v939 = vld [vmem:[%s9 + $0x28] sm:$0xf]
    %v940 = vld [vmem:[%s9 + $0x2c] sm:$0xf]
    %v941 = vld [vmem:[%s9 + $0x30] sm:$0xf]
    %v942 = vld [vmem:[%s9 + $0x34] sm:$0xf]
    %v943 = vld [vmem:[%s9 + $0x38] sm:$0xf]
    %v944 = vld [vmem:[%s9 + $0x3c] sm:$0xf]
    %v945 = vld [vmem:[%s9 + $0x40] sm:$0xf]
    %v946 = vld [vmem:[%s9 + $0x44] sm:$0xf]
    %v947 = vld [vmem:[%s9 + $0x48] sm:$0xf]
    %v948 = vld [vmem:[%s9 + $0x4c] sm:$0xf]
    %v949 = vld [vmem:[%s9 + $0x50] sm:$0xf]
    %v950 = vld [vmem:[%s9 + $0x54] sm:$0xf]
    %v951 = vld [vmem:[%s9 + $0x58] sm:$0xf]
    %v952 = vld [vmem:[%s9 + $0x5c] sm:$0xf]
    %v953 = vld [vmem:[%s9 + $0x60] sm:$0xf]
    %v954 = vld [vmem:[%s9 + $0x64] sm:$0xf]
    %v955 = vld [vmem:[%s9 + $0x68] sm:$0xf]
    %v956 = vld [vmem:[%s9 + $0x6c] sm:$0xf]
    %v957 = vld [vmem:[%s9 + $0x70] sm:$0xf]
    %v958 = vld [vmem:[%s9 + $0x74] sm:$0xf]
    %v959 = vld [vmem:[%s9 + $0x78] sm:$0xf]
    %v960 = vld [vmem:[%s9 + $0x7c] sm:$0xf]
    %v961 = vld [vmem:[%s9 + $0x80] sm:$0xf]
    %v962 = vld [vmem:[%s9 + $0x84] sm:$0xf]
    %v963 = vld [vmem:[%s9 + $0x88] sm:$0xf]
    %v964 = vld [vmem:[%s9 + $0x8c] sm:$0xf]
    %v965 = vld [vmem:[%s9 + $0x90] sm:$0xf]
    %v966 = vld [vmem:[%s9 + $0x94] sm:$0xf]
    %v967 = vld [vmem:[%s9 + $0x98] sm:$0xf]
    %v968 = vld [vmem:[%s9 + $0x9c] sm:$0xf]
    %v969 = vld [vmem:[%s9 + $0xa0] sm:$0xf]
    %v970 = vld [vmem:[%s9 + $0xa4] sm:$0xf]
    %v971 = vld [vmem:[%s9 + $0xa8] sm:$0xf]
    %v972 = vld [vmem:[%s9 + $0xac] sm:$0xf]
    %v973 = vld [vmem:[%s9 + $0xb0] sm:$0xf]
    %v974 = vld [vmem:[%s9 + $0xb4] sm:$0xf]
    %v975 = vld [vmem:[%s9 + $0xb8] sm:$0xf]
    %v976 = vld [vmem:[%s9 + $0xbc] sm:$0xf]
    %v977 = vld [vmem:[%s9 + $0xc0] sm:$0xf]
    %v978 = vld [vmem:[%s9 + $0xc4] sm:$0xf]
    %v979 = vld [vmem:[%s9 + $0xc8] sm:$0xf]
    %v980 = vld [vmem:[%s9 + $0xcc] sm:$0xf]
    %v981 = vld [vmem:[%s9 + $0xd0] sm:$0xf]
    %v982 = vld [vmem:[%s9 + $0xd4] sm:$0xf]
    %v983 = vld [vmem:[%s9 + $0xd8] sm:$0xf]
    %v984 = vld [vmem:[%s9 + $0xdc] sm:$0xf]
    %v985 = vld [vmem:[%s9 + $0xe0] sm:$0xf]
    %v986 = vld [vmem:[%s9 + $0xe4] sm:$0xf]
    %v987 = vld [vmem:[%s9 + $0xe8] sm:$0xf]
    %v988 = vld [vmem:[%s9 + $0xec] sm:$0xf]
    %v989 = vld [vmem:[%s9 + $0xf0] sm:$0xf]
    %v990 = vld [vmem:[%s9 + $0xf4] sm:$0xf]
    %v991 = vld [vmem:[%s9 + $0xf8] sm:$0xf]
    %v992 = vld [vmem:[%s9 + $0xfc] sm:$0xf]
    %v993 = vld [vmem:[%s9 + $0x100] sm:$0xf]
    %v994 = vld [vmem:[%s9 + $0x104] sm:$0xf]
    %v995 = vld [vmem:[%s9 + $0x108] sm:$0xf]
    %v996 = vld [vmem:[%s9 + $0x10c] sm:$0xf]
    %v997 = vld [vmem:[%s9 + $0x110] sm:$0xf]
    %v998 = vld [vmem:[%s9 + $0x114] sm:$0xf]
    %v999 = vld [vmem:[%s9 + $0x118] sm:$0xf]
    %v1000 = vld [vmem:[%s9 + $0x11c] sm:$0xf]
    %v1001 = vld [vmem:[%s9 + $0x120] sm:$0xf]
    %v1002 = vld [vmem:[%s9 + $0x124] sm:$0xf]
    %v1003 = vld [vmem:[%s9 + $0x128] sm:$0xf]
    %v1004 = vld [vmem:[%s9 + $0x12c] sm:$0xf]
    %v1005 = vld [vmem:[%s9 + $0x130] sm:$0xf]
    %v1006 = vld [vmem:[%s9 + $0x134] sm:$0xf]
    %v1007 = vld [vmem:[%s9 + $0x138] sm:$0xf]
    %v1008 = vld [vmem:[%s9 + $0x13c] sm:$0xf]
    %v1009 = vld [vmem:[%s9 + $0x140] sm:$0xf]
    %v1010 = vld [vmem:[%s9 + $0x144] sm:$0xf]
    %v1011 = vld [vmem:[%s9 + $0x148] sm:$0xf]
    %v1012 = vld [vmem:[%s9 + $0x14c] sm:$0xf]
    %v1013 = vld [vmem:[%s9 + $0x150] sm:$0xf]
    %v1014 = vld [vmem:[%s9 + $0x154] sm:$0xf]
    %v1015 = vld [vmem:[%s9 + $0x158] sm:$0xf]
    %v1016 = vld [vmem:[%s9 + $0x15c] sm:$0xf]
    %v1017 = vld [vmem:[%s9 + $0x160] sm:$0xf]
    %v1018 = vld [vmem:[%s9 + $0x164] sm:$0xf]
    %v1019 = vld [vmem:[%s9 + $0x168] sm:$0xf]
    %v1020 = vld [vmem:[%s9 + $0x16c] sm:$0xf]
    %v1021 = vld [vmem:[%s9 + $0x170] sm:$0xf]
    %v1022 = vld [vmem:[%s9 + $0x174] sm:$0xf]
    %v1023 = vld [vmem:[%s9 + $0x178] sm:$0xf]
    %v1024 = vld [vmem:[%s9 + $0x17c] sm:$0xf]
    %v1025 = vld [vmem:[%s9 + $0x180] sm:$0xf]
    %v1026 = vld [vmem:[%s9 + $0x184] sm:$0xf]
    %v1027 = vld [vmem:[%s9 + $0x188] sm:$0xf]
    %v1028 = vld [vmem:[%s9 + $0x18c] sm:$0xf]
    %v1029 = vld [vmem:[%s9 + $0x190] sm:$0xf]
    %v1030 = vld [vmem:[%s9 + $0x194] sm:$0xf]
    %v1031 = vld [vmem:[%s9 + $0x198] sm:$0xf]
    %v1032 = vld [vmem:[%s9 + $0x19c] sm:$0xf]
    %v1033 = vld [vmem:[%s9 + $0x1a0] sm:$0xf]
    %v1034 = vld [vmem:[%s9 + $0x1a4] sm:$0xf]
    %v1035 = vld [vmem:[%s9 + $0x1a8] sm:$0xf]
    %v1036 = vld [vmem:[%s9 + $0x1ac] sm:$0xf]
    %v1037 = vld [vmem:[%s9 + $0x1b0] sm:$0xf]
    %v1038 = vld [vmem:[%s9 + $0x1b4] sm:$0xf]
    %v1039 = vld [vmem:[%s9 + $0x1b8] sm:$0xf]
    %v1040 = vld [vmem:[%s9 + $0x1bc] sm:$0xf]
    %v1041 = vld [vmem:[%s9 + $0x1c0] sm:$0xf]
    %v1042 = vld [vmem:[%s9 + $0x1c4] sm:$0xf]
    %v1043 = vld [vmem:[%s9 + $0x1c8] sm:$0xf]
    %v1044 = vld [vmem:[%s9 + $0x1cc] sm:$0xf]
    %v1045 = vld [vmem:[%s9 + $0x1d0] sm:$0xf]
    %v1046 = vld [vmem:[%s9 + $0x1d4] sm:$0xf]
    %v1047 = vld [vmem:[%s9 + $0x1d8] sm:$0xf]
    %v1048 = vld [vmem:[%s9 + $0x1dc] sm:$0xf]
    %v1049 = vld [vmem:[%s9 + $0x1e0] sm:$0xf]
    %v1050 = vld [vmem:[%s9 + $0x1e4] sm:$0xf]
    %v1051 = vld [vmem:[%s9 + $0x1e8] sm:$0xf]
    %v1052 = vld [vmem:[%s9 + $0x1ec] sm:$0xf]
    %v1053 = vld [vmem:[%s9 + $0x1f0] sm:$0xf]
    %v1054 = vld [vmem:[%s9 + $0x1f4] sm:$0xf]
    %v1055 = vld [vmem:[%s9 + $0x1f8] sm:$0xf]
    %v1056 = vld [vmem:[%s9 + $0x1fc] sm:$0xf]
    %v1057 = vld [vmem:[%s9 + $0x200] sm:$0xf]
    %v1058 = vld [vmem:[%s9 + $0x204] sm:$0xf]
    %v1059 = vld [vmem:[%s9 + $0x208] sm:$0xf]
    %v1060 = vld [vmem:[%s9 + $0x20c] sm:$0xf]
    %v1061 = vld [vmem:[%s9 + $0x210] sm:$0xf]
    %v1062 = vld [vmem:[%s9 + $0x214] sm:$0xf]
    %v1063 = vld [vmem:[%s9 + $0x218] sm:$0xf]
    %v1064 = vld [vmem:[%s9 + $0x21c] sm:$0xf]
    %v1065 = vld [vmem:[%s9 + $0x220] sm:$0xf]
    %v1066 = vld [vmem:[%s9 + $0x224] sm:$0xf]
    %v1067 = vld [vmem:[%s9 + $0x228] sm:$0xf]
    %v1068 = vld [vmem:[%s9 + $0x22c] sm:$0xf]
    %v1069 = vld [vmem:[%s9 + $0x230] sm:$0xf]
    %v1070 = vld [vmem:[%s9 + $0x234] sm:$0xf]
    %v1071 = vld [vmem:[%s9 + $0x238] sm:$0xf]
    %v1072 = vld [vmem:[%s9 + $0x23c] sm:$0xf]
    %v1073 = vld [vmem:[%s9 + $0x240] sm:$0xf]
    %v1074 = vld [vmem:[%s9 + $0x244] sm:$0xf]
    %v1075 = vld [vmem:[%s9 + $0x248] sm:$0xf]
    %v1076 = vld [vmem:[%s9 + $0x24c] sm:$0xf]
    %v1077 = vld [vmem:[%s9 + $0x250] sm:$0xf]
    %v1078 = vld [vmem:[%s9 + $0x254] sm:$0xf]
    %v1079 = vld [vmem:[%s9 + $0x258] sm:$0xf]
    %v1080 = vld [vmem:[%s9 + $0x25c] sm:$0xf]
    %v1081 = vld [vmem:[%s9 + $0x260] sm:$0xf]
    %v1082 = vld [vmem:[%s9 + $0x264] sm:$0xf]
    %v1083 = vld [vmem:[%s9 + $0x268] sm:$0xf]
    %v1084 = vld [vmem:[%s9 + $0x26c] sm:$0xf]
    %v1085 = vld [vmem:[%s9 + $0x270] sm:$0xf]
    %v1086 = vld [vmem:[%s9 + $0x274] sm:$0xf]
    %v1087 = vld [vmem:[%s9 + $0x278] sm:$0xf]
    %v1088 = vld [vmem:[%s9 + $0x27c] sm:$0xf]
    %v1089 = vld [vmem:[%s9 + $0x280] sm:$0xf]
    %v1090 = vld [vmem:[%s9 + $0x284] sm:$0xf]
    %v1091 = vld [vmem:[%s9 + $0x288] sm:$0xf]
    %v1092 = vld [vmem:[%s9 + $0x28c] sm:$0xf]
    %v1093 = vld [vmem:[%s9 + $0x290] sm:$0xf]
    %v1094 = vld [vmem:[%s9 + $0x294] sm:$0xf]
    %v1095 = vld [vmem:[%s9 + $0x298] sm:$0xf]
    %v1096 = vld [vmem:[%s9 + $0x29c] sm:$0xf]
    %v1097 = vld [vmem:[%s9 + $0x2a0] sm:$0xf]
    %v1098 = vld [vmem:[%s9 + $0x2a4] sm:$0xf]
    %v1099 = vld [vmem:[%s9 + $0x2a8] sm:$0xf]
    %v1100 = vld [vmem:[%s9 + $0x2ac] sm:$0xf]
    %v1101 = vld [vmem:[%s9 + $0x2b0] sm:$0xf]
    %v1102 = vld [vmem:[%s9 + $0x2b4] sm:$0xf]
    %v1103 = vld [vmem:[%s9 + $0x2b8] sm:$0xf]
    %v1104 = vld [vmem:[%s9 + $0x2bc] sm:$0xf]
    %v1105 = vld [vmem:[%s9 + $0x2c0] sm:$0xf]
    %v1106 = vld [vmem:[%s9 + $0x2c4] sm:$0xf]
    %v1107 = vld [vmem:[%s9 + $0x2c8] sm:$0xf]
    %v1108 = vld [vmem:[%s9 + $0x2cc] sm:$0xf]
    %v1109 = vld [vmem:[%s9 + $0x2d0] sm:$0xf]
    %v1110 = vld [vmem:[%s9 + $0x2d4] sm:$0xf]
    %v1111 = vld [vmem:[%s9 + $0x2d8] sm:$0xf]
    %v1112 = vld [vmem:[%s9 + $0x2dc] sm:$0xf]
    %v1113 = vld [vmem:[%s9 + $0x2e0] sm:$0xf]
    %v1114 = vld [vmem:[%s9 + $0x2e4] sm:$0xf]
    %v1115 = vld [vmem:[%s9 + $0x2e8] sm:$0xf]
    %v1116 = vld [vmem:[%s9 + $0x2ec] sm:$0xf]
    %v1117 = vld [vmem:[%s9 + $0x2f0] sm:$0xf]
    %v1118 = vld [vmem:[%s9 + $0x2f4] sm:$0xf]
    %v1119 = vld [vmem:[%s9 + $0x2f8] sm:$0xf]
    %v1120 = vld [vmem:[%s9 + $0x2fc] sm:$0xf]
    %v1121 = vld [vmem:[%s9 + $0x300] sm:$0xf]
    %v1122 = vld [vmem:[%s9 + $0x304] sm:$0xf]
    %v1123 = vld [vmem:[%s9 + $0x308] sm:$0xf]
    %v1124 = vld [vmem:[%s9 + $0x30c] sm:$0xf]
    %v1125 = vld [vmem:[%s9 + $0x310] sm:$0xf]
    %v1126 = vld [vmem:[%s9 + $0x314] sm:$0xf]
    %v1127 = vld [vmem:[%s9 + $0x318] sm:$0xf]
    %v1128 = vld [vmem:[%s9 + $0x31c] sm:$0xf]
    %v1129 = vld [vmem:[%s9 + $0x320] sm:$0xf]
    %v1130 = vld [vmem:[%s9 + $0x324] sm:$0xf]
    %v1131 = vld [vmem:[%s9 + $0x328] sm:$0xf]
    %v1132 = vld [vmem:[%s9 + $0x32c] sm:$0xf]
    %v1133 = vld [vmem:[%s9 + $0x330] sm:$0xf]
    %v1134 = vld [vmem:[%s9 + $0x334] sm:$0xf]
    %v1135 = vld [vmem:[%s9 + $0x338] sm:$0xf]
    %v1136 = vld [vmem:[%s9 + $0x33c] sm:$0xf]
    %v1137 = vld [vmem:[%s9 + $0x340] sm:$0xf]
    %v1138 = vld [vmem:[%s9 + $0x344] sm:$0xf]
    %v1139 = vld [vmem:[%s9 + $0x348] sm:$0xf]
    %v1140 = vld [vmem:[%s9 + $0x34c] sm:$0xf]
    %v1141 = vld [vmem:[%s9 + $0x350] sm:$0xf]
    %v1142 = vld [vmem:[%s9 + $0x354] sm:$0xf]
    %v1143 = vld [vmem:[%s9 + $0x358] sm:$0xf]
    %v1144 = vld [vmem:[%s9 + $0x35c] sm:$0xf]
    %v1145 = vld [vmem:[%s9 + $0x360] sm:$0xf]
    %v1146 = vld [vmem:[%s9 + $0x364] sm:$0xf]
    %v1147 = vld [vmem:[%s9 + $0x368] sm:$0xf]
    %v1148 = vld [vmem:[%s9 + $0x36c] sm:$0xf]
    %v1149 = vld [vmem:[%s9 + $0x370] sm:$0xf]
    %v1150 = vld [vmem:[%s9 + $0x374] sm:$0xf]
    %v1151 = vld [vmem:[%s9 + $0x378] sm:$0xf]
    %v1152 = vld [vmem:[%s9 + $0x37c] sm:$0xf]
    %v1153 = vld [vmem:[%s9 + $0x380] sm:$0xf]
    %v1154 = vld [vmem:[%s9 + $0x384] sm:$0xf]
    %v1155 = vld [vmem:[%s9 + $0x388] sm:$0xf]
    %v1156 = vld [vmem:[%s9 + $0x38c] sm:$0xf]
    %v1157 = vld [vmem:[%s9 + $0x390] sm:$0xf]
    %v1158 = vld [vmem:[%s9 + $0x394] sm:$0xf]
    %v1159 = vld [vmem:[%s9 + $0x398] sm:$0xf]
    %v1160 = vld [vmem:[%s9 + $0x39c] sm:$0xf]
    %v1161 = vld [vmem:[%s9 + $0x3a0] sm:$0xf]
    %v1162 = vld [vmem:[%s9 + $0x3a4] sm:$0xf]
    %v1163 = vld [vmem:[%s9 + $0x3a8] sm:$0xf]
    %v1164 = vld [vmem:[%s9 + $0x3ac] sm:$0xf]
    %v1165 = vld [vmem:[%s9 + $0x3b0] sm:$0xf]
    %v1166 = vld [vmem:[%s9 + $0x3b4] sm:$0xf]
    %v1167 = vld [vmem:[%s9 + $0x3b8] sm:$0xf]
    %v1168 = vld [vmem:[%s9 + $0x3bc] sm:$0xf]
    %v1169 = vld [vmem:[%s9 + $0x3c0] sm:$0xf]
    %v1170 = vld [vmem:[%s9 + $0x3c4] sm:$0xf]
    %v1171 = vld [vmem:[%s9 + $0x3c8] sm:$0xf]
    %v1172 = vld [vmem:[%s9 + $0x3cc] sm:$0xf]
    %v1173 = vld [vmem:[%s9 + $0x3d0] sm:$0xf]
    %v1174 = vld [vmem:[%s9 + $0x3d4] sm:$0xf]
    %v1175 = vld [vmem:[%s9 + $0x3d8] sm:$0xf]
    %v1176 = vld [vmem:[%s9 + $0x3dc] sm:$0xf]
    %v1177 = vld [vmem:[%s9 + $0x3e0] sm:$0xf]
    %v1178 = vld [vmem:[%s9 + $0x3e4] sm:$0xf]
    %v1179 = vld [vmem:[%s9 + $0x3e8] sm:$0xf]
    %v1180 = vld [vmem:[%s9 + $0x3ec] sm:$0xf]
    %v1181 = vld [vmem:[%s9 + $0x3f0] sm:$0xf]
    %v1182 = vld [vmem:[%s9 + $0x3f4] sm:$0xf]
    %v1183 = vld [vmem:[%s9 + $0x3f8] sm:$0xf]
    %v1184 = vld [vmem:[%s9 + $0x3fc] sm:$0xf]
    %v1185 = vperm.slane %v74, 5
    %v1442 = vunpack.c.l.b16 %v929
    %v1443 = vunpack.c.l.b16 %v930
    %v1444 = vunpack.c.l.b16 %v931
    %v1445 = vunpack.c.l.b16 %v932
    %v1446 = vunpack.c.l.b16 %v933
    %v1447 = vunpack.c.l.b16 %v934
    %v1448 = vunpack.c.l.b16 %v935
    %v1449 = vunpack.c.l.b16 %v936
    %v1450 = vunpack.c.l.b16 %v937
    %v1451 = vunpack.c.l.b16 %v938
    %v1452 = vunpack.c.l.b16 %v939
    %v1453 = vunpack.c.l.b16 %v940
    %v1454 = vunpack.c.l.b16 %v941
    %v1455 = vunpack.c.l.b16 %v942
    %v1456 = vunpack.c.l.b16 %v943
    %v1457 = vunpack.c.l.b16 %v944
    %v1458 = vunpack.c.l.b16 %v945
    %v1459 = vunpack.c.l.b16 %v946
    %v1460 = vunpack.c.l.b16 %v947
    %v1461 = vunpack.c.l.b16 %v948
    %v1462 = vunpack.c.l.b16 %v949
    %v1463 = vunpack.c.l.b16 %v950
    %v1464 = vunpack.c.l.b16 %v951
    %v1465 = vunpack.c.l.b16 %v952
    %v1466 = vunpack.c.l.b16 %v953
    %v1467 = vunpack.c.l.b16 %v954
    %v1468 = vunpack.c.l.b16 %v955
    %v1469 = vunpack.c.l.b16 %v956
    %v1470 = vunpack.c.l.b16 %v957
    %v1471 = vunpack.c.l.b16 %v958
    %v1472 = vunpack.c.l.b16 %v959
    %v1473 = vunpack.c.l.b16 %v960
    %v1474 = vunpack.c.l.b16 %v961
    %v1475 = vunpack.c.l.b16 %v962
    %v1476 = vunpack.c.l.b16 %v963
    %v1477 = vunpack.c.l.b16 %v964
    %v1478 = vunpack.c.l.b16 %v965
    %v1479 = vunpack.c.l.b16 %v966
    %v1480 = vunpack.c.l.b16 %v967
    %v1481 = vunpack.c.l.b16 %v968
    %v1482 = vunpack.c.l.b16 %v969
    %v1483 = vunpack.c.l.b16 %v970
    %v1484 = vunpack.c.l.b16 %v971
    %v1485 = vunpack.c.l.b16 %v972
    %v1486 = vunpack.c.l.b16 %v973
    %v1487 = vunpack.c.l.b16 %v974
    %v1488 = vunpack.c.l.b16 %v975
    %v1489 = vunpack.c.l.b16 %v976
    %v1490 = vunpack.c.l.b16 %v977
    %v1491 = vunpack.c.l.b16 %v978
    %v1492 = vunpack.c.l.b16 %v979
    %v1493 = vunpack.c.l.b16 %v980
    %v1494 = vunpack.c.l.b16 %v981
    %v1495 = vunpack.c.l.b16 %v982
    %v1496 = vunpack.c.l.b16 %v983
    %v1497 = vunpack.c.l.b16 %v984
    %v1498 = vunpack.c.l.b16 %v985
    %v1499 = vunpack.c.l.b16 %v986
    %v1500 = vunpack.c.l.b16 %v987
    %v1501 = vunpack.c.l.b16 %v988
    %v1502 = vunpack.c.l.b16 %v989
    %v1503 = vunpack.c.l.b16 %v990
    %v1504 = vunpack.c.l.b16 %v991
    %v1505 = vunpack.c.l.b16 %v992
    %v1506 = vunpack.c.l.b16 %v993
    %v1507 = vunpack.c.l.b16 %v994
    %v1508 = vunpack.c.l.b16 %v995
    %v1509 = vunpack.c.l.b16 %v996
    %v1510 = vunpack.c.l.b16 %v997
    %v1511 = vunpack.c.l.b16 %v998
    %v1512 = vunpack.c.l.b16 %v999
    %v1513 = vunpack.c.l.b16 %v1000
    %v1514 = vunpack.c.l.b16 %v1001
    %v1515 = vunpack.c.l.b16 %v1002
    %v1516 = vunpack.c.l.b16 %v1003
    %v1517 = vunpack.c.l.b16 %v1004
    %v1518 = vunpack.c.l.b16 %v1005
    %v1519 = vunpack.c.l.b16 %v1006
    %v1520 = vunpack.c.l.b16 %v1007
    %v1521 = vunpack.c.l.b16 %v1008
    %v1522 = vunpack.c.l.b16 %v1009
    %v1523 = vunpack.c.l.b16 %v1010
    %v1524 = vunpack.c.l.b16 %v1011
    %v1525 = vunpack.c.l.b16 %v1012
    %v1526 = vunpack.c.l.b16 %v1013
    %v1527 = vunpack.c.l.b16 %v1014
    %v1528 = vunpack.c.l.b16 %v1015
    %v1529 = vunpack.c.l.b16 %v1016
    %v1530 = vunpack.c.l.b16 %v1017
    %v1531 = vunpack.c.l.b16 %v1018
    %v1532 = vunpack.c.l.b16 %v1019
    %v1533 = vunpack.c.l.b16 %v1020
    %v1534 = vunpack.c.l.b16 %v1021
    %v1535 = vunpack.c.l.b16 %v1022
    %v1536 = vunpack.c.l.b16 %v1023
    %v1537 = vunpack.c.l.b16 %v1024
    %v1538 = vunpack.c.l.b16 %v1025
    %v1539 = vunpack.c.l.b16 %v1026
    %v1540 = vunpack.c.l.b16 %v1027
    %v1541 = vunpack.c.l.b16 %v1028
    %v1542 = vunpack.c.l.b16 %v1029
    %v1543 = vunpack.c.l.b16 %v1030
    %v1544 = vunpack.c.l.b16 %v1031
    %v1545 = vunpack.c.l.b16 %v1032
    %v1546 = vunpack.c.l.b16 %v1033
    %v1547 = vunpack.c.l.b16 %v1034
    %v1548 = vunpack.c.l.b16 %v1035
    %v1549 = vunpack.c.l.b16 %v1036
    %v1550 = vunpack.c.l.b16 %v1037
    %v1551 = vunpack.c.l.b16 %v1038
    %v1552 = vunpack.c.l.b16 %v1039
    %v1553 = vunpack.c.l.b16 %v1040
    %v1554 = vunpack.c.l.b16 %v1041
    %v1555 = vunpack.c.l.b16 %v1042
    %v1556 = vunpack.c.l.b16 %v1043
    %v1557 = vunpack.c.l.b16 %v1044
    %v1558 = vunpack.c.l.b16 %v1045
    %v1559 = vunpack.c.l.b16 %v1046
    %v1560 = vunpack.c.l.b16 %v1047
    %v1561 = vunpack.c.l.b16 %v1048
    %v1562 = vunpack.c.l.b16 %v1049
    %v1563 = vunpack.c.l.b16 %v1050
    %v1564 = vunpack.c.l.b16 %v1051
    %v1565 = vunpack.c.l.b16 %v1052
    %v1566 = vunpack.c.l.b16 %v1053
    %v1567 = vunpack.c.l.b16 %v1054
    %v1568 = vunpack.c.l.b16 %v1055
    %v1569 = vunpack.c.l.b16 %v1056
    %v1570 = vunpack.c.l.b16 %v1057
    %v1571 = vunpack.c.l.b16 %v1058
    %v1572 = vunpack.c.l.b16 %v1059
    %v1573 = vunpack.c.l.b16 %v1060
    %v1574 = vunpack.c.l.b16 %v1061
    %v1575 = vunpack.c.l.b16 %v1062
    %v1576 = vunpack.c.l.b16 %v1063
    %v1577 = vunpack.c.l.b16 %v1064
    %v1578 = vunpack.c.l.b16 %v1065
    %v1579 = vunpack.c.l.b16 %v1066
    %v1580 = vunpack.c.l.b16 %v1067
    %v1581 = vunpack.c.l.b16 %v1068
    %v1582 = vunpack.c.l.b16 %v1069
    %v1583 = vunpack.c.l.b16 %v1070
    %v1584 = vunpack.c.l.b16 %v1071
    %v1585 = vunpack.c.l.b16 %v1072
    %v1586 = vunpack.c.l.b16 %v1073
    %v1587 = vunpack.c.l.b16 %v1074
    %v1588 = vunpack.c.l.b16 %v1075
    %v1589 = vunpack.c.l.b16 %v1076
    %v1590 = vunpack.c.l.b16 %v1077
    %v1591 = vunpack.c.l.b16 %v1078
    %v1592 = vunpack.c.l.b16 %v1079
    %v1593 = vunpack.c.l.b16 %v1080
    %v1594 = vunpack.c.l.b16 %v1081
    %v1595 = vunpack.c.l.b16 %v1082
    %v1596 = vunpack.c.l.b16 %v1083
    %v1597 = vunpack.c.l.b16 %v1084
    %v1598 = vunpack.c.l.b16 %v1085
    %v1599 = vunpack.c.l.b16 %v1086
    %v1600 = vunpack.c.l.b16 %v1087
    %v1601 = vunpack.c.l.b16 %v1088
    %v1602 = vunpack.c.l.b16 %v1089
    %v1603 = vunpack.c.l.b16 %v1090
    %v1604 = vunpack.c.l.b16 %v1091
    %v1605 = vunpack.c.l.b16 %v1092
    %v1606 = vunpack.c.l.b16 %v1093
    %v1607 = vunpack.c.l.b16 %v1094
    %v1608 = vunpack.c.l.b16 %v1095
    %v1609 = vunpack.c.l.b16 %v1096
    %v1610 = vunpack.c.l.b16 %v1097
    %v1611 = vunpack.c.l.b16 %v1098
    %v1612 = vunpack.c.l.b16 %v1099
    %v1613 = vunpack.c.l.b16 %v1100
    %v1614 = vunpack.c.l.b16 %v1101
    %v1615 = vunpack.c.l.b16 %v1102
    %v1616 = vunpack.c.l.b16 %v1103
    %v1617 = vunpack.c.l.b16 %v1104
    %v1618 = vunpack.c.l.b16 %v1105
    %v1619 = vunpack.c.l.b16 %v1106
    %v1620 = vunpack.c.l.b16 %v1107
    %v1621 = vunpack.c.l.b16 %v1108
    %v1622 = vunpack.c.l.b16 %v1109
    %v1623 = vunpack.c.l.b16 %v1110
    %v1624 = vunpack.c.l.b16 %v1111
    %v1625 = vunpack.c.l.b16 %v1112
    %v1626 = vunpack.c.l.b16 %v1113
    %v1627 = vunpack.c.l.b16 %v1114
    %v1628 = vunpack.c.l.b16 %v1115
    %v1629 = vunpack.c.l.b16 %v1116
    %v1630 = vunpack.c.l.b16 %v1117
    %v1631 = vunpack.c.l.b16 %v1118
    %v1632 = vunpack.c.l.b16 %v1119
    %v1633 = vunpack.c.l.b16 %v1120
    %v1634 = vunpack.c.l.b16 %v1121
    %v1635 = vunpack.c.l.b16 %v1122
    %v1636 = vunpack.c.l.b16 %v1123
    %v1637 = vunpack.c.l.b16 %v1124
    %v1638 = vunpack.c.l.b16 %v1125
    %v1639 = vunpack.c.l.b16 %v1126
    %v1640 = vunpack.c.l.b16 %v1127
    %v1641 = vunpack.c.l.b16 %v1128
    %v1642 = vunpack.c.l.b16 %v1129
    %v1643 = vunpack.c.l.b16 %v1130
    %v1644 = vunpack.c.l.b16 %v1131
    %v1645 = vunpack.c.l.b16 %v1132
    %v1646 = vunpack.c.l.b16 %v1133
    %v1647 = vunpack.c.l.b16 %v1134
    %v1648 = vunpack.c.l.b16 %v1135
    %v1649 = vunpack.c.l.b16 %v1136
    %v1650 = vunpack.c.l.b16 %v1137
    %v1651 = vunpack.c.l.b16 %v1138
    %v1652 = vunpack.c.l.b16 %v1139
    %v1653 = vunpack.c.l.b16 %v1140
    %v1654 = vunpack.c.l.b16 %v1141
    %v1655 = vunpack.c.l.b16 %v1142
    %v1656 = vunpack.c.l.b16 %v1143
    %v1657 = vunpack.c.l.b16 %v1144
    %v1658 = vunpack.c.l.b16 %v1145
    %v1659 = vunpack.c.l.b16 %v1146
    %v1660 = vunpack.c.l.b16 %v1147
    %v1661 = vunpack.c.l.b16 %v1148
    %v1662 = vunpack.c.l.b16 %v1149
    %v1663 = vunpack.c.l.b16 %v1150
    %v1664 = vunpack.c.l.b16 %v1151
    %v1665 = vunpack.c.l.b16 %v1152
    %v1666 = vunpack.c.l.b16 %v1153
    %v1667 = vunpack.c.l.b16 %v1154
    %v1668 = vunpack.c.l.b16 %v1155
    %v1669 = vunpack.c.l.b16 %v1156
    %v1670 = vunpack.c.l.b16 %v1157
    %v1671 = vunpack.c.l.b16 %v1158
    %v1672 = vunpack.c.l.b16 %v1159
    %v1673 = vunpack.c.l.b16 %v1160
    %v1674 = vunpack.c.l.b16 %v1161
    %v1675 = vunpack.c.l.b16 %v1162
    %v1676 = vunpack.c.l.b16 %v1163
    %v1677 = vunpack.c.l.b16 %v1164
    %v1678 = vunpack.c.l.b16 %v1165
    %v1679 = vunpack.c.l.b16 %v1166
    %v1680 = vunpack.c.l.b16 %v1167
    %v1681 = vunpack.c.l.b16 %v1168
    %v1682 = vunpack.c.l.b16 %v1169
    %v1683 = vunpack.c.l.b16 %v1170
    %v1684 = vunpack.c.l.b16 %v1171
    %v1685 = vunpack.c.l.b16 %v1172
    %v1686 = vunpack.c.l.b16 %v1173
    %v1687 = vunpack.c.l.b16 %v1174
    %v1688 = vunpack.c.l.b16 %v1175
    %v1689 = vunpack.c.l.b16 %v1176
    %v1690 = vunpack.c.l.b16 %v1177
    %v1691 = vunpack.c.l.b16 %v1178
    %v1692 = vunpack.c.l.b16 %v1179
    %v1693 = vunpack.c.l.b16 %v1180
    %v1694 = vunpack.c.l.b16 %v1181
    %v1695 = vunpack.c.l.b16 %v1182
    %v1696 = vunpack.c.l.b16 %v1183
    %v1697 = vunpack.c.l.b16 %v1184
    %v1698 = vpack.c.b16 %v1443, %v1442
    %v1699 = vpack.c.b16 %v1445, %v1444
    %v1700 = vpack.c.b16 %v1447, %v1446
    %v1701 = vpack.c.b16 %v1449, %v1448
    %v1702 = vpack.c.b16 %v1451, %v1450
    %v1703 = vpack.c.b16 %v1453, %v1452
    %v1704 = vpack.c.b16 %v1455, %v1454
    %v1705 = vpack.c.b16 %v1457, %v1456
    %v1706 = vpack.c.b16 %v1459, %v1458
    %v1707 = vpack.c.b16 %v1461, %v1460
    %v1708 = vpack.c.b16 %v1463, %v1462
    %v1709 = vpack.c.b16 %v1465, %v1464
    %v1710 = vpack.c.b16 %v1467, %v1466
    %v1711 = vpack.c.b16 %v1469, %v1468
    %v1712 = vpack.c.b16 %v1471, %v1470
    %v1713 = vpack.c.b16 %v1473, %v1472
    %v1714 = vpack.c.b16 %v1475, %v1474
    %v1715 = vpack.c.b16 %v1477, %v1476
    %v1716 = vpack.c.b16 %v1479, %v1478
    %v1717 = vpack.c.b16 %v1481, %v1480
    %v1718 = vpack.c.b16 %v1483, %v1482
    %v1719 = vpack.c.b16 %v1485, %v1484
    %v1720 = vpack.c.b16 %v1487, %v1486
    %v1721 = vpack.c.b16 %v1489, %v1488
    %v1722 = vpack.c.b16 %v1491, %v1490
    %v1723 = vpack.c.b16 %v1493, %v1492
    %v1724 = vpack.c.b16 %v1495, %v1494
    %v1725 = vpack.c.b16 %v1497, %v1496
    %v1726 = vpack.c.b16 %v1499, %v1498
    %v1727 = vpack.c.b16 %v1501, %v1500
    %v1728 = vpack.c.b16 %v1503, %v1502
    %v1729 = vpack.c.b16 %v1505, %v1504
    %v1730 = vpack.c.b16 %v1507, %v1506
    %v1731 = vpack.c.b16 %v1509, %v1508
    %v1732 = vpack.c.b16 %v1511, %v1510
    %v1733 = vpack.c.b16 %v1513, %v1512
    %v1734 = vpack.c.b16 %v1515, %v1514
    %v1735 = vpack.c.b16 %v1517, %v1516
    %v1736 = vpack.c.b16 %v1519, %v1518
    %v1737 = vpack.c.b16 %v1521, %v1520
    %v1738 = vpack.c.b16 %v1523, %v1522
    %v1739 = vpack.c.b16 %v1525, %v1524
    %v1740 = vpack.c.b16 %v1527, %v1526
    %v1741 = vpack.c.b16 %v1529, %v1528
    %v1742 = vpack.c.b16 %v1531, %v1530
    %v1743 = vpack.c.b16 %v1533, %v1532
    %v1744 = vpack.c.b16 %v1535, %v1534
    %v1745 = vpack.c.b16 %v1537, %v1536
    %v1746 = vpack.c.b16 %v1539, %v1538
    %v1747 = vpack.c.b16 %v1541, %v1540
    %v1748 = vpack.c.b16 %v1543, %v1542
    %v1749 = vpack.c.b16 %v1545, %v1544
    %v1750 = vpack.c.b16 %v1547, %v1546
    %v1751 = vpack.c.b16 %v1549, %v1548
    %v1752 = vpack.c.b16 %v1551, %v1550
    %v1753 = vpack.c.b16 %v1553, %v1552
    %v1754 = vpack.c.b16 %v1555, %v1554
    %v1755 = vpack.c.b16 %v1557, %v1556
    %v1756 = vpack.c.b16 %v1559, %v1558
    %v1757 = vpack.c.b16 %v1561, %v1560
    %v1758 = vpack.c.b16 %v1563, %v1562
    %v1759 = vpack.c.b16 %v1565, %v1564
    %v1760 = vpack.c.b16 %v1567, %v1566
    %v1761 = vpack.c.b16 %v1569, %v1568
    %v1762 = vpack.c.b16 %v1571, %v1570
    %v1763 = vpack.c.b16 %v1573, %v1572
    %v1764 = vpack.c.b16 %v1575, %v1574
    %v1765 = vpack.c.b16 %v1577, %v1576
    %v1766 = vpack.c.b16 %v1579, %v1578
    %v1767 = vpack.c.b16 %v1581, %v1580
    %v1768 = vpack.c.b16 %v1583, %v1582
    %v1769 = vpack.c.b16 %v1585, %v1584
    %v1770 = vpack.c.b16 %v1587, %v1586
    %v1771 = vpack.c.b16 %v1589, %v1588
    %v1772 = vpack.c.b16 %v1591, %v1590
    %v1773 = vpack.c.b16 %v1593, %v1592
    %v1774 = vpack.c.b16 %v1595, %v1594
    %v1775 = vpack.c.b16 %v1597, %v1596
    %v1776 = vpack.c.b16 %v1599, %v1598
    %v1777 = vpack.c.b16 %v1601, %v1600
    %v1778 = vpack.c.b16 %v1603, %v1602
    %v1779 = vpack.c.b16 %v1605, %v1604
    %v1780 = vpack.c.b16 %v1607, %v1606
    %v1781 = vpack.c.b16 %v1609, %v1608
    %v1782 = vpack.c.b16 %v1611, %v1610
    %v1783 = vpack.c.b16 %v1613, %v1612
    %v1784 = vpack.c.b16 %v1615, %v1614
    %v1785 = vpack.c.b16 %v1617, %v1616
    %v1786 = vpack.c.b16 %v1619, %v1618
    %v1787 = vpack.c.b16 %v1621, %v1620
    %v1788 = vpack.c.b16 %v1623, %v1622
    %v1789 = vpack.c.b16 %v1625, %v1624
    %v1790 = vpack.c.b16 %v1627, %v1626
    %v1791 = vpack.c.b16 %v1629, %v1628
    %v1792 = vpack.c.b16 %v1631, %v1630
    %v1793 = vpack.c.b16 %v1633, %v1632
    %v1794 = vpack.c.b16 %v1635, %v1634
    %v1795 = vpack.c.b16 %v1637, %v1636
    %v1796 = vpack.c.b16 %v1639, %v1638
    %v1797 = vpack.c.b16 %v1641, %v1640
    %v1798 = vpack.c.b16 %v1643, %v1642
    %v1799 = vpack.c.b16 %v1645, %v1644
    %v1800 = vpack.c.b16 %v1647, %v1646
    %v1801 = vpack.c.b16 %v1649, %v1648
    %v1802 = vpack.c.b16 %v1651, %v1650
    %v1803 = vpack.c.b16 %v1653, %v1652
    %v1804 = vpack.c.b16 %v1655, %v1654
    %v1805 = vpack.c.b16 %v1657, %v1656
    %v1806 = vpack.c.b16 %v1659, %v1658
    %v1807 = vpack.c.b16 %v1661, %v1660
    %v1808 = vpack.c.b16 %v1663, %v1662
    %v1809 = vpack.c.b16 %v1665, %v1664
    %v1810 = vpack.c.b16 %v1667, %v1666
    %v1811 = vpack.c.b16 %v1669, %v1668
    %v1812 = vpack.c.b16 %v1671, %v1670
    %v1813 = vpack.c.b16 %v1673, %v1672
    %v1814 = vpack.c.b16 %v1675, %v1674
    %v1815 = vpack.c.b16 %v1677, %v1676
    %v1816 = vpack.c.b16 %v1679, %v1678
    %v1817 = vpack.c.b16 %v1681, %v1680
    %v1818 = vpack.c.b16 %v1683, %v1682
    %v1819 = vpack.c.b16 %v1685, %v1684
    %v1820 = vpack.c.b16 %v1687, %v1686
    %v1821 = vpack.c.b16 %v1689, %v1688
    %v1822 = vpack.c.b16 %v1691, %v1690
    %v1823 = vpack.c.b16 %v1693, %v1692
    %v1824 = vpack.c.b16 %v1695, %v1694
    %v1825 = vpack.c.b16 %v1697, %v1696
    %1954 = vmatpush.bf16.msra.mxu0 %v1705
    %1955 = vmatpush.bf16.msra.mxu0 %v1704
    %1956 = vmatpush.bf16.msra.mxu0 %v1703
    %1957 = vmatpush.bf16.msra.mxu0 %v1702
    %1958 = vmatpush.bf16.msra.mxu0 %v1701
    %1959 = vmatpush.bf16.msra.mxu0 %v1700
    %1960 = vmatpush.bf16.msra.mxu0 %v1699
    %1961 = vmatpush.bf16.msra.mxu0 %v1698
    %1962 = vmatmul.bf16.gmra.mxu0 %v913
    %v1963 = vpop.f32.mrf.mxu0
    %v1964 = vadd.f32 %v1185, %v1963
    %v1965 = vpop.f32.mrf.mxu0
    %1966 = vdwg.mxu0
    %1967 = vmatpush.bf16.msra.mxu0 %v1713
    %1968 = vmatpush.bf16.msra.mxu0 %v1712
    %1969 = vmatpush.bf16.msra.mxu0 %v1711
    %1970 = vmatpush.bf16.msra.mxu0 %v1710
    %1971 = vmatpush.bf16.msra.mxu0 %v1709
    %1972 = vmatpush.bf16.msra.mxu0 %v1708
    %1973 = vmatpush.bf16.msra.mxu0 %v1707
    %1974 = vmatpush.bf16.msra.mxu0 %v1706
    %1975 = vmatmul.bf16.gmra.mxu0 %v914
    %v1976 = vpop.f32.mrf.mxu0
    %v1977 = vadd.f32 %v1964, %v1976
    %v1978 = vpop.f32.mrf.mxu0
    %1979 = vdwg.mxu0
    %1980 = vmatpush.bf16.msra.mxu0 %v1721
    %1981 = vmatpush.bf16.msra.mxu0 %v1720
    %1982 = vmatpush.bf16.msra.mxu0 %v1719
    %1983 = vmatpush.bf16.msra.mxu0 %v1718
    %1984 = vmatpush.bf16.msra.mxu0 %v1717
    %1985 = vmatpush.bf16.msra.mxu0 %v1716
    %1986 = vmatpush.bf16.msra.mxu0 %v1715
    %1987 = vmatpush.bf16.msra.mxu0 %v1714
    %1988 = vmatmul.bf16.gmra.mxu0 %v915
    %v1989 = vpop.f32.mrf.mxu0
    %v1990 = vadd.f32 %v1977, %v1989
    %v1991 = vpop.f32.mrf.mxu0
    %1992 = vdwg.mxu0
    %1993 = vmatpush.bf16.msra.mxu0 %v1729
    %1994 = vmatpush.bf16.msra.mxu0 %v1728
    %1995 = vmatpush.bf16.msra.mxu0 %v1727
    %1996 = vmatpush.bf16.msra.mxu0 %v1726
    %1997 = vmatpush.bf16.msra.mxu0 %v1725
    %1998 = vmatpush.bf16.msra.mxu0 %v1724
    %1999 = vmatpush.bf16.msra.mxu0 %v1723
    %2000 = vmatpush.bf16.msra.mxu0 %v1722
    %2001 = vmatmul.bf16.gmra.mxu0 %v916
    %v2002 = vpop.f32.mrf.mxu0
    %v2003 = vadd.f32 %v1990, %v2002
    %v2004 = vpop.f32.mrf.mxu0
    %2005 = vdwg.mxu0
    %2006 = vmatpush.bf16.msra.mxu0 %v1737
    %2007 = vmatpush.bf16.msra.mxu0 %v1736
    %2008 = vmatpush.bf16.msra.mxu0 %v1735
    %2009 = vmatpush.bf16.msra.mxu0 %v1734
    %2010 = vmatpush.bf16.msra.mxu0 %v1733
    %2011 = vmatpush.bf16.msra.mxu0 %v1732
    %2012 = vmatpush.bf16.msra.mxu0 %v1731
    %2013 = vmatpush.bf16.msra.mxu0 %v1730
    %2014 = vmatmul.bf16.gmra.mxu0 %v917
    %v2015 = vpop.f32.mrf.mxu0
    %v2016 = vadd.f32 %v2003, %v2015
    %v2017 = vpop.f32.mrf.mxu0
    %2018 = vdwg.mxu0
    %2019 = vmatpush.bf16.msra.mxu0 %v1745
    %2020 = vmatpush.bf16.msra.mxu0 %v1744
    %2021 = vmatpush.bf16.msra.mxu0 %v1743
    %2022 = vmatpush.bf16.msra.mxu0 %v1742
    %2023 = vmatpush.bf16.msra.mxu0 %v1741
    %2024 = vmatpush.bf16.msra.mxu0 %v1740
    %2025 = vmatpush.bf16.msra.mxu0 %v1739
    %2026 = vmatpush.bf16.msra.mxu0 %v1738
    %2027 = vmatmul.bf16.gmra.mxu0 %v918
    %v2028 = vpop.f32.mrf.mxu0
    %v2029 = vadd.f32 %v2016, %v2028
    %v2030 = vpop.f32.mrf.mxu0
    %2031 = vdwg.mxu0
    %2032 = vmatpush.bf16.msra.mxu0 %v1753
    %2033 = vmatpush.bf16.msra.mxu0 %v1752
    %2034 = vmatpush.bf16.msra.mxu0 %v1751
    %2035 = vmatpush.bf16.msra.mxu0 %v1750
    %2036 = vmatpush.bf16.msra.mxu0 %v1749
    %2037 = vmatpush.bf16.msra.mxu0 %v1748
    %2038 = vmatpush.bf16.msra.mxu0 %v1747
    %2039 = vmatpush.bf16.msra.mxu0 %v1746
    %2040 = vmatmul.bf16.gmra.mxu0 %v919
    %v2041 = vpop.f32.mrf.mxu0
    %v2042 = vadd.f32 %v2029, %v2041
    %v2043 = vpop.f32.mrf.mxu0
    %2044 = vdwg.mxu0
    %2045 = vmatpush.bf16.msra.mxu0 %v1761
    %2046 = vmatpush.bf16.msra.mxu0 %v1760
    %2047 = vmatpush.bf16.msra.mxu0 %v1759
    %2048 = vmatpush.bf16.msra.mxu0 %v1758
    %2049 = vmatpush.bf16.msra.mxu0 %v1757
    %2050 = vmatpush.bf16.msra.mxu0 %v1756
    %2051 = vmatpush.bf16.msra.mxu0 %v1755
    %2052 = vmatpush.bf16.msra.mxu0 %v1754
    %2053 = vmatmul.bf16.gmra.mxu0 %v920
    %v2054 = vpop.f32.mrf.mxu0
    %v2055 = vadd.f32 %v2042, %v2054
    %v2056 = vpop.f32.mrf.mxu0
    %2057 = vdwg.mxu0
    %2058 = vmatpush.bf16.msra.mxu0 %v1769
    %2059 = vmatpush.bf16.msra.mxu0 %v1768
    %2060 = vmatpush.bf16.msra.mxu0 %v1767
    %2061 = vmatpush.bf16.msra.mxu0 %v1766
    %2062 = vmatpush.bf16.msra.mxu0 %v1765
    %2063 = vmatpush.bf16.msra.mxu0 %v1764
    %2064 = vmatpush.bf16.msra.mxu0 %v1763
    %2065 = vmatpush.bf16.msra.mxu0 %v1762
    %2066 = vmatmul.bf16.gmra.mxu0 %v921
    %v2067 = vpop.f32.mrf.mxu0
    %v2068 = vadd.f32 %v2055, %v2067
    %v2069 = vpop.f32.mrf.mxu0
    %2070 = vdwg.mxu0
    %2071 = vmatpush.bf16.msra.mxu0 %v1777
    %2072 = vmatpush.bf16.msra.mxu0 %v1776
    %2073 = vmatpush.bf16.msra.mxu0 %v1775
    %2074 = vmatpush.bf16.msra.mxu0 %v1774
    %2075 = vmatpush.bf16.msra.mxu0 %v1773
    %2076 = vmatpush.bf16.msra.mxu0 %v1772
    %2077 = vmatpush.bf16.msra.mxu0 %v1771
    %2078 = vmatpush.bf16.msra.mxu0 %v1770
    %2079 = vmatmul.bf16.gmra.mxu0 %v922
    %v2080 = vpop.f32.mrf.mxu0
    %v2081 = vadd.f32 %v2068, %v2080
    %v2082 = vpop.f32.mrf.mxu0
    %2083 = vdwg.mxu0
    %2084 = vmatpush.bf16.msra.mxu0 %v1785
    %2085 = vmatpush.bf16.msra.mxu0 %v1784
    %2086 = vmatpush.bf16.msra.mxu0 %v1783
    %2087 = vmatpush.bf16.msra.mxu0 %v1782
    %2088 = vmatpush.bf16.msra.mxu0 %v1781
    %2089 = vmatpush.bf16.msra.mxu0 %v1780
    %2090 = vmatpush.bf16.msra.mxu0 %v1779
    %2091 = vmatpush.bf16.msra.mxu0 %v1778
    %2092 = vmatmul.bf16.gmra.mxu0 %v923
    %v2093 = vpop.f32.mrf.mxu0
    %v2094 = vadd.f32 %v2081, %v2093
    %v2095 = vpop.f32.mrf.mxu0
    %2096 = vdwg.mxu0
    %2097 = vmatpush.bf16.msra.mxu0 %v1793
    %2098 = vmatpush.bf16.msra.mxu0 %v1792
    %2099 = vmatpush.bf16.msra.mxu0 %v1791
    %2100 = vmatpush.bf16.msra.mxu0 %v1790
    %2101 = vmatpush.bf16.msra.mxu0 %v1789
    %2102 = vmatpush.bf16.msra.mxu0 %v1788
    %2103 = vmatpush.bf16.msra.mxu0 %v1787
    %2104 = vmatpush.bf16.msra.mxu0 %v1786
    %2105 = vmatmul.bf16.gmra.mxu0 %v924
    %v2106 = vpop.f32.mrf.mxu0
    %v2107 = vadd.f32 %v2094, %v2106
    %v2108 = vpop.f32.mrf.mxu0
    %2109 = vdwg.mxu0
    %2110 = vmatpush.bf16.msra.mxu0 %v1801
    %2111 = vmatpush.bf16.msra.mxu0 %v1800
    %2112 = vmatpush.bf16.msra.mxu0 %v1799
    %2113 = vmatpush.bf16.msra.mxu0 %v1798
    %2114 = vmatpush.bf16.msra.mxu0 %v1797
    %2115 = vmatpush.bf16.msra.mxu0 %v1796
    %2116 = vmatpush.bf16.msra.mxu0 %v1795
    %2117 = vmatpush.bf16.msra.mxu0 %v1794
    %2118 = vmatmul.bf16.gmra.mxu0 %v925
    %v2119 = vpop.f32.mrf.mxu0
    %v2120 = vadd.f32 %v2107, %v2119
    %v2121 = vpop.f32.mrf.mxu0
    %2122 = vdwg.mxu0
    %2123 = vmatpush.bf16.msra.mxu0 %v1809
    %2124 = vmatpush.bf16.msra.mxu0 %v1808
    %2125 = vmatpush.bf16.msra.mxu0 %v1807
    %2126 = vmatpush.bf16.msra.mxu0 %v1806
    %2127 = vmatpush.bf16.msra.mxu0 %v1805
    %2128 = vmatpush.bf16.msra.mxu0 %v1804
    %2129 = vmatpush.bf16.msra.mxu0 %v1803
    %2130 = vmatpush.bf16.msra.mxu0 %v1802
    %2131 = vmatmul.bf16.gmra.mxu0 %v926
    %v2132 = vpop.f32.mrf.mxu0
    %v2133 = vadd.f32 %v2120, %v2132
    %v2134 = vpop.f32.mrf.mxu0
    %2135 = vdwg.mxu0
    %2136 = vmatpush.bf16.msra.mxu0 %v1817
    %2137 = vmatpush.bf16.msra.mxu0 %v1816
    %2138 = vmatpush.bf16.msra.mxu0 %v1815
    %2139 = vmatpush.bf16.msra.mxu0 %v1814
    %2140 = vmatpush.bf16.msra.mxu0 %v1813
    %2141 = vmatpush.bf16.msra.mxu0 %v1812
    %2142 = vmatpush.bf16.msra.mxu0 %v1811
    %2143 = vmatpush.bf16.msra.mxu0 %v1810
    %2144 = vmatmul.bf16.gmra.mxu0 %v927
    %v2145 = vpop.f32.mrf.mxu0
    %v2146 = vadd.f32 %v2133, %v2145
    %v2147 = vpop.f32.mrf.mxu0
    %2148 = vdwg.mxu0
    %2149 = vmatpush.bf16.msra.mxu0 %v1825
    %2150 = vmatpush.bf16.msra.mxu0 %v1824
    %2151 = vmatpush.bf16.msra.mxu0 %v1823
    %2152 = vmatpush.bf16.msra.mxu0 %v1822
    %2153 = vmatpush.bf16.msra.mxu0 %v1821
    %2154 = vmatpush.bf16.msra.mxu0 %v1820
    %2155 = vmatpush.bf16.msra.mxu0 %v1819
    %2156 = vmatpush.bf16.msra.mxu0 %v1818
    %2157 = vmatmul.bf16.gmra.mxu0 %v928
    %v2158 = vpop.f32.mrf.mxu0
    %v2159 = vadd.f32 %v2146, %v2158
    %v2160 = vpop.f32.mrf.mxu0
    %2161 = vdwg.mxu0
    %v2162 = vadd.f32 %v456, %v2159
    %v2163 = vsel %vm96, %v2162, 0.0
    %2164 = vadd.xlane.f32.xlu0 %v2163
    %v2165 = vpop.xlane.xlu0 %2164
    %v2166 = vmul.f32 %v2165, %v433
    %v2167 = vsub.f32 %v2162, %v2166
    %v2168 = vmul.f32 %v2167, %v2167
    %v2169 = vsel %vm96, %v2168, 0.0
    %2170 = vadd.xlane.f32.xlu0 %v2169
    %v2171 = vpop.xlane.xlu0 %2170
    %v2172 = vmul.f32 %v2171, %v433
    %v2173 = vadd.f32 %v2172, 1e-05
    %v2174 = vrsqrt.pop %v2173
    %v2175 = vmul.f32 %v2174, %v2173
    %v2176 = vmul.f32 %v2175, %v2174
    %v2177 = vmul.f32 0.5, %v2176
    %v2178 = vsub.f32 1.5, %v2177
    %v2179 = vmul.f32 %v2174, %v2178
    %vm2180 = vweird.f32 %v2173
    %vm2181 = vweird.f32 %v2174
    %vm2182 = vmor %vm2180, %vm2181
    %v2183 = vsel %vm2182, %v2174, %v2179
    %v2184 = vmul.f32 %v2167, %v2183
    %v2185 = vperm.slane %v74, 3
    %v2186 = vmul.f32 %v2184, %v2185
    %v2187 = vperm.slane %v74, 4
    %v2188 = vadd.f32 %v2186, %v2187
    %s2189 = scalar_lea.vmem %s6, 8
    %v2190 = vld [vmem:[%s2189] sm:$0xff]
    %v2191 = vpack.c.bf16 %v2188, %v2188
    %s2192 = scalar_lea.vmem %s3, 16
    %v2193 = vld [vmem:[%s2192] sm:$0xf]
    %v2194 = vld [vmem:[%s2192 + $0x4] sm:$0xf]
    %v2195 = vld [vmem:[%s2192 + $0x8] sm:$0xf]
    %v2196 = vld [vmem:[%s2192 + $0xc] sm:$0xf]
    %s2197 = scalar_lea.vmem %s4, 1
    %v2198 = vld [vmem:[%s2197] sm:$0x1]
    %v2200 = vperm.slane %v2198, 0
    %v2206 = vunpack.c.l.b16 %v2193
    %v2207 = vunpack.c.l.b16 %v2194
    %v2208 = vunpack.c.l.b16 %v2195
    %v2209 = vunpack.c.l.b16 %v2196
    %v2210 = vpack.c.b16 %v2207, %v2206
    %v2211 = vpack.c.b16 %v2209, %v2208
    %v2215 = vsel %vm96, %v2191, 0
    %2217 = vmatpush.bf16.msra.mxu0 0
    %2218 = vmatpush.bf16.msra.mxu0 0
    %2219 = vmatpush.bf16.msra.mxu0 0
    %2220 = vmatpush.bf16.msra.mxu0 0
    %2221 = vmatpush.bf16.msra.mxu0 0
    %2222 = vmatpush.bf16.msra.mxu0 0
    %2223 = vmatpush.bf16.msra.mxu0 %v2211
    %2224 = vmatpush.bf16.msra.mxu0 %v2210
    %2225 = vmatmul.bf16.gmra.mxu0 %v2215
    %v2226 = vpop.f32.mrf.mxu0
    %v2227 = vadd.f32 %v2200, %v2226
    %v2228 = vpop.f32.mrf.mxu0
    %2229 = vdwg.mxu0
    %2231 = vrot.lane.b32.xlu0 %v2227, 120
    %v2232 = vpop.permute.xlu0 %2231
    %2233 = vrot.lane.b32.xlu0 %v2227, 112
    %v2234 = vpop.permute.xlu0 %2233
    %2235 = vrot.lane.b32.xlu0 %v2227, 104
    %v2236 = vpop.permute.xlu0 %2235
    %2237 = vrot.lane.b32.xlu0 %v2227, 96
    %v2238 = vpop.permute.xlu0 %2237
    %v2239 = vsel %vm122, %v2227, 0
    %v2241 = vsel %vm122, %v2238, 0
    %2243 = vmatpush.xpose.msra.mxu0 0.0
    %2244 = vmatpush.xpose.msra.mxu0 0.0
    %2245 = vmatpush.xpose.msra.mxu0 0.0
    %2246 = vmatpush.xpose.msra.mxu0 0.0
    %2247 = vmatpush.xpose.msra.mxu0 0.0
    %2248 = vmatpush.xpose.msra.mxu0 0.0
    %2249 = vmatpush.xpose.msra.mxu0 0.0
    %2250 = vmatpush.xpose.msra.mxu0 0.0
    %2251 = vmatpush.xpose.msra.mxu0 0.0
    %2252 = vmatpush.xpose.msra.mxu0 0.0
    %2253 = vmatpush.xpose.msra.mxu0 0.0
    %2254 = vmatpush.xpose.msra.mxu0 0.0
    %2255 = vmatpush.xpose.msra.mxu0 0.0
    %2256 = vmatpush.xpose.msra.mxu0 0.0
    %2257 = vmatpush.xpose.msra.mxu0 0.0
    %2258 = vmatpush.xpose.msra.mxu0 %v2241
    %2259 = vmatmul.f32.gmra.mxu0 %v2239
    %v2260 = vpop.f32.mrf.mxu0
    %v2261 = vadd.f32 0.0, %v2260
    %2262 = vdwg.mxu0
    %2263 = vrot.lane.b32.xlu0 %v2232, 96
    %v2264 = vpop.permute.xlu0 %2263
    %v2265 = vsel %vm122, %v2232, 0
    %v2267 = vsel %vm122, %v2264, 0
    %2269 = vmatpush.xpose.msra.mxu0 0.0
    %2270 = vmatpush.xpose.msra.mxu0 0.0
    %2271 = vmatpush.xpose.msra.mxu0 0.0
    %2272 = vmatpush.xpose.msra.mxu0 0.0
    %2273 = vmatpush.xpose.msra.mxu0 0.0
    %2274 = vmatpush.xpose.msra.mxu0 0.0
    %2275 = vmatpush.xpose.msra.mxu0 0.0
    %2276 = vmatpush.xpose.msra.mxu0 0.0
    %2277 = vmatpush.xpose.msra.mxu0 0.0
    %2278 = vmatpush.xpose.msra.mxu0 0.0
    %2279 = vmatpush.xpose.msra.mxu0 0.0
    %2280 = vmatpush.xpose.msra.mxu0 0.0
    %2281 = vmatpush.xpose.msra.mxu0 0.0
    %2282 = vmatpush.xpose.msra.mxu0 0.0
    %2283 = vmatpush.xpose.msra.mxu0 0.0
    %2284 = vmatpush.xpose.msra.mxu0 %v2267
    %2285 = vmatmul.f32.gmra.mxu0 %v2265
    %v2286 = vpop.f32.mrf.mxu0
    %v2287 = vadd.f32 0.0, %v2286
    %2288 = vdwg.mxu0
    %2289 = vrot.lane.b32.xlu0 %v2234, 96
    %v2290 = vpop.permute.xlu0 %2289
    %v2291 = vsel %vm122, %v2234, 0
    %v2293 = vsel %vm122, %v2290, 0
    %2295 = vmatpush.xpose.msra.mxu0 0.0
    %2296 = vmatpush.xpose.msra.mxu0 0.0
    %2297 = vmatpush.xpose.msra.mxu0 0.0
    %2298 = vmatpush.xpose.msra.mxu0 0.0
    %2299 = vmatpush.xpose.msra.mxu0 0.0
    %2300 = vmatpush.xpose.msra.mxu0 0.0
    %2301 = vmatpush.xpose.msra.mxu0 0.0
    %2302 = vmatpush.xpose.msra.mxu0 0.0
    %2303 = vmatpush.xpose.msra.mxu0 0.0
    %2304 = vmatpush.xpose.msra.mxu0 0.0
    %2305 = vmatpush.xpose.msra.mxu0 0.0
    %2306 = vmatpush.xpose.msra.mxu0 0.0
    %2307 = vmatpush.xpose.msra.mxu0 0.0
    %2308 = vmatpush.xpose.msra.mxu0 0.0
    %2309 = vmatpush.xpose.msra.mxu0 0.0
    %2310 = vmatpush.xpose.msra.mxu0 %v2293
    %2311 = vmatmul.f32.gmra.mxu0 %v2291
    %v2312 = vpop.f32.mrf.mxu0
    %v2313 = vadd.f32 0.0, %v2312
    %2314 = vdwg.mxu0
    %2315 = vrot.lane.b32.xlu0 %v2236, 96
    %v2316 = vpop.permute.xlu0 %2315
    %v2317 = vsel %vm122, %v2236, 0
    %v2319 = vsel %vm122, %v2316, 0
    %2321 = vmatpush.xpose.msra.mxu0 0.0
    %2322 = vmatpush.xpose.msra.mxu0 0.0
    %2323 = vmatpush.xpose.msra.mxu0 0.0
    %2324 = vmatpush.xpose.msra.mxu0 0.0
    %2325 = vmatpush.xpose.msra.mxu0 0.0
    %2326 = vmatpush.xpose.msra.mxu0 0.0
    %2327 = vmatpush.xpose.msra.mxu0 0.0
    %2328 = vmatpush.xpose.msra.mxu0 0.0
    %2329 = vmatpush.xpose.msra.mxu0 0.0
    %2330 = vmatpush.xpose.msra.mxu0 0.0
    %2331 = vmatpush.xpose.msra.mxu0 0.0
    %2332 = vmatpush.xpose.msra.mxu0 0.0
    %2333 = vmatpush.xpose.msra.mxu0 0.0
    %2334 = vmatpush.xpose.msra.mxu0 0.0
    %2335 = vmatpush.xpose.msra.mxu0 0.0
    %2336 = vmatpush.xpose.msra.mxu0 %v2319
    %2337 = vmatmul.f32.gmra.mxu0 %v2317
    %v2338 = vpop.f32.mrf.mxu0
    %v2339 = vadd.f32 0.0, %v2338
    %2340 = vdwg.mxu0
    %v2341 = vsel %vm122, %v2261, -inf
    %2342 = vmax.xlane.f32.xlu0 %v2341
    %v2343 = vpop.xlane.xlu0 %2342
    %v2344 = vsel %vm122, %v2287, -inf
    %2345 = vmax.xlane.f32.xlu0 %v2344
    %v2346 = vpop.xlane.xlu0 %2345
    %v2347 = vsel %vm122, %v2313, -inf
    %2348 = vmax.xlane.f32.xlu0 %v2347
    %v2349 = vpop.xlane.xlu0 %2348
    %v2350 = vsel %vm122, %v2339, -inf
    %2351 = vmax.xlane.f32.xlu0 %v2350
    %v2352 = vpop.xlane.xlu0 %2351
    %v2353 = vsub.f32 %v2261, %v2343
    %v2354 = vsub.f32 %v2287, %v2346
    %v2355 = vsub.f32 %v2313, %v2349
    %v2356 = vsub.f32 %v2339, %v2352
    %v2357 = vmul.f32 %v2353, 1.442695
    %v2358 = vpow.pop %v2357
    %v2359 = vmul.f32 %v2354, 1.442695
    %v2360 = vpow.pop %v2359
    %v2361 = vmul.f32 %v2355, 1.442695
    %v2362 = vpow.pop %v2361
    %v2363 = vmul.f32 %v2356, 1.442695
    %v2364 = vpow.pop %v2363
    %v2365 = vsel %vm122, %v2358, 0.0
    %2366 = vadd.xlane.f32.xlu0 %v2365
    %v2367 = vpop.xlane.xlu0 %2366
    %v2368 = vsel %vm122, %v2360, 0.0
    %2369 = vadd.xlane.f32.xlu0 %v2368
    %v2370 = vpop.xlane.xlu0 %2369
    %v2371 = vsel %vm122, %v2362, 0.0
    %2372 = vadd.xlane.f32.xlu0 %v2371
    %v2373 = vpop.xlane.xlu0 %2372
    %v2374 = vsel %vm122, %v2364, 0.0
    %2375 = vadd.xlane.f32.xlu0 %v2374
    %v2376 = vpop.xlane.xlu0 %2375
    %v2377 = vrcp.pop %v2367
    %v2378 = vrcp.pop %v2370
    %v2379 = vrcp.pop %v2373
    %v2380 = vrcp.pop %v2376
    %v2381 = vmul.f32 %v2358, %v2377
    %v2382 = vmul.f32 %v2360, %v2378
    %v2383 = vmul.f32 %v2362, %v2379
    %v2384 = vmul.f32 %v2364, %v2380
    %2385 = vrot.lane.b32.xlu0 %v2227, 64
    %v2386 = vpop.permute.xlu0 %2385
    %v2389 = vsel %vm122, %v2381, 0
    %2391 = vmatpush.msra.mxu0 0.0
    %2392 = vmatpush.msra.mxu0 0.0
    %2393 = vmatpush.msra.mxu0 0.0
    %2394 = vmatpush.msra.mxu0 0.0
    %2395 = vmatpush.msra.mxu0 0.0
    %2396 = vmatpush.msra.mxu0 0.0
    %2397 = vmatpush.msra.mxu0 0.0
    %2398 = vmatpush.msra.mxu0 0.0
    %2399 = vmatpush.msra.mxu0 0.0
    %2400 = vmatpush.msra.mxu0 0.0
    %2401 = vmatpush.msra.mxu0 0.0
    %2402 = vmatpush.msra.mxu0 0.0
    %2403 = vmatpush.msra.mxu0 0.0
    %2404 = vmatpush.msra.mxu0 0.0
    %2405 = vmatpush.msra.mxu0 0.0
    %2406 = vmatpush.msra.mxu0 %v2386
    %2407 = vmatmul.f32.gmra.mxu0 %v2389
    %v2408 = vpop.f32.mrf.mxu0
    %v2409 = vadd.f32 0.0, %v2408
    %2410 = vdwg.mxu0
    %2411 = vrot.lane.b32.xlu0 %v2232, 64
    %v2412 = vpop.permute.xlu0 %2411
    %v2415 = vsel %vm122, %v2382, 0
    %2417 = vmatpush.msra.mxu0 0.0
    %2418 = vmatpush.msra.mxu0 0.0
    %2419 = vmatpush.msra.mxu0 0.0
    %2420 = vmatpush.msra.mxu0 0.0
    %2421 = vmatpush.msra.mxu0 0.0
    %2422 = vmatpush.msra.mxu0 0.0
    %2423 = vmatpush.msra.mxu0 0.0
    %2424 = vmatpush.msra.mxu0 0.0
    %2425 = vmatpush.msra.mxu0 0.0
    %2426 = vmatpush.msra.mxu0 0.0
    %2427 = vmatpush.msra.mxu0 0.0
    %2428 = vmatpush.msra.mxu0 0.0
    %2429 = vmatpush.msra.mxu0 0.0
    %2430 = vmatpush.msra.mxu0 0.0
    %2431 = vmatpush.msra.mxu0 0.0
    %2432 = vmatpush.msra.mxu0 %v2412
    %2433 = vmatmul.f32.gmra.mxu0 %v2415
    %v2434 = vpop.f32.mrf.mxu0
    %v2435 = vadd.f32 0.0, %v2434
    %2436 = vdwg.mxu0
    %2437 = vrot.lane.b32.xlu0 %v2234, 64
    %v2438 = vpop.permute.xlu0 %2437
    %v2441 = vsel %vm122, %v2383, 0
    %2443 = vmatpush.msra.mxu0 0.0
    %2444 = vmatpush.msra.mxu0 0.0
    %2445 = vmatpush.msra.mxu0 0.0
    %2446 = vmatpush.msra.mxu0 0.0
    %2447 = vmatpush.msra.mxu0 0.0
    %2448 = vmatpush.msra.mxu0 0.0
    %2449 = vmatpush.msra.mxu0 0.0
    %2450 = vmatpush.msra.mxu0 0.0
    %2451 = vmatpush.msra.mxu0 0.0
    %2452 = vmatpush.msra.mxu0 0.0
    %2453 = vmatpush.msra.mxu0 0.0
    %2454 = vmatpush.msra.mxu0 0.0
    %2455 = vmatpush.msra.mxu0 0.0
    %2456 = vmatpush.msra.mxu0 0.0
    %2457 = vmatpush.msra.mxu0 0.0
    %2458 = vmatpush.msra.mxu0 %v2438
    %2459 = vmatmul.f32.gmra.mxu0 %v2441
    %v2460 = vpop.f32.mrf.mxu0
    %v2461 = vadd.f32 0.0, %v2460
    %2462 = vdwg.mxu0
    %2463 = vrot.lane.b32.xlu0 %v2236, 64
    %v2464 = vpop.permute.xlu0 %2463
    %v2467 = vsel %vm122, %v2384, 0
    %2469 = vmatpush.msra.mxu0 0.0
    %2470 = vmatpush.msra.mxu0 0.0
    %2471 = vmatpush.msra.mxu0 0.0
    %2472 = vmatpush.msra.mxu0 0.0
    %2473 = vmatpush.msra.mxu0 0.0
    %2474 = vmatpush.msra.mxu0 0.0
    %2475 = vmatpush.msra.mxu0 0.0
    %2476 = vmatpush.msra.mxu0 0.0
    %2477 = vmatpush.msra.mxu0 0.0
    %2478 = vmatpush.msra.mxu0 0.0
    %2479 = vmatpush.msra.mxu0 0.0
    %2480 = vmatpush.msra.mxu0 0.0
    %2481 = vmatpush.msra.mxu0 0.0
    %2482 = vmatpush.msra.mxu0 0.0
    %2483 = vmatpush.msra.mxu0 0.0
    %2484 = vmatpush.msra.mxu0 %v2464
    %2485 = vmatmul.f32.gmra.mxu0 %v2467
    %v2486 = vpop.f32.mrf.mxu0
    %v2487 = vadd.f32 0.0, %v2486
    %2488 = vdwg.mxu0
    %2490 = vrot.lane.b32.xlu0 %v2435, 8
    %v2491 = vpop.permute.xlu0 %2490
    %2494 = vrot.lane.b32.xlu0 %v2461, 16
    %v2495 = vpop.permute.xlu0 %2494
    %2498 = vrot.lane.b32.xlu0 %v2487, 24
    %v2499 = vpop.permute.xlu0 %2498
    %v2501 = vsel %vm122, %v2409, %v2491
    %v2502 = vsel %vm50, %v2501, %v2495
    %v2503 = vsel %vm387, %v2502, %v2499
    %v2504 = vpack.c.bf16 %v2503, %v2503
    %s2505 = scalar_lea.vmem %s5, 16
    %v2506 = vld [vmem:[%s2505] sm:$0xf]
    %v2507 = vld [vmem:[%s2505 + $0x4] sm:$0xf]
    %v2508 = vld [vmem:[%s2505 + $0x8] sm:$0xf]
    %v2509 = vld [vmem:[%s2505 + $0xc] sm:$0xf]
    %v2510 = vperm.slane %v2190, 0
    %v2515 = vunpack.c.l.b16 %v2506
    %v2516 = vunpack.c.l.b16 %v2507
    %v2517 = vunpack.c.l.b16 %v2508
    %v2518 = vunpack.c.l.b16 %v2509
    %v2519 = vpack.c.b16 %v2516, %v2515
    %v2520 = vpack.c.b16 %v2518, %v2517
    %v2524 = vsel %vm96, %v2504, 0
    %2526 = vmatpush.bf16.msra.mxu0 0
    %2527 = vmatpush.bf16.msra.mxu0 0
    %2528 = vmatpush.bf16.msra.mxu0 0
    %2529 = vmatpush.bf16.msra.mxu0 0
    %2530 = vmatpush.bf16.msra.mxu0 0
    %2531 = vmatpush.bf16.msra.mxu0 0
    %2532 = vmatpush.bf16.msra.mxu0 %v2520
    %2533 = vmatpush.bf16.msra.mxu0 %v2519
    %2534 = vmatmul.bf16.gmra.mxu0 %v2524
    %v2535 = vpop.f32.mrf.mxu0
    %v2536 = vadd.f32 %v2510, %v2535
    %v2537 = vpop.f32.mrf.mxu0
    %2538 = vdwg.mxu0
    %v2539 = vadd.f32 %v2188, %v2536
    %v2540 = vsel %vm96, %v2539, 0.0
    %2541 = vadd.xlane.f32.xlu0 %v2540
    %v2542 = vpop.xlane.xlu0 %2541
    %v2543 = vmul.f32 %v2542, %v433
    %v2544 = vsub.f32 %v2539, %v2543
    %v2545 = vmul.f32 %v2544, %v2544
    %v2546 = vsel %vm96, %v2545, 0.0
    %2547 = vadd.xlane.f32.xlu0 %v2546
    %v2548 = vpop.xlane.xlu0 %2547
    %v2549 = vmul.f32 %v2548, %v433
    %v2550 = vadd.f32 %v2549, 1e-05
    %v2551 = vrsqrt.pop %v2550
    %v2552 = vmul.f32 %v2551, %v2550
    %v2553 = vmul.f32 %v2552, %v2551
    %v2554 = vmul.f32 0.5, %v2553
    %v2555 = vsub.f32 1.5, %v2554
    %v2556 = vmul.f32 %v2551, %v2555
    %vm2557 = vweird.f32 %v2550
    %vm2558 = vweird.f32 %v2551
    %vm2559 = vmor %vm2557, %vm2558
    %v2560 = vsel %vm2559, %v2551, %v2556
    %v2561 = vmul.f32 %v2544, %v2560
    %v2562 = vperm.slane %v2190, 1
    %v2563 = vmul.f32 %v2561, %v2562
    %v2564 = vperm.slane %v2190, 2
    %v2565 = vadd.f32 %v2563, %v2564
    %v2566 = vpack.c.bf16 %v2565, %v2565
    %s2567 = scalar_lea.vmem %s8, 256
    %v2568 = vld [vmem:[%s2567] sm:$0xff]
    %v2569 = vld [vmem:[%s2567 + $0x8] sm:$0xff]
    %v2570 = vld [vmem:[%s2567 + $0x10] sm:$0xff]
    %v2571 = vld [vmem:[%s2567 + $0x18] sm:$0xff]
    %v2572 = vld [vmem:[%s2567 + $0x20] sm:$0xff]
    %v2573 = vld [vmem:[%s2567 + $0x28] sm:$0xff]
    %v2574 = vld [vmem:[%s2567 + $0x30] sm:$0xff]
    %v2575 = vld [vmem:[%s2567 + $0x38] sm:$0xff]
    %v2576 = vld [vmem:[%s2567 + $0x40] sm:$0xff]
    %v2577 = vld [vmem:[%s2567 + $0x48] sm:$0xff]
    %v2578 = vld [vmem:[%s2567 + $0x50] sm:$0xff]
    %v2579 = vld [vmem:[%s2567 + $0x58] sm:$0xff]
    %v2580 = vld [vmem:[%s2567 + $0x60] sm:$0xff]
    %v2581 = vld [vmem:[%s2567 + $0x68] sm:$0xff]
    %v2582 = vld [vmem:[%s2567 + $0x70] sm:$0xff]
    %v2583 = vld [vmem:[%s2567 + $0x78] sm:$0xff]
    %v2584 = vld [vmem:[%s2567 + $0x80] sm:$0xff]
    %v2585 = vld [vmem:[%s2567 + $0x88] sm:$0xff]
    %v2586 = vld [vmem:[%s2567 + $0x90] sm:$0xff]
    %v2587 = vld [vmem:[%s2567 + $0x98] sm:$0xff]
    %v2588 = vld [vmem:[%s2567 + $0xa0] sm:$0xff]
    %v2589 = vld [vmem:[%s2567 + $0xa8] sm:$0xff]
    %v2590 = vld [vmem:[%s2567 + $0xb0] sm:$0xff]
    %v2591 = vld [vmem:[%s2567 + $0xb8] sm:$0xff]
    %v2592 = vld [vmem:[%s2567 + $0xc0] sm:$0xff]
    %v2593 = vld [vmem:[%s2567 + $0xc8] sm:$0xff]
    %v2594 = vld [vmem:[%s2567 + $0xd0] sm:$0xff]
    %v2595 = vld [vmem:[%s2567 + $0xd8] sm:$0xff]
    %v2596 = vld [vmem:[%s2567 + $0xe0] sm:$0xff]
    %v2597 = vld [vmem:[%s2567 + $0xe8] sm:$0xff]
    %v2598 = vld [vmem:[%s2567 + $0xf0] sm:$0xff]
    %v2599 = vld [vmem:[%s2567 + $0xf8] sm:$0xff]
    %s2600 = scalar_lea.vmem %s7, 16
    %v2601 = vld [vmem:[%s2600] sm:$0xff]
    %v2602 = vld [vmem:[%s2600 + $0x8] sm:$0xff]
    %v2605 = vperm.slane %v2601, 0
    %v2606 = vperm.slane %v2601, 1
    %v2607 = vperm.slane %v2601, 2
    %v2608 = vperm.slane %v2601, 3
    %v2609 = vperm.slane %v2601, 4
    %v2610 = vperm.slane %v2601, 5
    %v2611 = vperm.slane %v2601, 6
    %v2612 = vperm.slane %v2601, 7
    %v2613 = vperm.slane %v2602, 0
    %v2614 = vperm.slane %v2602, 1
    %v2615 = vperm.slane %v2602, 2
    %v2616 = vperm.slane %v2602, 3
    %v2617 = vperm.slane %v2602, 4
    %v2618 = vperm.slane %v2602, 5
    %v2619 = vperm.slane %v2602, 6
    %v2620 = vperm.slane %v2602, 7
    %v2669 = vunpack.c.l.b16 %v2568
    %v2670 = vunpack.c.h.b16 %v2568
    %v2671 = vunpack.c.l.b16 %v2569
    %v2672 = vunpack.c.h.b16 %v2569
    %v2673 = vunpack.c.l.b16 %v2570
    %v2674 = vunpack.c.h.b16 %v2570
    %v2675 = vunpack.c.l.b16 %v2571
    %v2676 = vunpack.c.h.b16 %v2571
    %v2677 = vunpack.c.l.b16 %v2572
    %v2678 = vunpack.c.h.b16 %v2572
    %v2679 = vunpack.c.l.b16 %v2573
    %v2680 = vunpack.c.h.b16 %v2573
    %v2681 = vunpack.c.l.b16 %v2574
    %v2682 = vunpack.c.h.b16 %v2574
    %v2683 = vunpack.c.l.b16 %v2575
    %v2684 = vunpack.c.h.b16 %v2575
    %v2685 = vunpack.c.l.b16 %v2576
    %v2686 = vunpack.c.h.b16 %v2576
    %v2687 = vunpack.c.l.b16 %v2577
    %v2688 = vunpack.c.h.b16 %v2577
    %v2689 = vunpack.c.l.b16 %v2578
    %v2690 = vunpack.c.h.b16 %v2578
    %v2691 = vunpack.c.l.b16 %v2579
    %v2692 = vunpack.c.h.b16 %v2579
    %v2693 = vunpack.c.l.b16 %v2580
    %v2694 = vunpack.c.h.b16 %v2580
    %v2695 = vunpack.c.l.b16 %v2581
    %v2696 = vunpack.c.h.b16 %v2581
    %v2697 = vunpack.c.l.b16 %v2582
    %v2698 = vunpack.c.h.b16 %v2582
    %v2699 = vunpack.c.l.b16 %v2583
    %v2700 = vunpack.c.h.b16 %v2583
    %v2701 = vunpack.c.l.b16 %v2584
    %v2702 = vunpack.c.h.b16 %v2584
    %v2703 = vunpack.c.l.b16 %v2585
    %v2704 = vunpack.c.h.b16 %v2585
    %v2705 = vunpack.c.l.b16 %v2586
    %v2706 = vunpack.c.h.b16 %v2586
    %v2707 = vunpack.c.l.b16 %v2587
    %v2708 = vunpack.c.h.b16 %v2587
    %v2709 = vunpack.c.l.b16 %v2588
    %v2710 = vunpack.c.h.b16 %v2588
    %v2711 = vunpack.c.l.b16 %v2589
    %v2712 = vunpack.c.h.b16 %v2589
    %v2713 = vunpack.c.l.b16 %v2590
    %v2714 = vunpack.c.h.b16 %v2590
    %v2715 = vunpack.c.l.b16 %v2591
    %v2716 = vunpack.c.h.b16 %v2591
    %v2717 = vunpack.c.l.b16 %v2592
    %v2718 = vunpack.c.h.b16 %v2592
    %v2719 = vunpack.c.l.b16 %v2593
    %v2720 = vunpack.c.h.b16 %v2593
    %v2721 = vunpack.c.l.b16 %v2594
    %v2722 = vunpack.c.h.b16 %v2594
    %v2723 = vunpack.c.l.b16 %v2595
    %v2724 = vunpack.c.h.b16 %v2595
    %v2725 = vunpack.c.l.b16 %v2596
    %v2726 = vunpack.c.h.b16 %v2596
    %v2727 = vunpack.c.l.b16 %v2597
    %v2728 = vunpack.c.h.b16 %v2597
    %v2729 = vunpack.c.l.b16 %v2598
    %v2730 = vunpack.c.h.b16 %v2598
    %v2731 = vunpack.c.l.b16 %v2599
    %v2732 = vunpack.c.h.b16 %v2599
    %v2733 = vpack.c.b16 %v2685, %v2669
    %v2734 = vpack.c.b16 %v2686, %v2670
    %v2735 = vpack.c.b16 %v2687, %v2671
    %v2736 = vpack.c.b16 %v2688, %v2672
    %v2737 = vpack.c.b16 %v2689, %v2673
    %v2738 = vpack.c.b16 %v2690, %v2674
    %v2739 = vpack.c.b16 %v2691, %v2675
    %v2740 = vpack.c.b16 %v2692, %v2676
    %v2741 = vpack.c.b16 %v2693, %v2677
    %v2742 = vpack.c.b16 %v2694, %v2678
    %v2743 = vpack.c.b16 %v2695, %v2679
    %v2744 = vpack.c.b16 %v2696, %v2680
    %v2745 = vpack.c.b16 %v2697, %v2681
    %v2746 = vpack.c.b16 %v2698, %v2682
    %v2747 = vpack.c.b16 %v2699, %v2683
    %v2748 = vpack.c.b16 %v2700, %v2684
    %v2749 = vpack.c.b16 %v2717, %v2701
    %v2750 = vpack.c.b16 %v2718, %v2702
    %v2751 = vpack.c.b16 %v2719, %v2703
    %v2752 = vpack.c.b16 %v2720, %v2704
    %v2753 = vpack.c.b16 %v2721, %v2705
    %v2754 = vpack.c.b16 %v2722, %v2706
    %v2755 = vpack.c.b16 %v2723, %v2707
    %v2756 = vpack.c.b16 %v2724, %v2708
    %v2757 = vpack.c.b16 %v2725, %v2709
    %v2758 = vpack.c.b16 %v2726, %v2710
    %v2759 = vpack.c.b16 %v2727, %v2711
    %v2760 = vpack.c.b16 %v2728, %v2712
    %v2761 = vpack.c.b16 %v2729, %v2713
    %v2762 = vpack.c.b16 %v2730, %v2714
    %v2763 = vpack.c.b16 %v2731, %v2715
    %v2764 = vpack.c.b16 %v2732, %v2716
    %v2798 = vsel %vm96, %v2566, 0
    %2800 = vmatpush.bf16.msra.mxu0 0
    %2801 = vmatpush.bf16.msra.mxu0 0
    %2802 = vmatpush.bf16.msra.mxu0 0
    %2803 = vmatpush.bf16.msra.mxu0 0
    %2804 = vmatpush.bf16.msra.mxu0 0
    %2805 = vmatpush.bf16.msra.mxu0 0
    %2806 = vmatpush.bf16.msra.mxu0 %v2749
    %2807 = vmatpush.bf16.msra.mxu0 %v2733
    %2808 = vmatmul.bf16.gmra.mxu0 %v2798
    %v2809 = vpop.f32.mrf.mxu0
    %v2810 = vadd.f32 %v2605, %v2809
    %v2811 = vpop.f32.mrf.mxu0
    %2812 = vdwg.mxu0
    %2813 = vmatpush.bf16.msra.mxu0 0
    %2814 = vmatpush.bf16.msra.mxu0 0
    %2815 = vmatpush.bf16.msra.mxu0 0
    %2816 = vmatpush.bf16.msra.mxu0 0
    %2817 = vmatpush.bf16.msra.mxu0 0
    %2818 = vmatpush.bf16.msra.mxu0 0
    %2819 = vmatpush.bf16.msra.mxu0 %v2750
    %2820 = vmatpush.bf16.msra.mxu0 %v2734
    %2821 = vmatmul.bf16.gmra.mxu0 %v2798
    %v2822 = vpop.f32.mrf.mxu0
    %v2823 = vadd.f32 %v2606, %v2822
    %v2824 = vpop.f32.mrf.mxu0
    %2825 = vdwg.mxu0
    %2826 = vmatpush.bf16.msra.mxu0 0
    %2827 = vmatpush.bf16.msra.mxu0 0
    %2828 = vmatpush.bf16.msra.mxu0 0
    %2829 = vmatpush.bf16.msra.mxu0 0
    %2830 = vmatpush.bf16.msra.mxu0 0
    %2831 = vmatpush.bf16.msra.mxu0 0
    %2832 = vmatpush.bf16.msra.mxu0 %v2751
    %2833 = vmatpush.bf16.msra.mxu0 %v2735
    %2834 = vmatmul.bf16.gmra.mxu0 %v2798
    %v2835 = vpop.f32.mrf.mxu0
    %v2836 = vadd.f32 %v2607, %v2835
    %v2837 = vpop.f32.mrf.mxu0
    %2838 = vdwg.mxu0
    %2839 = vmatpush.bf16.msra.mxu0 0
    %2840 = vmatpush.bf16.msra.mxu0 0
    %2841 = vmatpush.bf16.msra.mxu0 0
    %2842 = vmatpush.bf16.msra.mxu0 0
    %2843 = vmatpush.bf16.msra.mxu0 0
    %2844 = vmatpush.bf16.msra.mxu0 0
    %2845 = vmatpush.bf16.msra.mxu0 %v2752
    %2846 = vmatpush.bf16.msra.mxu0 %v2736
    %2847 = vmatmul.bf16.gmra.mxu0 %v2798
    %v2848 = vpop.f32.mrf.mxu0
    %v2849 = vadd.f32 %v2608, %v2848
    %v2850 = vpop.f32.mrf.mxu0
    %2851 = vdwg.mxu0
    %2852 = vmatpush.bf16.msra.mxu0 0
    %2853 = vmatpush.bf16.msra.mxu0 0
    %2854 = vmatpush.bf16.msra.mxu0 0
    %2855 = vmatpush.bf16.msra.mxu0 0
    %2856 = vmatpush.bf16.msra.mxu0 0
    %2857 = vmatpush.bf16.msra.mxu0 0
    %2858 = vmatpush.bf16.msra.mxu0 %v2753
    %2859 = vmatpush.bf16.msra.mxu0 %v2737
    %2860 = vmatmul.bf16.gmra.mxu0 %v2798
    %v2861 = vpop.f32.mrf.mxu0
    %v2862 = vadd.f32 %v2609, %v2861
    %v2863 = vpop.f32.mrf.mxu0
    %2864 = vdwg.mxu0
    %2865 = vmatpush.bf16.msra.mxu0 0
    %2866 = vmatpush.bf16.msra.mxu0 0
    %2867 = vmatpush.bf16.msra.mxu0 0
    %2868 = vmatpush.bf16.msra.mxu0 0
    %2869 = vmatpush.bf16.msra.mxu0 0
    %2870 = vmatpush.bf16.msra.mxu0 0
    %2871 = vmatpush.bf16.msra.mxu0 %v2754
    %2872 = vmatpush.bf16.msra.mxu0 %v2738
    %2873 = vmatmul.bf16.gmra.mxu0 %v2798
    %v2874 = vpop.f32.mrf.mxu0
    %v2875 = vadd.f32 %v2610, %v2874
    %v2876 = vpop.f32.mrf.mxu0
    %2877 = vdwg.mxu0
    %2878 = vmatpush.bf16.msra.mxu0 0
    %2879 = vmatpush.bf16.msra.mxu0 0
    %2880 = vmatpush.bf16.msra.mxu0 0
    %2881 = vmatpush.bf16.msra.mxu0 0
    %2882 = vmatpush.bf16.msra.mxu0 0
    %2883 = vmatpush.bf16.msra.mxu0 0
    %2884 = vmatpush.bf16.msra.mxu0 %v2755
    %2885 = vmatpush.bf16.msra.mxu0 %v2739
    %2886 = vmatmul.bf16.gmra.mxu0 %v2798
    %v2887 = vpop.f32.mrf.mxu0
    %v2888 = vadd.f32 %v2611, %v2887
    %v2889 = vpop.f32.mrf.mxu0
    %2890 = vdwg.mxu0
    %2891 = vmatpush.bf16.msra.mxu0 0
    %2892 = vmatpush.bf16.msra.mxu0 0
    %2893 = vmatpush.bf16.msra.mxu0 0
    %2894 = vmatpush.bf16.msra.mxu0 0
    %2895 = vmatpush.bf16.msra.mxu0 0
    %2896 = vmatpush.bf16.msra.mxu0 0
    %2897 = vmatpush.bf16.msra.mxu0 %v2756
    %2898 = vmatpush.bf16.msra.mxu0 %v2740
    %2899 = vmatmul.bf16.gmra.mxu0 %v2798
    %v2900 = vpop.f32.mrf.mxu0
    %v2901 = vadd.f32 %v2612, %v2900
    %v2902 = vpop.f32.mrf.mxu0
    %2903 = vdwg.mxu0
    %2904 = vmatpush.bf16.msra.mxu0 0
    %2905 = vmatpush.bf16.msra.mxu0 0
    %2906 = vmatpush.bf16.msra.mxu0 0
    %2907 = vmatpush.bf16.msra.mxu0 0
    %2908 = vmatpush.bf16.msra.mxu0 0
    %2909 = vmatpush.bf16.msra.mxu0 0
    %2910 = vmatpush.bf16.msra.mxu0 %v2757
    %2911 = vmatpush.bf16.msra.mxu0 %v2741
    %2912 = vmatmul.bf16.gmra.mxu0 %v2798
    %v2913 = vpop.f32.mrf.mxu0
    %v2914 = vadd.f32 %v2613, %v2913
    %v2915 = vpop.f32.mrf.mxu0
    %2916 = vdwg.mxu0
    %2917 = vmatpush.bf16.msra.mxu0 0
    %2918 = vmatpush.bf16.msra.mxu0 0
    %2919 = vmatpush.bf16.msra.mxu0 0
    %2920 = vmatpush.bf16.msra.mxu0 0
    %2921 = vmatpush.bf16.msra.mxu0 0
    %2922 = vmatpush.bf16.msra.mxu0 0
    %2923 = vmatpush.bf16.msra.mxu0 %v2758
    %2924 = vmatpush.bf16.msra.mxu0 %v2742
    %2925 = vmatmul.bf16.gmra.mxu0 %v2798
    %v2926 = vpop.f32.mrf.mxu0
    %v2927 = vadd.f32 %v2614, %v2926
    %v2928 = vpop.f32.mrf.mxu0
    %2929 = vdwg.mxu0
    %2930 = vmatpush.bf16.msra.mxu0 0
    %2931 = vmatpush.bf16.msra.mxu0 0
    %2932 = vmatpush.bf16.msra.mxu0 0
    %2933 = vmatpush.bf16.msra.mxu0 0
    %2934 = vmatpush.bf16.msra.mxu0 0
    %2935 = vmatpush.bf16.msra.mxu0 0
    %2936 = vmatpush.bf16.msra.mxu0 %v2759
    %2937 = vmatpush.bf16.msra.mxu0 %v2743
    %2938 = vmatmul.bf16.gmra.mxu0 %v2798
    %v2939 = vpop.f32.mrf.mxu0
    %v2940 = vadd.f32 %v2615, %v2939
    %v2941 = vpop.f32.mrf.mxu0
    %2942 = vdwg.mxu0
    %2943 = vmatpush.bf16.msra.mxu0 0
    %2944 = vmatpush.bf16.msra.mxu0 0
    %2945 = vmatpush.bf16.msra.mxu0 0
    %2946 = vmatpush.bf16.msra.mxu0 0
    %2947 = vmatpush.bf16.msra.mxu0 0
    %2948 = vmatpush.bf16.msra.mxu0 0
    %2949 = vmatpush.bf16.msra.mxu0 %v2760
    %2950 = vmatpush.bf16.msra.mxu0 %v2744
    %2951 = vmatmul.bf16.gmra.mxu0 %v2798
    %v2952 = vpop.f32.mrf.mxu0
    %v2953 = vadd.f32 %v2616, %v2952
    %v2954 = vpop.f32.mrf.mxu0
    %2955 = vdwg.mxu0
    %2956 = vmatpush.bf16.msra.mxu0 0
    %2957 = vmatpush.bf16.msra.mxu0 0
    %2958 = vmatpush.bf16.msra.mxu0 0
    %2959 = vmatpush.bf16.msra.mxu0 0
    %2960 = vmatpush.bf16.msra.mxu0 0
    %2961 = vmatpush.bf16.msra.mxu0 0
    %2962 = vmatpush.bf16.msra.mxu0 %v2761
    %2963 = vmatpush.bf16.msra.mxu0 %v2745
    %2964 = vmatmul.bf16.gmra.mxu0 %v2798
    %v2965 = vpop.f32.mrf.mxu0
    %v2966 = vadd.f32 %v2617, %v2965
    %v2967 = vpop.f32.mrf.mxu0
    %2968 = vdwg.mxu0
    %2969 = vmatpush.bf16.msra.mxu0 0
    %2970 = vmatpush.bf16.msra.mxu0 0
    %2971 = vmatpush.bf16.msra.mxu0 0
    %2972 = vmatpush.bf16.msra.mxu0 0
    %2973 = vmatpush.bf16.msra.mxu0 0
    %2974 = vmatpush.bf16.msra.mxu0 0
    %2975 = vmatpush.bf16.msra.mxu0 %v2762
    %2976 = vmatpush.bf16.msra.mxu0 %v2746
    %2977 = vmatmul.bf16.gmra.mxu0 %v2798
    %v2978 = vpop.f32.mrf.mxu0
    %v2979 = vadd.f32 %v2618, %v2978
    %v2980 = vpop.f32.mrf.mxu0
    %2981 = vdwg.mxu0
    %2982 = vmatpush.bf16.msra.mxu0 0
    %2983 = vmatpush.bf16.msra.mxu0 0
    %2984 = vmatpush.bf16.msra.mxu0 0
    %2985 = vmatpush.bf16.msra.mxu0 0
    %2986 = vmatpush.bf16.msra.mxu0 0
    %2987 = vmatpush.bf16.msra.mxu0 0
    %2988 = vmatpush.bf16.msra.mxu0 %v2763
    %2989 = vmatpush.bf16.msra.mxu0 %v2747
    %2990 = vmatmul.bf16.gmra.mxu0 %v2798
    %v2991 = vpop.f32.mrf.mxu0
    %v2992 = vadd.f32 %v2619, %v2991
    %v2993 = vpop.f32.mrf.mxu0
    %2994 = vdwg.mxu0
    %2995 = vmatpush.bf16.msra.mxu0 0
    %2996 = vmatpush.bf16.msra.mxu0 0
    %2997 = vmatpush.bf16.msra.mxu0 0
    %2998 = vmatpush.bf16.msra.mxu0 0
    %2999 = vmatpush.bf16.msra.mxu0 0
    %3000 = vmatpush.bf16.msra.mxu0 0
    %3001 = vmatpush.bf16.msra.mxu0 %v2764
    %3002 = vmatpush.bf16.msra.mxu0 %v2748
    %3003 = vmatmul.bf16.gmra.mxu0 %v2798
    %v3004 = vpop.f32.mrf.mxu0
    %v3005 = vadd.f32 %v2620, %v3004
    %v3006 = vpop.f32.mrf.mxu0
    %3007 = vdwg.mxu0
    %v3008 = vmax.f32 %v2810, 0.0
    %v3009 = vmax.f32 %v2823, 0.0
    %v3010 = vmax.f32 %v2836, 0.0
    %v3011 = vmax.f32 %v2849, 0.0
    %v3012 = vmax.f32 %v2862, 0.0
    %v3013 = vmax.f32 %v2875, 0.0
    %v3014 = vmax.f32 %v2888, 0.0
    %v3015 = vmax.f32 %v2901, 0.0
    %v3016 = vmax.f32 %v2914, 0.0
    %v3017 = vmax.f32 %v2927, 0.0
    %v3018 = vmax.f32 %v2940, 0.0
    %v3019 = vmax.f32 %v2953, 0.0
    %v3020 = vmax.f32 %v2966, 0.0
    %v3021 = vmax.f32 %v2979, 0.0
    %v3022 = vmax.f32 %v2992, 0.0
    %v3023 = vmax.f32 %v3005, 0.0
    %v3024 = vpack.c.bf16 %v3008, %v3008
    %v3025 = vpack.c.bf16 %v3009, %v3009
    %v3026 = vpack.c.bf16 %v3010, %v3010
    %v3027 = vpack.c.bf16 %v3011, %v3011
    %v3028 = vpack.c.bf16 %v3012, %v3012
    %v3029 = vpack.c.bf16 %v3013, %v3013
    %v3030 = vpack.c.bf16 %v3014, %v3014
    %v3031 = vpack.c.bf16 %v3015, %v3015
    %v3032 = vpack.c.bf16 %v3016, %v3016
    %v3033 = vpack.c.bf16 %v3017, %v3017
    %v3034 = vpack.c.bf16 %v3018, %v3018
    %v3035 = vpack.c.bf16 %v3019, %v3019
    %v3036 = vpack.c.bf16 %v3020, %v3020
    %v3037 = vpack.c.bf16 %v3021, %v3021
    %v3038 = vpack.c.bf16 %v3022, %v3022
    %v3039 = vpack.c.bf16 %v3023, %v3023
    %s3040 = scalar_lea.vmem %s9, 1024
    %v3041 = vld [vmem:[%s3040] sm:$0xf]
    %v3042 = vld [vmem:[%s3040 + $0x4] sm:$0xf]
    %v3043 = vld [vmem:[%s3040 + $0x8] sm:$0xf]
    %v3044 = vld [vmem:[%s3040 + $0xc] sm:$0xf]
    %v3045 = vld [vmem:[%s3040 + $0x10] sm:$0xf]
    %v3046 = vld [vmem:[%s3040 + $0x14] sm:$0xf]
    %v3047 = vld [vmem:[%s3040 + $0x18] sm:$0xf]
    %v3048 = vld [vmem:[%s3040 + $0x1c] sm:$0xf]
    %v3049 = vld [vmem:[%s3040 + $0x20] sm:$0xf]
    %v3050 = vld [vmem:[%s3040 + $0x24] sm:$0xf]
    %v3051 = vld [vmem:[%s3040 + $0x28] sm:$0xf]
    %v3052 = vld [vmem:[%s3040 + $0x2c] sm:$0xf]
    %v3053 = vld [vmem:[%s3040 + $0x30] sm:$0xf]
    %v3054 = vld [vmem:[%s3040 + $0x34] sm:$0xf]
    %v3055 = vld [vmem:[%s3040 + $0x38] sm:$0xf]
    %v3056 = vld [vmem:[%s3040 + $0x3c] sm:$0xf]
    %v3057 = vld [vmem:[%s3040 + $0x40] sm:$0xf]
    %v3058 = vld [vmem:[%s3040 + $0x44] sm:$0xf]
    %v3059 = vld [vmem:[%s3040 + $0x48] sm:$0xf]
    %v3060 = vld [vmem:[%s3040 + $0x4c] sm:$0xf]
    %v3061 = vld [vmem:[%s3040 + $0x50] sm:$0xf]
    %v3062 = vld [vmem:[%s3040 + $0x54] sm:$0xf]
    %v3063 = vld [vmem:[%s3040 + $0x58] sm:$0xf]
    %v3064 = vld [vmem:[%s3040 + $0x5c] sm:$0xf]
    %v3065 = vld [vmem:[%s3040 + $0x60] sm:$0xf]
    %v3066 = vld [vmem:[%s3040 + $0x64] sm:$0xf]
    %v3067 = vld [vmem:[%s3040 + $0x68] sm:$0xf]
    %v3068 = vld [vmem:[%s3040 + $0x6c] sm:$0xf]
    %v3069 = vld [vmem:[%s3040 + $0x70] sm:$0xf]
    %v3070 = vld [vmem:[%s3040 + $0x74] sm:$0xf]
    %v3071 = vld [vmem:[%s3040 + $0x78] sm:$0xf]
    %v3072 = vld [vmem:[%s3040 + $0x7c] sm:$0xf]
    %v3073 = vld [vmem:[%s3040 + $0x80] sm:$0xf]
    %v3074 = vld [vmem:[%s3040 + $0x84] sm:$0xf]
    %v3075 = vld [vmem:[%s3040 + $0x88] sm:$0xf]
    %v3076 = vld [vmem:[%s3040 + $0x8c] sm:$0xf]
    %v3077 = vld [vmem:[%s3040 + $0x90] sm:$0xf]
    %v3078 = vld [vmem:[%s3040 + $0x94] sm:$0xf]
    %v3079 = vld [vmem:[%s3040 + $0x98] sm:$0xf]
    %v3080 = vld [vmem:[%s3040 + $0x9c] sm:$0xf]
    %v3081 = vld [vmem:[%s3040 + $0xa0] sm:$0xf]
    %v3082 = vld [vmem:[%s3040 + $0xa4] sm:$0xf]
    %v3083 = vld [vmem:[%s3040 + $0xa8] sm:$0xf]
    %v3084 = vld [vmem:[%s3040 + $0xac] sm:$0xf]
    %v3085 = vld [vmem:[%s3040 + $0xb0] sm:$0xf]
    %v3086 = vld [vmem:[%s3040 + $0xb4] sm:$0xf]
    %v3087 = vld [vmem:[%s3040 + $0xb8] sm:$0xf]
    %v3088 = vld [vmem:[%s3040 + $0xbc] sm:$0xf]
    %v3089 = vld [vmem:[%s3040 + $0xc0] sm:$0xf]
    %v3090 = vld [vmem:[%s3040 + $0xc4] sm:$0xf]
    %v3091 = vld [vmem:[%s3040 + $0xc8] sm:$0xf]
    %v3092 = vld [vmem:[%s3040 + $0xcc] sm:$0xf]
    %v3093 = vld [vmem:[%s3040 + $0xd0] sm:$0xf]
    %v3094 = vld [vmem:[%s3040 + $0xd4] sm:$0xf]
    %v3095 = vld [vmem:[%s3040 + $0xd8] sm:$0xf]
    %v3096 = vld [vmem:[%s3040 + $0xdc] sm:$0xf]
    %v3097 = vld [vmem:[%s3040 + $0xe0] sm:$0xf]
    %v3098 = vld [vmem:[%s3040 + $0xe4] sm:$0xf]
    %v3099 = vld [vmem:[%s3040 + $0xe8] sm:$0xf]
    %v3100 = vld [vmem:[%s3040 + $0xec] sm:$0xf]
    %v3101 = vld [vmem:[%s3040 + $0xf0] sm:$0xf]
    %v3102 = vld [vmem:[%s3040 + $0xf4] sm:$0xf]
    %v3103 = vld [vmem:[%s3040 + $0xf8] sm:$0xf]
    %v3104 = vld [vmem:[%s3040 + $0xfc] sm:$0xf]
    %v3105 = vld [vmem:[%s3040 + $0x100] sm:$0xf]
    %v3106 = vld [vmem:[%s3040 + $0x104] sm:$0xf]
    %v3107 = vld [vmem:[%s3040 + $0x108] sm:$0xf]
    %v3108 = vld [vmem:[%s3040 + $0x10c] sm:$0xf]
    %v3109 = vld [vmem:[%s3040 + $0x110] sm:$0xf]
    %v3110 = vld [vmem:[%s3040 + $0x114] sm:$0xf]
    %v3111 = vld [vmem:[%s3040 + $0x118] sm:$0xf]
    %v3112 = vld [vmem:[%s3040 + $0x11c] sm:$0xf]
    %v3113 = vld [vmem:[%s3040 + $0x120] sm:$0xf]
    %v3114 = vld [vmem:[%s3040 + $0x124] sm:$0xf]
    %v3115 = vld [vmem:[%s3040 + $0x128] sm:$0xf]
    %v3116 = vld [vmem:[%s3040 + $0x12c] sm:$0xf]
    %v3117 = vld [vmem:[%s3040 + $0x130] sm:$0xf]
    %v3118 = vld [vmem:[%s3040 + $0x134] sm:$0xf]
    %v3119 = vld [vmem:[%s3040 + $0x138] sm:$0xf]
    %v3120 = vld [vmem:[%s3040 + $0x13c] sm:$0xf]
    %v3121 = vld [vmem:[%s3040 + $0x140] sm:$0xf]
    %v3122 = vld [vmem:[%s3040 + $0x144] sm:$0xf]
    %v3123 = vld [vmem:[%s3040 + $0x148] sm:$0xf]
    %v3124 = vld [vmem:[%s3040 + $0x14c] sm:$0xf]
    %v3125 = vld [vmem:[%s3040 + $0x150] sm:$0xf]
    %v3126 = vld [vmem:[%s3040 + $0x154] sm:$0xf]
    %v3127 = vld [vmem:[%s3040 + $0x158] sm:$0xf]
    %v3128 = vld [vmem:[%s3040 + $0x15c] sm:$0xf]
    %v3129 = vld [vmem:[%s3040 + $0x160] sm:$0xf]
    %v3130 = vld [vmem:[%s3040 + $0x164] sm:$0xf]
    %v3131 = vld [vmem:[%s3040 + $0x168] sm:$0xf]
    %v3132 = vld [vmem:[%s3040 + $0x16c] sm:$0xf]
    %v3133 = vld [vmem:[%s3040 + $0x170] sm:$0xf]
    %v3134 = vld [vmem:[%s3040 + $0x174] sm:$0xf]
    %v3135 = vld [vmem:[%s3040 + $0x178] sm:$0xf]
    %v3136 = vld [vmem:[%s3040 + $0x17c] sm:$0xf]
    %v3137 = vld [vmem:[%s3040 + $0x180] sm:$0xf]
    %v3138 = vld [vmem:[%s3040 + $0x184] sm:$0xf]
    %v3139 = vld [vmem:[%s3040 + $0x188] sm:$0xf]
    %v3140 = vld [vmem:[%s3040 + $0x18c] sm:$0xf]
    %v3141 = vld [vmem:[%s3040 + $0x190] sm:$0xf]
    %v3142 = vld [vmem:[%s3040 + $0x194] sm:$0xf]
    %v3143 = vld [vmem:[%s3040 + $0x198] sm:$0xf]
    %v3144 = vld [vmem:[%s3040 + $0x19c] sm:$0xf]
    %v3145 = vld [vmem:[%s3040 + $0x1a0] sm:$0xf]
    %v3146 = vld [vmem:[%s3040 + $0x1a4] sm:$0xf]
    %v3147 = vld [vmem:[%s3040 + $0x1a8] sm:$0xf]
    %v3148 = vld [vmem:[%s3040 + $0x1ac] sm:$0xf]
    %v3149 = vld [vmem:[%s3040 + $0x1b0] sm:$0xf]
    %v3150 = vld [vmem:[%s3040 + $0x1b4] sm:$0xf]
    %v3151 = vld [vmem:[%s3040 + $0x1b8] sm:$0xf]
    %v3152 = vld [vmem:[%s3040 + $0x1bc] sm:$0xf]
    %v3153 = vld [vmem:[%s3040 + $0x1c0] sm:$0xf]
    %v3154 = vld [vmem:[%s3040 + $0x1c4] sm:$0xf]
    %v3155 = vld [vmem:[%s3040 + $0x1c8] sm:$0xf]
    %v3156 = vld [vmem:[%s3040 + $0x1cc] sm:$0xf]
    %v3157 = vld [vmem:[%s3040 + $0x1d0] sm:$0xf]
    %v3158 = vld [vmem:[%s3040 + $0x1d4] sm:$0xf]
    %v3159 = vld [vmem:[%s3040 + $0x1d8] sm:$0xf]
    %v3160 = vld [vmem:[%s3040 + $0x1dc] sm:$0xf]
    %v3161 = vld [vmem:[%s3040 + $0x1e0] sm:$0xf]
    %v3162 = vld [vmem:[%s3040 + $0x1e4] sm:$0xf]
    %v3163 = vld [vmem:[%s3040 + $0x1e8] sm:$0xf]
    %v3164 = vld [vmem:[%s3040 + $0x1ec] sm:$0xf]
    %v3165 = vld [vmem:[%s3040 + $0x1f0] sm:$0xf]
    %v3166 = vld [vmem:[%s3040 + $0x1f4] sm:$0xf]
    %v3167 = vld [vmem:[%s3040 + $0x1f8] sm:$0xf]
    %v3168 = vld [vmem:[%s3040 + $0x1fc] sm:$0xf]
    %v3169 = vld [vmem:[%s3040 + $0x200] sm:$0xf]
    %v3170 = vld [vmem:[%s3040 + $0x204] sm:$0xf]
    %v3171 = vld [vmem:[%s3040 + $0x208] sm:$0xf]
    %v3172 = vld [vmem:[%s3040 + $0x20c] sm:$0xf]
    %v3173 = vld [vmem:[%s3040 + $0x210] sm:$0xf]
    %v3174 = vld [vmem:[%s3040 + $0x214] sm:$0xf]
    %v3175 = vld [vmem:[%s3040 + $0x218] sm:$0xf]
    %v3176 = vld [vmem:[%s3040 + $0x21c] sm:$0xf]
    %v3177 = vld [vmem:[%s3040 + $0x220] sm:$0xf]
    %v3178 = vld [vmem:[%s3040 + $0x224] sm:$0xf]
    %v3179 = vld [vmem:[%s3040 + $0x228] sm:$0xf]
    %v3180 = vld [vmem:[%s3040 + $0x22c] sm:$0xf]
    %v3181 = vld [vmem:[%s3040 + $0x230] sm:$0xf]
    %v3182 = vld [vmem:[%s3040 + $0x234] sm:$0xf]
    %v3183 = vld [vmem:[%s3040 + $0x238] sm:$0xf]
    %v3184 = vld [vmem:[%s3040 + $0x23c] sm:$0xf]
    %v3185 = vld [vmem:[%s3040 + $0x240] sm:$0xf]
    %v3186 = vld [vmem:[%s3040 + $0x244] sm:$0xf]
    %v3187 = vld [vmem:[%s3040 + $0x248] sm:$0xf]
    %v3188 = vld [vmem:[%s3040 + $0x24c] sm:$0xf]
    %v3189 = vld [vmem:[%s3040 + $0x250] sm:$0xf]
    %v3190 = vld [vmem:[%s3040 + $0x254] sm:$0xf]
    %v3191 = vld [vmem:[%s3040 + $0x258] sm:$0xf]
    %v3192 = vld [vmem:[%s3040 + $0x25c] sm:$0xf]
    %v3193 = vld [vmem:[%s3040 + $0x260] sm:$0xf]
    %v3194 = vld [vmem:[%s3040 + $0x264] sm:$0xf]
    %v3195 = vld [vmem:[%s3040 + $0x268] sm:$0xf]
    %v3196 = vld [vmem:[%s3040 + $0x26c] sm:$0xf]
    %v3197 = vld [vmem:[%s3040 + $0x270] sm:$0xf]
    %v3198 = vld [vmem:[%s3040 + $0x274] sm:$0xf]
    %v3199 = vld [vmem:[%s3040 + $0x278] sm:$0xf]
    %v3200 = vld [vmem:[%s3040 + $0x27c] sm:$0xf]
    %v3201 = vld [vmem:[%s3040 + $0x280] sm:$0xf]
    %v3202 = vld [vmem:[%s3040 + $0x284] sm:$0xf]
    %v3203 = vld [vmem:[%s3040 + $0x288] sm:$0xf]
    %v3204 = vld [vmem:[%s3040 + $0x28c] sm:$0xf]
    %v3205 = vld [vmem:[%s3040 + $0x290] sm:$0xf]
    %v3206 = vld [vmem:[%s3040 + $0x294] sm:$0xf]
    %v3207 = vld [vmem:[%s3040 + $0x298] sm:$0xf]
    %v3208 = vld [vmem:[%s3040 + $0x29c] sm:$0xf]
    %v3209 = vld [vmem:[%s3040 + $0x2a0] sm:$0xf]
    %v3210 = vld [vmem:[%s3040 + $0x2a4] sm:$0xf]
    %v3211 = vld [vmem:[%s3040 + $0x2a8] sm:$0xf]
    %v3212 = vld [vmem:[%s3040 + $0x2ac] sm:$0xf]
    %v3213 = vld [vmem:[%s3040 + $0x2b0] sm:$0xf]
    %v3214 = vld [vmem:[%s3040 + $0x2b4] sm:$0xf]
    %v3215 = vld [vmem:[%s3040 + $0x2b8] sm:$0xf]
    %v3216 = vld [vmem:[%s3040 + $0x2bc] sm:$0xf]
    %v3217 = vld [vmem:[%s3040 + $0x2c0] sm:$0xf]
    %v3218 = vld [vmem:[%s3040 + $0x2c4] sm:$0xf]
    %v3219 = vld [vmem:[%s3040 + $0x2c8] sm:$0xf]
    %v3220 = vld [vmem:[%s3040 + $0x2cc] sm:$0xf]
    %v3221 = vld [vmem:[%s3040 + $0x2d0] sm:$0xf]
    %v3222 = vld [vmem:[%s3040 + $0x2d4] sm:$0xf]
    %v3223 = vld [vmem:[%s3040 + $0x2d8] sm:$0xf]
    %v3224 = vld [vmem:[%s3040 + $0x2dc] sm:$0xf]
    %v3225 = vld [vmem:[%s3040 + $0x2e0] sm:$0xf]
    %v3226 = vld [vmem:[%s3040 + $0x2e4] sm:$0xf]
    %v3227 = vld [vmem:[%s3040 + $0x2e8] sm:$0xf]
    %v3228 = vld [vmem:[%s3040 + $0x2ec] sm:$0xf]
    %v3229 = vld [vmem:[%s3040 + $0x2f0] sm:$0xf]
    %v3230 = vld [vmem:[%s3040 + $0x2f4] sm:$0xf]
    %v3231 = vld [vmem:[%s3040 + $0x2f8] sm:$0xf]
    %v3232 = vld [vmem:[%s3040 + $0x2fc] sm:$0xf]
    %v3233 = vld [vmem:[%s3040 + $0x300] sm:$0xf]
    %v3234 = vld [vmem:[%s3040 + $0x304] sm:$0xf]
    %v3235 = vld [vmem:[%s3040 + $0x308] sm:$0xf]
    %v3236 = vld [vmem:[%s3040 + $0x30c] sm:$0xf]
    %v3237 = vld [vmem:[%s3040 + $0x310] sm:$0xf]
    %v3238 = vld [vmem:[%s3040 + $0x314] sm:$0xf]
    %v3239 = vld [vmem:[%s3040 + $0x318] sm:$0xf]
    %v3240 = vld [vmem:[%s3040 + $0x31c] sm:$0xf]
    %v3241 = vld [vmem:[%s3040 + $0x320] sm:$0xf]
    %v3242 = vld [vmem:[%s3040 + $0x324] sm:$0xf]
    %v3243 = vld [vmem:[%s3040 + $0x328] sm:$0xf]
    %v3244 = vld [vmem:[%s3040 + $0x32c] sm:$0xf]
    %v3245 = vld [vmem:[%s3040 + $0x330] sm:$0xf]
    %v3246 = vld [vmem:[%s3040 + $0x334] sm:$0xf]
    %v3247 = vld [vmem:[%s3040 + $0x338] sm:$0xf]
    %v3248 = vld [vmem:[%s3040 + $0x33c] sm:$0xf]
    %v3249 = vld [vmem:[%s3040 + $0x340] sm:$0xf]
    %v3250 = vld [vmem:[%s3040 + $0x344] sm:$0xf]
    %v3251 = vld [vmem:[%s3040 + $0x348] sm:$0xf]
    %v3252 = vld [vmem:[%s3040 + $0x34c] sm:$0xf]
    %v3253 = vld [vmem:[%s3040 + $0x350] sm:$0xf]
    %v3254 = vld [vmem:[%s3040 + $0x354] sm:$0xf]
    %v3255 = vld [vmem:[%s3040 + $0x358] sm:$0xf]
    %v3256 = vld [vmem:[%s3040 + $0x35c] sm:$0xf]
    %v3257 = vld [vmem:[%s3040 + $0x360] sm:$0xf]
    %v3258 = vld [vmem:[%s3040 + $0x364] sm:$0xf]
    %v3259 = vld [vmem:[%s3040 + $0x368] sm:$0xf]
    %v3260 = vld [vmem:[%s3040 + $0x36c] sm:$0xf]
    %v3261 = vld [vmem:[%s3040 + $0x370] sm:$0xf]
    %v3262 = vld [vmem:[%s3040 + $0x374] sm:$0xf]
    %v3263 = vld [vmem:[%s3040 + $0x378] sm:$0xf]
    %v3264 = vld [vmem:[%s3040 + $0x37c] sm:$0xf]
    %v3265 = vld [vmem:[%s3040 + $0x380] sm:$0xf]
    %v3266 = vld [vmem:[%s3040 + $0x384] sm:$0xf]
    %v3267 = vld [vmem:[%s3040 + $0x388] sm:$0xf]
    %v3268 = vld [vmem:[%s3040 + $0x38c] sm:$0xf]
    %v3269 = vld [vmem:[%s3040 + $0x390] sm:$0xf]
    %v3270 = vld [vmem:[%s3040 + $0x394] sm:$0xf]
    %v3271 = vld [vmem:[%s3040 + $0x398] sm:$0xf]
    %v3272 = vld [vmem:[%s3040 + $0x39c] sm:$0xf]
    %v3273 = vld [vmem:[%s3040 + $0x3a0] sm:$0xf]
    %v3274 = vld [vmem:[%s3040 + $0x3a4] sm:$0xf]
    %v3275 = vld [vmem:[%s3040 + $0x3a8] sm:$0xf]
    %v3276 = vld [vmem:[%s3040 + $0x3ac] sm:$0xf]
    %v3277 = vld [vmem:[%s3040 + $0x3b0] sm:$0xf]
    %v3278 = vld [vmem:[%s3040 + $0x3b4] sm:$0xf]
    %v3279 = vld [vmem:[%s3040 + $0x3b8] sm:$0xf]
    %v3280 = vld [vmem:[%s3040 + $0x3bc] sm:$0xf]
    %v3281 = vld [vmem:[%s3040 + $0x3c0] sm:$0xf]
    %v3282 = vld [vmem:[%s3040 + $0x3c4] sm:$0xf]
    %v3283 = vld [vmem:[%s3040 + $0x3c8] sm:$0xf]
    %v3284 = vld [vmem:[%s3040 + $0x3cc] sm:$0xf]
    %v3285 = vld [vmem:[%s3040 + $0x3d0] sm:$0xf]
    %v3286 = vld [vmem:[%s3040 + $0x3d4] sm:$0xf]
    %v3287 = vld [vmem:[%s3040 + $0x3d8] sm:$0xf]
    %v3288 = vld [vmem:[%s3040 + $0x3dc] sm:$0xf]
    %v3289 = vld [vmem:[%s3040 + $0x3e0] sm:$0xf]
    %v3290 = vld [vmem:[%s3040 + $0x3e4] sm:$0xf]
    %v3291 = vld [vmem:[%s3040 + $0x3e8] sm:$0xf]
    %v3292 = vld [vmem:[%s3040 + $0x3ec] sm:$0xf]
    %v3293 = vld [vmem:[%s3040 + $0x3f0] sm:$0xf]
    %v3294 = vld [vmem:[%s3040 + $0x3f4] sm:$0xf]
    %v3295 = vld [vmem:[%s3040 + $0x3f8] sm:$0xf]
    %v3296 = vld [vmem:[%s3040 + $0x3fc] sm:$0xf]
    %v3297 = vperm.slane %v2190, 5
    %v3554 = vunpack.c.l.b16 %v3041
    %v3555 = vunpack.c.l.b16 %v3042
    %v3556 = vunpack.c.l.b16 %v3043
    %v3557 = vunpack.c.l.b16 %v3044
    %v3558 = vunpack.c.l.b16 %v3045
    %v3559 = vunpack.c.l.b16 %v3046
    %v3560 = vunpack.c.l.b16 %v3047
    %v3561 = vunpack.c.l.b16 %v3048
    %v3562 = vunpack.c.l.b16 %v3049
    %v3563 = vunpack.c.l.b16 %v3050
    %v3564 = vunpack.c.l.b16 %v3051
    %v3565 = vunpack.c.l.b16 %v3052
    %v3566 = vunpack.c.l.b16 %v3053
    %v3567 = vunpack.c.l.b16 %v3054
    %v3568 = vunpack.c.l.b16 %v3055
    %v3569 = vunpack.c.l.b16 %v3056
    %v3570 = vunpack.c.l.b16 %v3057
    %v3571 = vunpack.c.l.b16 %v3058
    %v3572 = vunpack.c.l.b16 %v3059
    %v3573 = vunpack.c.l.b16 %v3060
    %v3574 = vunpack.c.l.b16 %v3061
    %v3575 = vunpack.c.l.b16 %v3062
    %v3576 = vunpack.c.l.b16 %v3063
    %v3577 = vunpack.c.l.b16 %v3064
    %v3578 = vunpack.c.l.b16 %v3065
    %v3579 = vunpack.c.l.b16 %v3066
    %v3580 = vunpack.c.l.b16 %v3067
    %v3581 = vunpack.c.l.b16 %v3068
    %v3582 = vunpack.c.l.b16 %v3069
    %v3583 = vunpack.c.l.b16 %v3070
    %v3584 = vunpack.c.l.b16 %v3071
    %v3585 = vunpack.c.l.b16 %v3072
    %v3586 = vunpack.c.l.b16 %v3073
    %v3587 = vunpack.c.l.b16 %v3074
    %v3588 = vunpack.c.l.b16 %v3075
    %v3589 = vunpack.c.l.b16 %v3076
    %v3590 = vunpack.c.l.b16 %v3077
    %v3591 = vunpack.c.l.b16 %v3078
    %v3592 = vunpack.c.l.b16 %v3079
    %v3593 = vunpack.c.l.b16 %v3080
    %v3594 = vunpack.c.l.b16 %v3081
    %v3595 = vunpack.c.l.b16 %v3082
    %v3596 = vunpack.c.l.b16 %v3083
    %v3597 = vunpack.c.l.b16 %v3084
    %v3598 = vunpack.c.l.b16 %v3085
    %v3599 = vunpack.c.l.b16 %v3086
    %v3600 = vunpack.c.l.b16 %v3087
    %v3601 = vunpack.c.l.b16 %v3088
    %v3602 = vunpack.c.l.b16 %v3089
    %v3603 = vunpack.c.l.b16 %v3090
    %v3604 = vunpack.c.l.b16 %v3091
    %v3605 = vunpack.c.l.b16 %v3092
    %v3606 = vunpack.c.l.b16 %v3093
    %v3607 = vunpack.c.l.b16 %v3094
    %v3608 = vunpack.c.l.b16 %v3095
    %v3609 = vunpack.c.l.b16 %v3096
    %v3610 = vunpack.c.l.b16 %v3097
    %v3611 = vunpack.c.l.b16 %v3098
    %v3612 = vunpack.c.l.b16 %v3099
    %v3613 = vunpack.c.l.b16 %v3100
    %v3614 = vunpack.c.l.b16 %v3101
    %v3615 = vunpack.c.l.b16 %v3102
    %v3616 = vunpack.c.l.b16 %v3103
    %v3617 = vunpack.c.l.b16 %v3104
    %v3618 = vunpack.c.l.b16 %v3105
    %v3619 = vunpack.c.l.b16 %v3106
    %v3620 = vunpack.c.l.b16 %v3107
    %v3621 = vunpack.c.l.b16 %v3108
    %v3622 = vunpack.c.l.b16 %v3109
    %v3623 = vunpack.c.l.b16 %v3110
    %v3624 = vunpack.c.l.b16 %v3111
    %v3625 = vunpack.c.l.b16 %v3112
    %v3626 = vunpack.c.l.b16 %v3113
    %v3627 = vunpack.c.l.b16 %v3114
    %v3628 = vunpack.c.l.b16 %v3115
    %v3629 = vunpack.c.l.b16 %v3116
    %v3630 = vunpack.c.l.b16 %v3117
    %v3631 = vunpack.c.l.b16 %v3118
    %v3632 = vunpack.c.l.b16 %v3119
    %v3633 = vunpack.c.l.b16 %v3120
    %v3634 = vunpack.c.l.b16 %v3121
    %v3635 = vunpack.c.l.b16 %v3122
    %v3636 = vunpack.c.l.b16 %v3123
    %v3637 = vunpack.c.l.b16 %v3124
    %v3638 = vunpack.c.l.b16 %v3125
    %v3639 = vunpack.c.l.b16 %v3126
    %v3640 = vunpack.c.l.b16 %v3127
    %v3641 = vunpack.c.l.b16 %v3128
    %v3642 = vunpack.c.l.b16 %v3129
    %v3643 = vunpack.c.l.b16 %v3130
    %v3644 = vunpack.c.l.b16 %v3131
    %v3645 = vunpack.c.l.b16 %v3132
    %v3646 = vunpack.c.l.b16 %v3133
    %v3647 = vunpack.c.l.b16 %v3134
    %v3648 = vunpack.c.l.b16 %v3135
    %v3649 = vunpack.c.l.b16 %v3136
    %v3650 = vunpack.c.l.b16 %v3137
    %v3651 = vunpack.c.l.b16 %v3138
    %v3652 = vunpack.c.l.b16 %v3139
    %v3653 = vunpack.c.l.b16 %v3140
    %v3654 = vunpack.c.l.b16 %v3141
    %v3655 = vunpack.c.l.b16 %v3142
    %v3656 = vunpack.c.l.b16 %v3143
    %v3657 = vunpack.c.l.b16 %v3144
    %v3658 = vunpack.c.l.b16 %v3145
    %v3659 = vunpack.c.l.b16 %v3146
    %v3660 = vunpack.c.l.b16 %v3147
    %v3661 = vunpack.c.l.b16 %v3148
    %v3662 = vunpack.c.l.b16 %v3149
    %v3663 = vunpack.c.l.b16 %v3150
    %v3664 = vunpack.c.l.b16 %v3151
    %v3665 = vunpack.c.l.b16 %v3152
    %v3666 = vunpack.c.l.b16 %v3153
    %v3667 = vunpack.c.l.b16 %v3154
    %v3668 = vunpack.c.l.b16 %v3155
    %v3669 = vunpack.c.l.b16 %v3156
    %v3670 = vunpack.c.l.b16 %v3157
    %v3671 = vunpack.c.l.b16 %v3158
    %v3672 = vunpack.c.l.b16 %v3159
    %v3673 = vunpack.c.l.b16 %v3160
    %v3674 = vunpack.c.l.b16 %v3161
    %v3675 = vunpack.c.l.b16 %v3162
    %v3676 = vunpack.c.l.b16 %v3163
    %v3677 = vunpack.c.l.b16 %v3164
    %v3678 = vunpack.c.l.b16 %v3165
    %v3679 = vunpack.c.l.b16 %v3166
    %v3680 = vunpack.c.l.b16 %v3167
    %v3681 = vunpack.c.l.b16 %v3168
    %v3682 = vunpack.c.l.b16 %v3169
    %v3683 = vunpack.c.l.b16 %v3170
    %v3684 = vunpack.c.l.b16 %v3171
    %v3685 = vunpack.c.l.b16 %v3172
    %v3686 = vunpack.c.l.b16 %v3173
    %v3687 = vunpack.c.l.b16 %v3174
    %v3688 = vunpack.c.l.b16 %v3175
    %v3689 = vunpack.c.l.b16 %v3176
    %v3690 = vunpack.c.l.b16 %v3177
    %v3691 = vunpack.c.l.b16 %v3178
    %v3692 = vunpack.c.l.b16 %v3179
    %v3693 = vunpack.c.l.b16 %v3180
    %v3694 = vunpack.c.l.b16 %v3181
    %v3695 = vunpack.c.l.b16 %v3182
    %v3696 = vunpack.c.l.b16 %v3183
    %v3697 = vunpack.c.l.b16 %v3184
    %v3698 = vunpack.c.l.b16 %v3185
    %v3699 = vunpack.c.l.b16 %v3186
    %v3700 = vunpack.c.l.b16 %v3187
    %v3701 = vunpack.c.l.b16 %v3188
    %v3702 = vunpack.c.l.b16 %v3189
    %v3703 = vunpack.c.l.b16 %v3190
    %v3704 = vunpack.c.l.b16 %v3191
    %v3705 = vunpack.c.l.b16 %v3192
    %v3706 = vunpack.c.l.b16 %v3193
    %v3707 = vunpack.c.l.b16 %v3194
    %v3708 = vunpack.c.l.b16 %v3195
    %v3709 = vunpack.c.l.b16 %v3196
    %v3710 = vunpack.c.l.b16 %v3197
    %v3711 = vunpack.c.l.b16 %v3198
    %v3712 = vunpack.c.l.b16 %v3199
    %v3713 = vunpack.c.l.b16 %v3200
    %v3714 = vunpack.c.l.b16 %v3201
    %v3715 = vunpack.c.l.b16 %v3202
    %v3716 = vunpack.c.l.b16 %v3203
    %v3717 = vunpack.c.l.b16 %v3204
    %v3718 = vunpack.c.l.b16 %v3205
    %v3719 = vunpack.c.l.b16 %v3206
    %v3720 = vunpack.c.l.b16 %v3207
    %v3721 = vunpack.c.l.b16 %v3208
    %v3722 = vunpack.c.l.b16 %v3209
    %v3723 = vunpack.c.l.b16 %v3210
    %v3724 = vunpack.c.l.b16 %v3211
    %v3725 = vunpack.c.l.b16 %v3212
    %v3726 = vunpack.c.l.b16 %v3213
    %v3727 = vunpack.c.l.b16 %v3214
    %v3728 = vunpack.c.l.b16 %v3215
    %v3729 = vunpack.c.l.b16 %v3216
    %v3730 = vunpack.c.l.b16 %v3217
    %v3731 = vunpack.c.l.b16 %v3218
    %v3732 = vunpack.c.l.b16 %v3219
    %v3733 = vunpack.c.l.b16 %v3220
    %v3734 = vunpack.c.l.b16 %v3221
    %v3735 = vunpack.c.l.b16 %v3222
    %v3736 = vunpack.c.l.b16 %v3223
    %v3737 = vunpack.c.l.b16 %v3224
    %v3738 = vunpack.c.l.b16 %v3225
    %v3739 = vunpack.c.l.b16 %v3226
    %v3740 = vunpack.c.l.b16 %v3227
    %v3741 = vunpack.c.l.b16 %v3228
    %v3742 = vunpack.c.l.b16 %v3229
    %v3743 = vunpack.c.l.b16 %v3230
    %v3744 = vunpack.c.l.b16 %v3231
    %v3745 = vunpack.c.l.b16 %v3232
    %v3746 = vunpack.c.l.b16 %v3233
    %v3747 = vunpack.c.l.b16 %v3234
    %v3748 = vunpack.c.l.b16 %v3235
    %v3749 = vunpack.c.l.b16 %v3236
    %v3750 = vunpack.c.l.b16 %v3237
    %v3751 = vunpack.c.l.b16 %v3238
    %v3752 = vunpack.c.l.b16 %v3239
    %v3753 = vunpack.c.l.b16 %v3240
    %v3754 = vunpack.c.l.b16 %v3241
    %v3755 = vunpack.c.l.b16 %v3242
    %v3756 = vunpack.c.l.b16 %v3243
    %v3757 = vunpack.c.l.b16 %v3244
    %v3758 = vunpack.c.l.b16 %v3245
    %v3759 = vunpack.c.l.b16 %v3246
    %v3760 = vunpack.c.l.b16 %v3247
    %v3761 = vunpack.c.l.b16 %v3248
    %v3762 = vunpack.c.l.b16 %v3249
    %v3763 = vunpack.c.l.b16 %v3250
    %v3764 = vunpack.c.l.b16 %v3251
    %v3765 = vunpack.c.l.b16 %v3252
    %v3766 = vunpack.c.l.b16 %v3253
    %v3767 = vunpack.c.l.b16 %v3254
    %v3768 = vunpack.c.l.b16 %v3255
    %v3769 = vunpack.c.l.b16 %v3256
    %v3770 = vunpack.c.l.b16 %v3257
    %v3771 = vunpack.c.l.b16 %v3258
    %v3772 = vunpack.c.l.b16 %v3259
    %v3773 = vunpack.c.l.b16 %v3260
    %v3774 = vunpack.c.l.b16 %v3261
    %v3775 = vunpack.c.l.b16 %v3262
    %v3776 = vunpack.c.l.b16 %v3263
    %v3777 = vunpack.c.l.b16 %v3264
    %v3778 = vunpack.c.l.b16 %v3265
    %v3779 = vunpack.c.l.b16 %v3266
    %v3780 = vunpack.c.l.b16 %v3267
    %v3781 = vunpack.c.l.b16 %v3268
    %v3782 = vunpack.c.l.b16 %v3269
    %v3783 = vunpack.c.l.b16 %v3270
    %v3784 = vunpack.c.l.b16 %v3271
    %v3785 = vunpack.c.l.b16 %v3272
    %v3786 = vunpack.c.l.b16 %v3273
    %v3787 = vunpack.c.l.b16 %v3274
    %v3788 = vunpack.c.l.b16 %v3275
    %v3789 = vunpack.c.l.b16 %v3276
    %v3790 = vunpack.c.l.b16 %v3277
    %v3791 = vunpack.c.l.b16 %v3278
    %v3792 = vunpack.c.l.b16 %v3279
    %v3793 = vunpack.c.l.b16 %v3280
    %v3794 = vunpack.c.l.b16 %v3281
    %v3795 = vunpack.c.l.b16 %v3282
    %v3796 = vunpack.c.l.b16 %v3283
    %v3797 = vunpack.c.l.b16 %v3284
    %v3798 = vunpack.c.l.b16 %v3285
    %v3799 = vunpack.c.l.b16 %v3286
    %v3800 = vunpack.c.l.b16 %v3287
    %v3801 = vunpack.c.l.b16 %v3288
    %v3802 = vunpack.c.l.b16 %v3289
    %v3803 = vunpack.c.l.b16 %v3290
    %v3804 = vunpack.c.l.b16 %v3291
    %v3805 = vunpack.c.l.b16 %v3292
    %v3806 = vunpack.c.l.b16 %v3293
    %v3807 = vunpack.c.l.b16 %v3294
    %v3808 = vunpack.c.l.b16 %v3295
    %v3809 = vunpack.c.l.b16 %v3296
    %v3810 = vpack.c.b16 %v3555, %v3554
    %v3811 = vpack.c.b16 %v3557, %v3556
    %v3812 = vpack.c.b16 %v3559, %v3558
    %v3813 = vpack.c.b16 %v3561, %v3560
    %v3814 = vpack.c.b16 %v3563, %v3562
    %v3815 = vpack.c.b16 %v3565, %v3564
    %v3816 = vpack.c.b16 %v3567, %v3566
    %v3817 = vpack.c.b16 %v3569, %v3568
    %v3818 = vpack.c.b16 %v3571, %v3570
    %v3819 = vpack.c.b16 %v3573, %v3572
    %v3820 = vpack.c.b16 %v3575, %v3574
    %v3821 = vpack.c.b16 %v3577, %v3576
    %v3822 = vpack.c.b16 %v3579, %v3578
    %v3823 = vpack.c.b16 %v3581, %v3580
    %v3824 = vpack.c.b16 %v3583, %v3582
    %v3825 = vpack.c.b16 %v3585, %v3584
    %v3826 = vpack.c.b16 %v3587, %v3586
    %v3827 = vpack.c.b16 %v3589, %v3588
    %v3828 = vpack.c.b16 %v3591, %v3590
    %v3829 = vpack.c.b16 %v3593, %v3592
    %v3830 = vpack.c.b16 %v3595, %v3594
    %v3831 = vpack.c.b16 %v3597, %v3596
    %v3832 = vpack.c.b16 %v3599, %v3598
    %v3833 = vpack.c.b16 %v3601, %v3600
    %v3834 = vpack.c.b16 %v3603, %v3602
    %v3835 = vpack.c.b16 %v3605, %v3604
    %v3836 = vpack.c.b16 %v3607, %v3606
    %v3837 = vpack.c.b16 %v3609, %v3608
    %v3838 = vpack.c.b16 %v3611, %v3610
    %v3839 = vpack.c.b16 %v3613, %v3612
    %v3840 = vpack.c.b16 %v3615, %v3614
    %v3841 = vpack.c.b16 %v3617, %v3616
    %v3842 = vpack.c.b16 %v3619, %v3618
    %v3843 = vpack.c.b16 %v3621, %v3620
    %v3844 = vpack.c.b16 %v3623, %v3622
    %v3845 = vpack.c.b16 %v3625, %v3624
    %v3846 = vpack.c.b16 %v3627, %v3626
    %v3847 = vpack.c.b16 %v3629, %v3628
    %v3848 = vpack.c.b16 %v3631, %v3630
    %v3849 = vpack.c.b16 %v3633, %v3632
    %v3850 = vpack.c.b16 %v3635, %v3634
    %v3851 = vpack.c.b16 %v3637, %v3636
    %v3852 = vpack.c.b16 %v3639, %v3638
    %v3853 = vpack.c.b16 %v3641, %v3640
    %v3854 = vpack.c.b16 %v3643, %v3642
    %v3855 = vpack.c.b16 %v3645, %v3644
    %v3856 = vpack.c.b16 %v3647, %v3646
    %v3857 = vpack.c.b16 %v3649, %v3648
    %v3858 = vpack.c.b16 %v3651, %v3650
    %v3859 = vpack.c.b16 %v3653, %v3652
    %v3860 = vpack.c.b16 %v3655, %v3654
    %v3861 = vpack.c.b16 %v3657, %v3656
    %v3862 = vpack.c.b16 %v3659, %v3658
    %v3863 = vpack.c.b16 %v3661, %v3660
    %v3864 = vpack.c.b16 %v3663, %v3662
    %v3865 = vpack.c.b16 %v3665, %v3664
    %v3866 = vpack.c.b16 %v3667, %v3666
    %v3867 = vpack.c.b16 %v3669, %v3668
    %v3868 = vpack.c.b16 %v3671, %v3670
    %v3869 = vpack.c.b16 %v3673, %v3672
    %v3870 = vpack.c.b16 %v3675, %v3674
    %v3871 = vpack.c.b16 %v3677, %v3676
    %v3872 = vpack.c.b16 %v3679, %v3678
    %v3873 = vpack.c.b16 %v3681, %v3680
    %v3874 = vpack.c.b16 %v3683, %v3682
    %v3875 = vpack.c.b16 %v3685, %v3684
    %v3876 = vpack.c.b16 %v3687, %v3686
    %v3877 = vpack.c.b16 %v3689, %v3688
    %v3878 = vpack.c.b16 %v3691, %v3690
    %v3879 = vpack.c.b16 %v3693, %v3692
    %v3880 = vpack.c.b16 %v3695, %v3694
    %v3881 = vpack.c.b16 %v3697, %v3696
    %v3882 = vpack.c.b16 %v3699, %v3698
    %v3883 = vpack.c.b16 %v3701, %v3700
    %v3884 = vpack.c.b16 %v3703, %v3702
    %v3885 = vpack.c.b16 %v3705, %v3704
    %v3886 = vpack.c.b16 %v3707, %v3706
    %v3887 = vpack.c.b16 %v3709, %v3708
    %v3888 = vpack.c.b16 %v3711, %v3710
    %v3889 = vpack.c.b16 %v3713, %v3712
    %v3890 = vpack.c.b16 %v3715, %v3714
    %v3891 = vpack.c.b16 %v3717, %v3716
    %v3892 = vpack.c.b16 %v3719, %v3718
    %v3893 = vpack.c.b16 %v3721, %v3720
    %v3894 = vpack.c.b16 %v3723, %v3722
    %v3895 = vpack.c.b16 %v3725, %v3724
    %v3896 = vpack.c.b16 %v3727, %v3726
    %v3897 = vpack.c.b16 %v3729, %v3728
    %v3898 = vpack.c.b16 %v3731, %v3730
    %v3899 = vpack.c.b16 %v3733, %v3732
    %v3900 = vpack.c.b16 %v3735, %v3734
    %v3901 = vpack.c.b16 %v3737, %v3736
    %v3902 = vpack.c.b16 %v3739, %v3738
    %v3903 = vpack.c.b16 %v3741, %v3740
    %v3904 = vpack.c.b16 %v3743, %v3742
    %v3905 = vpack.c.b16 %v3745, %v3744
    %v3906 = vpack.c.b16 %v3747, %v3746
    %v3907 = vpack.c.b16 %v3749, %v3748
    %v3908 = vpack.c.b16 %v3751, %v3750
    %v3909 = vpack.c.b16 %v3753, %v3752
    %v3910 = vpack.c.b16 %v3755, %v3754
    %v3911 = vpack.c.b16 %v3757, %v3756
    %v3912 = vpack.c.b16 %v3759, %v3758
    %v3913 = vpack.c.b16 %v3761, %v3760
    %v3914 = vpack.c.b16 %v3763, %v3762
    %v3915 = vpack.c.b16 %v3765, %v3764
    %v3916 = vpack.c.b16 %v3767, %v3766
    %v3917 = vpack.c.b16 %v3769, %v3768
    %v3918 = vpack.c.b16 %v3771, %v3770
    %v3919 = vpack.c.b16 %v3773, %v3772
    %v3920 = vpack.c.b16 %v3775, %v3774
    %v3921 = vpack.c.b16 %v3777, %v3776
    %v3922 = vpack.c.b16 %v3779, %v3778
    %v3923 = vpack.c.b16 %v3781, %v3780
    %v3924 = vpack.c.b16 %v3783, %v3782
    %v3925 = vpack.c.b16 %v3785, %v3784
    %v3926 = vpack.c.b16 %v3787, %v3786
    %v3927 = vpack.c.b16 %v3789, %v3788
    %v3928 = vpack.c.b16 %v3791, %v3790
    %v3929 = vpack.c.b16 %v3793, %v3792
    %v3930 = vpack.c.b16 %v3795, %v3794
    %v3931 = vpack.c.b16 %v3797, %v3796
    %v3932 = vpack.c.b16 %v3799, %v3798
    %v3933 = vpack.c.b16 %v3801, %v3800
    %v3934 = vpack.c.b16 %v3803, %v3802
    %v3935 = vpack.c.b16 %v3805, %v3804
    %v3936 = vpack.c.b16 %v3807, %v3806
    %v3937 = vpack.c.b16 %v3809, %v3808
    %4066 = vmatpush.bf16.msra.mxu0 %v3817
    %4067 = vmatpush.bf16.msra.mxu0 %v3816
    %4068 = vmatpush.bf16.msra.mxu0 %v3815
    %4069 = vmatpush.bf16.msra.mxu0 %v3814
    %4070 = vmatpush.bf16.msra.mxu0 %v3813
    %4071 = vmatpush.bf16.msra.mxu0 %v3812
    %4072 = vmatpush.bf16.msra.mxu0 %v3811
    %4073 = vmatpush.bf16.msra.mxu0 %v3810
    %4074 = vmatmul.bf16.gmra.mxu0 %v3024
    %v4075 = vpop.f32.mrf.mxu0
    %v4076 = vadd.f32 %v3297, %v4075
    %v4077 = vpop.f32.mrf.mxu0
    %4078 = vdwg.mxu0
    %4079 = vmatpush.bf16.msra.mxu0 %v3825
    %4080 = vmatpush.bf16.msra.mxu0 %v3824
    %4081 = vmatpush.bf16.msra.mxu0 %v3823
    %4082 = vmatpush.bf16.msra.mxu0 %v3822
    %4083 = vmatpush.bf16.msra.mxu0 %v3821
    %4084 = vmatpush.bf16.msra.mxu0 %v3820
    %4085 = vmatpush.bf16.msra.mxu0 %v3819
    %4086 = vmatpush.bf16.msra.mxu0 %v3818
    %4087 = vmatmul.bf16.gmra.mxu0 %v3025
    %v4088 = vpop.f32.mrf.mxu0
    %v4089 = vadd.f32 %v4076, %v4088
    %v4090 = vpop.f32.mrf.mxu0
    %4091 = vdwg.mxu0
    %4092 = vmatpush.bf16.msra.mxu0 %v3833
    %4093 = vmatpush.bf16.msra.mxu0 %v3832
    %4094 = vmatpush.bf16.msra.mxu0 %v3831
    %4095 = vmatpush.bf16.msra.mxu0 %v3830
    %4096 = vmatpush.bf16.msra.mxu0 %v3829
    %4097 = vmatpush.bf16.msra.mxu0 %v3828
    %4098 = vmatpush.bf16.msra.mxu0 %v3827
    %4099 = vmatpush.bf16.msra.mxu0 %v3826
    %4100 = vmatmul.bf16.gmra.mxu0 %v3026
    %v4101 = vpop.f32.mrf.mxu0
    %v4102 = vadd.f32 %v4089, %v4101
    %v4103 = vpop.f32.mrf.mxu0
    %4104 = vdwg.mxu0
    %4105 = vmatpush.bf16.msra.mxu0 %v3841
    %4106 = vmatpush.bf16.msra.mxu0 %v3840
    %4107 = vmatpush.bf16.msra.mxu0 %v3839
    %4108 = vmatpush.bf16.msra.mxu0 %v3838
    %4109 = vmatpush.bf16.msra.mxu0 %v3837
    %4110 = vmatpush.bf16.msra.mxu0 %v3836
    %4111 = vmatpush.bf16.msra.mxu0 %v3835
    %4112 = vmatpush.bf16.msra.mxu0 %v3834
    %4113 = vmatmul.bf16.gmra.mxu0 %v3027
    %v4114 = vpop.f32.mrf.mxu0
    %v4115 = vadd.f32 %v4102, %v4114
    %v4116 = vpop.f32.mrf.mxu0
    %4117 = vdwg.mxu0
    %4118 = vmatpush.bf16.msra.mxu0 %v3849
    %4119 = vmatpush.bf16.msra.mxu0 %v3848
    %4120 = vmatpush.bf16.msra.mxu0 %v3847
    %4121 = vmatpush.bf16.msra.mxu0 %v3846
    %4122 = vmatpush.bf16.msra.mxu0 %v3845
    %4123 = vmatpush.bf16.msra.mxu0 %v3844
    %4124 = vmatpush.bf16.msra.mxu0 %v3843
    %4125 = vmatpush.bf16.msra.mxu0 %v3842
    %4126 = vmatmul.bf16.gmra.mxu0 %v3028
    %v4127 = vpop.f32.mrf.mxu0
    %v4128 = vadd.f32 %v4115, %v4127
    %v4129 = vpop.f32.mrf.mxu0
    %4130 = vdwg.mxu0
    %4131 = vmatpush.bf16.msra.mxu0 %v3857
    %4132 = vmatpush.bf16.msra.mxu0 %v3856
    %4133 = vmatpush.bf16.msra.mxu0 %v3855
    %4134 = vmatpush.bf16.msra.mxu0 %v3854
    %4135 = vmatpush.bf16.msra.mxu0 %v3853
    %4136 = vmatpush.bf16.msra.mxu0 %v3852
    %4137 = vmatpush.bf16.msra.mxu0 %v3851
    %4138 = vmatpush.bf16.msra.mxu0 %v3850
    %4139 = vmatmul.bf16.gmra.mxu0 %v3029
    %v4140 = vpop.f32.mrf.mxu0
    %v4141 = vadd.f32 %v4128, %v4140
    %v4142 = vpop.f32.mrf.mxu0
    %4143 = vdwg.mxu0
    %4144 = vmatpush.bf16.msra.mxu0 %v3865
    %4145 = vmatpush.bf16.msra.mxu0 %v3864
    %4146 = vmatpush.bf16.msra.mxu0 %v3863
    %4147 = vmatpush.bf16.msra.mxu0 %v3862
    %4148 = vmatpush.bf16.msra.mxu0 %v3861
    %4149 = vmatpush.bf16.msra.mxu0 %v3860
    %4150 = vmatpush.bf16.msra.mxu0 %v3859
    %4151 = vmatpush.bf16.msra.mxu0 %v3858
    %4152 = vmatmul.bf16.gmra.mxu0 %v3030
    %v4153 = vpop.f32.mrf.mxu0
    %v4154 = vadd.f32 %v4141, %v4153
    %v4155 = vpop.f32.mrf.mxu0
    %4156 = vdwg.mxu0
    %4157 = vmatpush.bf16.msra.mxu0 %v3873
    %4158 = vmatpush.bf16.msra.mxu0 %v3872
    %4159 = vmatpush.bf16.msra.mxu0 %v3871
    %4160 = vmatpush.bf16.msra.mxu0 %v3870
    %4161 = vmatpush.bf16.msra.mxu0 %v3869
    %4162 = vmatpush.bf16.msra.mxu0 %v3868
    %4163 = vmatpush.bf16.msra.mxu0 %v3867
    %4164 = vmatpush.bf16.msra.mxu0 %v3866
    %4165 = vmatmul.bf16.gmra.mxu0 %v3031
    %v4166 = vpop.f32.mrf.mxu0
    %v4167 = vadd.f32 %v4154, %v4166
    %v4168 = vpop.f32.mrf.mxu0
    %4169 = vdwg.mxu0
    %4170 = vmatpush.bf16.msra.mxu0 %v3881
    %4171 = vmatpush.bf16.msra.mxu0 %v3880
    %4172 = vmatpush.bf16.msra.mxu0 %v3879
    %4173 = vmatpush.bf16.msra.mxu0 %v3878
    %4174 = vmatpush.bf16.msra.mxu0 %v3877
    %4175 = vmatpush.bf16.msra.mxu0 %v3876
    %4176 = vmatpush.bf16.msra.mxu0 %v3875
    %4177 = vmatpush.bf16.msra.mxu0 %v3874
    %4178 = vmatmul.bf16.gmra.mxu0 %v3032
    %v4179 = vpop.f32.mrf.mxu0
    %v4180 = vadd.f32 %v4167, %v4179
    %v4181 = vpop.f32.mrf.mxu0
    %4182 = vdwg.mxu0
    %4183 = vmatpush.bf16.msra.mxu0 %v3889
    %4184 = vmatpush.bf16.msra.mxu0 %v3888
    %4185 = vmatpush.bf16.msra.mxu0 %v3887
    %4186 = vmatpush.bf16.msra.mxu0 %v3886
    %4187 = vmatpush.bf16.msra.mxu0 %v3885
    %4188 = vmatpush.bf16.msra.mxu0 %v3884
    %4189 = vmatpush.bf16.msra.mxu0 %v3883
    %4190 = vmatpush.bf16.msra.mxu0 %v3882
    %4191 = vmatmul.bf16.gmra.mxu0 %v3033
    %v4192 = vpop.f32.mrf.mxu0
    %v4193 = vadd.f32 %v4180, %v4192
    %v4194 = vpop.f32.mrf.mxu0
    %4195 = vdwg.mxu0
    %4196 = vmatpush.bf16.msra.mxu0 %v3897
    %4197 = vmatpush.bf16.msra.mxu0 %v3896
    %4198 = vmatpush.bf16.msra.mxu0 %v3895
    %4199 = vmatpush.bf16.msra.mxu0 %v3894
    %4200 = vmatpush.bf16.msra.mxu0 %v3893
    %4201 = vmatpush.bf16.msra.mxu0 %v3892
    %4202 = vmatpush.bf16.msra.mxu0 %v3891
    %4203 = vmatpush.bf16.msra.mxu0 %v3890
    %4204 = vmatmul.bf16.gmra.mxu0 %v3034
    %v4205 = vpop.f32.mrf.mxu0
    %v4206 = vadd.f32 %v4193, %v4205
    %v4207 = vpop.f32.mrf.mxu0
    %4208 = vdwg.mxu0
    %4209 = vmatpush.bf16.msra.mxu0 %v3905
    %4210 = vmatpush.bf16.msra.mxu0 %v3904
    %4211 = vmatpush.bf16.msra.mxu0 %v3903
    %4212 = vmatpush.bf16.msra.mxu0 %v3902
    %4213 = vmatpush.bf16.msra.mxu0 %v3901
    %4214 = vmatpush.bf16.msra.mxu0 %v3900
    %4215 = vmatpush.bf16.msra.mxu0 %v3899
    %4216 = vmatpush.bf16.msra.mxu0 %v3898
    %4217 = vmatmul.bf16.gmra.mxu0 %v3035
    %v4218 = vpop.f32.mrf.mxu0
    %v4219 = vadd.f32 %v4206, %v4218
    %v4220 = vpop.f32.mrf.mxu0
    %4221 = vdwg.mxu0
    %4222 = vmatpush.bf16.msra.mxu0 %v3913
    %4223 = vmatpush.bf16.msra.mxu0 %v3912
    %4224 = vmatpush.bf16.msra.mxu0 %v3911
    %4225 = vmatpush.bf16.msra.mxu0 %v3910
    %4226 = vmatpush.bf16.msra.mxu0 %v3909
    %4227 = vmatpush.bf16.msra.mxu0 %v3908
    %4228 = vmatpush.bf16.msra.mxu0 %v3907
    %4229 = vmatpush.bf16.msra.mxu0 %v3906
    %4230 = vmatmul.bf16.gmra.mxu0 %v3036
    %v4231 = vpop.f32.mrf.mxu0
    %v4232 = vadd.f32 %v4219, %v4231
    %v4233 = vpop.f32.mrf.mxu0
    %4234 = vdwg.mxu0
    %4235 = vmatpush.bf16.msra.mxu0 %v3921
    %4236 = vmatpush.bf16.msra.mxu0 %v3920
    %4237 = vmatpush.bf16.msra.mxu0 %v3919
    %4238 = vmatpush.bf16.msra.mxu0 %v3918
    %4239 = vmatpush.bf16.msra.mxu0 %v3917
    %4240 = vmatpush.bf16.msra.mxu0 %v3916
    %4241 = vmatpush.bf16.msra.mxu0 %v3915
    %4242 = vmatpush.bf16.msra.mxu0 %v3914
    %4243 = vmatmul.bf16.gmra.mxu0 %v3037
    %v4244 = vpop.f32.mrf.mxu0
    %v4245 = vadd.f32 %v4232, %v4244
    %v4246 = vpop.f32.mrf.mxu0
    %4247 = vdwg.mxu0
    %4248 = vmatpush.bf16.msra.mxu0 %v3929
    %4249 = vmatpush.bf16.msra.mxu0 %v3928
    %4250 = vmatpush.bf16.msra.mxu0 %v3927
    %4251 = vmatpush.bf16.msra.mxu0 %v3926
    %4252 = vmatpush.bf16.msra.mxu0 %v3925
    %4253 = vmatpush.bf16.msra.mxu0 %v3924
    %4254 = vmatpush.bf16.msra.mxu0 %v3923
    %4255 = vmatpush.bf16.msra.mxu0 %v3922
    %4256 = vmatmul.bf16.gmra.mxu0 %v3038
    %v4257 = vpop.f32.mrf.mxu0
    %v4258 = vadd.f32 %v4245, %v4257
    %v4259 = vpop.f32.mrf.mxu0
    %4260 = vdwg.mxu0
    %4261 = vmatpush.bf16.msra.mxu0 %v3937
    %4262 = vmatpush.bf16.msra.mxu0 %v3936
    %4263 = vmatpush.bf16.msra.mxu0 %v3935
    %4264 = vmatpush.bf16.msra.mxu0 %v3934
    %4265 = vmatpush.bf16.msra.mxu0 %v3933
    %4266 = vmatpush.bf16.msra.mxu0 %v3932
    %4267 = vmatpush.bf16.msra.mxu0 %v3931
    %4268 = vmatpush.bf16.msra.mxu0 %v3930
    %4269 = vmatmul.bf16.gmra.mxu0 %v3039
    %v4270 = vpop.f32.mrf.mxu0
    %v4271 = vadd.f32 %v4258, %v4270
    %v4272 = vpop.f32.mrf.mxu0
    %4273 = vdwg.mxu0
    %v4274 = vadd.f32 %v2565, %v4271
    %v4275 = vsel %vm96, %v4274, 0.0
    %4276 = vadd.xlane.f32.xlu0 %v4275
    %v4277 = vpop.xlane.xlu0 %4276
    %v4278 = vmul.f32 %v4277, %v433
    %v4279 = vsub.f32 %v4274, %v4278
    %v4280 = vmul.f32 %v4279, %v4279
    %v4281 = vsel %vm96, %v4280, 0.0
    %4282 = vadd.xlane.f32.xlu0 %v4281
    %v4283 = vpop.xlane.xlu0 %4282
    %v4284 = vmul.f32 %v4283, %v433
    %v4285 = vadd.f32 %v4284, 1e-05
    %v4286 = vrsqrt.pop %v4285
    %v4287 = vmul.f32 %v4286, %v4285
    %v4288 = vmul.f32 %v4287, %v4286
    %v4289 = vmul.f32 0.5, %v4288
    %v4290 = vsub.f32 1.5, %v4289
    %v4291 = vmul.f32 %v4286, %v4290
    %vm4292 = vweird.f32 %v4285
    %vm4293 = vweird.f32 %v4286
    %vm4294 = vmor %vm4292, %vm4293
    %v4295 = vsel %vm4294, %v4286, %v4291
    %v4296 = vmul.f32 %v4279, %v4295
    %v4297 = vperm.slane %v2190, 3
    %v4298 = vmul.f32 %v4296, %v4297
    %v4299 = vperm.slane %v2190, 4
    %v4300 = vadd.f32 %v4298, %v4299
    %v4301 = vld [vmem:[%s10] sm:$0xff]
    %v4302 = vld [vmem:[%s10 + $0x8] sm:$0xff]
    %v4303 = vld [vmem:[%s10 + $0x10] sm:$0xff]
    %v4304 = vld [vmem:[%s10 + $0x18] sm:$0xff]
    %v4305 = vld [vmem:[%s11] sm:$0x1]
    %v4307 = vperm.slane %v4305, 0
    %v4310 = vsel %vm96, %v4300, 0
    %4312 = vmatpush.msra.mxu0 0.0
    %4313 = vmatpush.msra.mxu0 0.0
    %4314 = vmatpush.msra.mxu0 0.0
    %4315 = vmatpush.msra.mxu0 0.0
    %4316 = vmatpush.msra.mxu0 0.0
    %4317 = vmatpush.msra.mxu0 0.0
    %4318 = vmatpush.msra.mxu0 0.0
    %4319 = vmatpush.msra.mxu0 0.0
    %4320 = vmatpush.msra.mxu0 0.0
    %4321 = vmatpush.msra.mxu0 0.0
    %4322 = vmatpush.msra.mxu0 0.0
    %4323 = vmatpush.msra.mxu0 0.0
    %4324 = vmatpush.msra.mxu0 %v4304
    %4325 = vmatpush.msra.mxu0 %v4303
    %4326 = vmatpush.msra.mxu0 %v4302
    %4327 = vmatpush.msra.mxu0 %v4301
    %4328 = vmatmul.f32.gmra.mxu0 %v4310
    %v4329 = vpop.f32.mrf.mxu0
    %v4330 = vadd.f32 %v4307, %v4329
    %4331 = vdwg.mxu0
    %4332 = vst [vmem:[#allocation2] sm:$0xff] %v4330
    // Predicated region
    $region50: #{tpu_custom_call.1} parent=1 // pred_check
      _
    $region51: #{tpu_custom_call.1} parent=1 // pred_check_branch
      %4334 = sbr.rel (0) target = $region53
    $region52: #{tpu_custom_call.1} parent=1 // pred_region
      %4336 = vsyncadd [#allocation3], 0
      %s4338 = sshll.u32 [#allocation2], 4
      %s4339 = int_to_ptr.vmem [resolvable:$true] %s4338
      %s4340 = sshll.u32 %s12, 4
      %s4341 = int_to_ptr.hbm [resolvable:$true] %s4340
      %4343 = dma.vmem_to_hbm [thread:$0]  %s4339, 128, %s4341, [#allocation3]
    $region53: #{tpu_custom_call.1} parent=1 // pred_fallthru
      _
    // Predicated region
    $region54: #{tpu_custom_call.1} parent=1 // pred_check
      _
    $region55: #{tpu_custom_call.1} parent=1 // pred_check_branch
      %4345 = sbr.rel (0) target = $region57
    $region56: #{tpu_custom_call.1} parent=1 // pred_region
      %4347 = dma.done [#allocation3], 128
    $region57: #{tpu_custom_call.1} parent=1 // pred_fallthru
      _
    %4348 = vsyncpa [#allocation3], 1

</llo_original>
